<compile_context>
chip_gen: v6e
topology: v6e:2x2x1
jax: 0.10.0
libtpu: 0.0.40
codegen_flags: <defaults>
</compile_context>

<pallas_src>
import jax
import jax.numpy as jnp
from jax.experimental import pallas as pl
from jax.experimental.pallas import tpu as pltpu

_EPS = 1e-5            # nn.BatchNorm2d default eps
_SLOPE = 0.1           # LeakyReLU negative slope
_LANE = 128
_VMEM_LIMIT = 64 * 1024 * 1024


def _round_up(x, m):
    return (x + m - 1) // m * m


def _pick_tile(dim, cap, align):
    """Largest multiple of `align` that divides `dim` and is <= cap."""
    assert dim % align == 0
    best = align
    d = dim // align
    for f in range(1, d + 1):
        if d % f == 0 and f * align <= cap:
            best = f * align
    return best


def _fold_bn(p):
    scale = p["gamma"] / jnp.sqrt(p["var"] + _EPS)
    bias = p["beta"] - p["mean"] * scale
    return scale, bias


# --------------------------- 1x1 conv: tiled matmul ---------------------------

def _mm_bias_act_kernel(a_ref, w_ref, b_ref, o_ref, acc_ref):
    """o = leaky_relu(a @ w + bias); bias-initialized f32 accumulator."""
    k = pl.program_id(2)

    @pl.when(k == 0)
    def _():
        acc_ref[...] = jnp.broadcast_to(b_ref[...], acc_ref.shape)

    acc_ref[...] += jnp.dot(a_ref[...], w_ref[...],
                            preferred_element_type=jnp.float32)

    @pl.when(k == pl.num_programs(2) - 1)
    def _():
        y = acc_ref[...]
        o_ref[...] = jnp.maximum(y, _SLOPE * y).astype(o_ref.dtype)


def _matmul_bias_leaky(a, w, bias, out_dtype=jnp.bfloat16):
    """a:[M,K] bf16, w:[K,N] bf16, bias:[1,N] f32; K, N multiples of 128."""
    m, k = a.shape
    _, n = w.shape
    mp = _round_up(m, 8)
    if mp != m:
        a = jnp.pad(a, ((0, mp - m), (0, 0)))

    tm = _pick_tile(mp, 512, 8)
    tn = _pick_tile(n, 512, _LANE)
    tk = _pick_tile(k, 512, _LANE)
    if (mp // tm) * (n // tn) < 2 and mp // 8 >= 2:      # keep 2 parallel tiles
        tm = _pick_tile(mp, max(8, mp // 2), 8)

    grid = (mp // tm, n // tn, k // tk)
    cost = pl.CostEstimate(flops=2 * mp * k * n, transcendentals=0,
                           bytes_accessed=mp * k * 2 + k * n * 2 + mp * n * 2)
    out = pl.pallas_call(
        _mm_bias_act_kernel,
        out_shape=jax.ShapeDtypeStruct((mp, n), out_dtype),
        grid=grid,
        in_specs=[pl.BlockSpec((tm, tk), lambda i, j, kk: (i, kk)),
                  pl.BlockSpec((tk, tn), lambda i, j, kk: (kk, j)),
                  pl.BlockSpec((1, tn), lambda i, j, kk: (0, j))],
        out_specs=pl.BlockSpec((tm, tn), lambda i, j, kk: (i, j)),
        scratch_shapes=[pltpu.VMEM((tm, tn), jnp.float32)],
        compiler_params=pltpu.CompilerParams(
            dimension_semantics=("parallel", "parallel", "arbitrary"),
            vmem_limit_bytes=_VMEM_LIMIT),
        cost_estimate=cost,
    )(a, w, bias)
    return out[:m] if mp != m else out


# -------------------- 3x3 conv: folded (no im2col) kernel --------------------

def _make_conv3x3_kernel(n_xs, plan, wo, th, with_residual, emit_sub):
    n_in = n_xs + 2 + (1 if with_residual else 0)

    def kernel(*refs):
        xs = refs[:n_xs]
        w_ref = refs[n_xs]
        b_ref = refs[n_xs + 1]
        r_ref = refs[n_xs + 2] if with_residual else None
        outs = refs[n_in:]
        tn = b_ref.shape[-1]
        # Hoisted out of the row loop (bias-initialized accumulator).
        bias_tile = jnp.broadcast_to(b_ref[...], (wo, tn))

        def row(h, carry):
            acc = bias_tile
            for t, (xi, c0) in enumerate(plan):
                a = xs[xi][h, pl.ds(c0, wo), :]                    # (wo, cin)
                acc = acc + jnp.dot(a, w_ref[t],
                                    preferred_element_type=jnp.float32)
            y = jnp.maximum(acc, _SLOPE * acc)                     # LeakyReLU
            if with_residual:
                x_new = y + r_ref[h].astype(jnp.float32)           # fused Add()
                if emit_sub:
                    outs[0][h] = y.astype(outs[0].dtype)
                    outs[1][h] = x_new.astype(outs[1].dtype)
                else:
                    outs[0][h] = x_new.astype(outs[0].dtype)
            else:
                outs[0][h] = y.astype(outs[0].dtype)
            return carry

        jax.lax.fori_loop(0, th, row, 0)

    return kernel


def _conv3x3_bias_leaky(xs, plan, w_taps, bias, wo, residual=None,
                        emit_sub=False, out_dtype=jnp.bfloat16):
    """y = leaky(sum_t shift_t(x) @ w_t + bias) [+ residual]."""
    n, ho, wc, cin = xs[0].shape
    cout = w_taps.shape[-1]
    tn = _pick_tile(cout, 512, _LANE)
    th = _pick_tile(ho, max(1, 2048 // max(wo, 1)), 1)
    grid = (n, cout // tn, ho // th)

    x_spec = pl.BlockSpec((None, th, wc, cin), lambda b, j, r: (b, r, 0, 0))
    w_spec = pl.BlockSpec((9, cin, tn), lambda b, j, r: (0, 0, j))
    b_spec = pl.BlockSpec((1, tn), lambda b, j, r: (0, j))
    o_spec = pl.BlockSpec((None, th, wo, tn), lambda b, j, r: (b, r, 0, j))

    in_specs = [x_spec] * len(xs) + [w_spec, b_spec]
    args = list(xs) + [w_taps, bias]
    if residual is not None:
        in_specs.append(o_spec)
        args.append(residual)

    n_out = 2 if (residual is not None and emit_sub) else 1
    if n_out == 1:
        out_shape = jax.ShapeDtypeStruct((n, ho, wo, cout), out_dtype)
        out_specs = o_spec
    else:
        out_shape = tuple(jax.ShapeDtypeStruct((n, ho, wo, cout), out_dtype)
                          for _ in range(2))
        out_specs = (o_spec, o_spec)

    kernel = _make_conv3x3_kernel(len(xs), plan, wo, th,
                                  residual is not None, emit_sub)
    return pl.pallas_call(
        kernel,
        out_shape=out_shape,
        grid=grid,
        in_specs=in_specs,
        out_specs=out_specs,
        compiler_params=pltpu.CompilerParams(
            dimension_semantics=("parallel", "parallel", "parallel"),
            vmem_limit_bytes=_VMEM_LIMIT),
    )(*args)


def _shifted_views_3x3(x, stride):
    """x: [N, H, W, C] (channel-padded bf16).  Returns (xs, plan, ho, wo) with
    every 3x3 tap t = ki*3+kj a contiguous column slice plan[t]=(ref, offset)."""
    n, h, w, c = x.shape
    ho = (h + 2 - 3) // stride + 1
    wo = (w + 2 - 3) // stride + 1
    xp = jnp.pad(x, ((0, 0), (1, 1), (1, 1), (0, 0)))
    xs, plan = [], []
    if stride == 1:
        for ki in range(3):
            xs.append(xp[:, ki:ki + ho, :, :])                  # [N, Ho, W+2, C]
        plan = [(ki, kj) for ki in range(3) for kj in range(3)]
    else:
        assert stride == 2 and h % 2 == 0 and w % 2 == 0
        for ki in range(3):
            rows = xp[:, ki:ki + 2 * (ho - 1) + 1:2, :, :]      # [N, Ho, W+2, C]
            xs.append(rows[:, :, 0::2, :])                      # even cols
            xs.append(rows[:, :, 1::2, :])                      # odd cols
        for ki in range(3):
            plan += [(2 * ki, 0), (2 * ki + 1, 0), (2 * ki, 1)]  # kj = 0, 1, 2
    return xs, plan, ho, wo


# ------------------------------ ConvBlock glue --------------------------------

def _prep_weights_3x3(p, cin_p, cout_p):
    w = p["w"]                                      # [Cout, Cin, 3, 3]
    cout, cin, kh, kw = w.shape
    scale, bias = _fold_bn(p)
    w = jnp.transpose(w, (2, 3, 1, 0)).reshape(kh * kw, cin, cout)
    w = w * scale[None, None, :]
    w = jnp.pad(w, ((0, 0), (0, cin_p - cin), (0, cout_p - cout))).astype(jnp.bfloat16)
    b = jnp.pad(bias, (0, cout_p - cout)).reshape(1, cout_p).astype(jnp.float32)
    return w, b


def _prep_weights_1x1(p, cin_p, cout_p):
    w = p["w"]                                      # [Cout, Cin, 1, 1]
    cout, cin = w.shape[:2]
    scale, bias = _fold_bn(p)
    w = jnp.transpose(w[:, :, 0, 0], (1, 0)) * scale[None, :]
    w = jnp.pad(w, ((0, cin_p - cin), (0, cout_p - cout))).astype(jnp.bfloat16)
    b = jnp.pad(bias, (0, cout_p - cout)).reshape(1, cout_p).astype(jnp.float32)
    return w, b


def conv_block_3x3(x, params, stride, cout_p, residual=None, emit_sub=False,
                   out_dtype=jnp.bfloat16):
    cin_p = x.shape[-1]
    w, b = _prep_weights_3x3(params, cin_p, cout_p)
    xs, plan, ho, wo = _shifted_views_3x3(x, stride)
    return _conv3x3_bias_leaky(xs, plan, w, b, wo, residual=residual,
                               emit_sub=emit_sub, out_dtype=out_dtype)


def conv_block_1x1(x, params, cout_p, out_dtype=jnp.bfloat16):
    n, h, w_, cin_p = x.shape
    wm, b = _prep_weights_1x1(params, cin_p, cout_p)
    a = x.reshape(n * h * w_, cin_p)
    out = _matmul_bias_leaky(a, wm, b, out_dtype=out_dtype)
    return out.reshape(n, h, w_, cout_p)


# ------------------------------ DownSample model ------------------------------

def init_conv_block_params(key, cin, cout, ksize):
    kw_, kg, kb, km, kv = jax.random.split(key, 5)
    return {
        "w": 0.1 * jax.random.normal(kw_, (cout, cin, ksize, ksize), jnp.float32),
        "gamma": 1.0 + 0.1 * jax.random.normal(kg, (cout,), jnp.float32),
        "beta": 0.1 * jax.random.normal(kb, (cout,), jnp.float32),
        "mean": 0.1 * jax.random.normal(km, (cout,), jnp.float32),
        "var": 0.5 + jax.random.uniform(kv, (cout,), jnp.float32),
    }


def init_downsample_params(key, in_channels, out_channels, repeat=0):
    n_blocks = repeat + 1
    keys = jax.random.split(key, 1 + 2 * n_blocks)
    params = {"conv0": init_conv_block_params(keys[0], in_channels, out_channels, 3),
              "blocks": []}
    for i in range(n_blocks):
        params["blocks"].append({
            "conv1": init_conv_block_params(keys[1 + 2 * i], out_channels,
                                            out_channels // 2, 1),
            "conv2": init_conv_block_params(keys[2 + 2 * i], out_channels // 2,
                                            out_channels, 3),
        })
    return params


@jax.jit
def downsample_forward(x_nchw, params):
    """Matches DownSample.forward: returns (x, sub), both NCHW float32."""
    cout = params["conv0"]["w"].shape[0]
    cout_p = _round_up(cout, _LANE)
    chalf_p = _round_up(cout // 2, _LANE)

    x = jnp.transpose(x_nchw, (0, 2, 3, 1)).astype(jnp.bfloat16)   # NCHW -> NHWC
    cin = x.shape[-1]
    cin_p = _round_up(cin, _LANE)
    if cin_p != cin:
        x = jnp.pad(x, ((0, 0), (0, 0), (0, 0), (0, cin_p - cin)))

    x = conv_block_3x3(x, params["conv0"], stride=2, cout_p=cout_p)
    sub = x
    n_blocks = len(params["blocks"])
    for i, blk in enumerate(params["blocks"]):
        last = (i == n_blocks - 1)
        h = conv_block_1x1(x, blk["conv1"], cout_p=chalf_p)
        if last:
            sub, x = conv_block_3x3(h, blk["conv2"], stride=1, cout_p=cout_p,
                                    residual=x, emit_sub=True,
                                    out_dtype=jnp.float32)
        else:                                       # dead `sub` store skipped
            x = conv_block_3x3(h, blk["conv2"], stride=1, cout_p=cout_p,
                               residual=x, emit_sub=False)

    x_out = jnp.transpose(x[..., :cout], (0, 3, 1, 2)).astype(jnp.float32)
    sub_out = jnp.transpose(sub[..., :cout], (0, 3, 1, 2)).astype(jnp.float32)
    return x_out, sub_out


# ------------------------------ pure-JAX reference -----------------------------

def _ref_conv_block(x, p, stride):
    scale = p["gamma"] / jnp.sqrt(p["var"] + _EPS)
    bias = p["beta"] - p["mean"] * scale
    pad = p["w"].shape[-1] // 2
    w = jnp.transpose(p["w"], (2, 3, 1, 0))          # HWIO
    y = jax.lax.conv_general_dilated(
        x, w, window_strides=(stride, stride),
        padding=((pad, pad), (pad, pad)),
        dimension_numbers=("NHWC", "HWIO", "NHWC"))
    y = y * scale + bias
    return jnp.maximum(y, _SLOPE * y)


def _ref_downsample(x_nchw, params):
    x = jnp.transpose(x_nchw, (0, 2, 3, 1))
    x = _ref_conv_block(x, params["conv0"], 2)
    sub = x
    for blk in params["blocks"]:
        sub = _ref_conv_block(_ref_conv_block(x, blk["conv1"], 1), blk["conv2"], 1)
        x = x + sub
    return jnp.transpose(x, (0, 3, 1, 2)), jnp.transpose(sub, (0, 3, 1, 2))


if __name__ == "__main__":
    key = jax.random.PRNGKey(0)
    in_channels, out_channels = 4, 8

    for repeat in (0, 1):
        k_in, k_par = jax.random.split(jax.random.fold_in(key, repeat))
        x = jax.random.normal(k_in, (2, in_channels, 16, 16), jnp.float32)  # NCHW
        params = init_downsample_params(k_par, in_channels, out_channels, repeat)

        x_out, sub_out = jax.block_until_ready(downsample_forward(x, params))
        x_ref, sub_ref = _ref_downsample(x, params)

        assert x_out.shape == (2, out_channels, 8, 8), x_out.shape
        assert sub_out.shape == (2, out_channels, 8, 8), sub_out.shape
        assert jnp.all(jnp.isfinite(x_out)) and jnp.all(jnp.isfinite(sub_out))
        # bf16 operands / intermediates -> relaxed tolerance vs f32 reference.
        assert float(jnp.max(jnp.abs(x_out - x_ref))) < 0.2
        assert float(jnp.max(jnp.abs(sub_out - sub_ref))) < 0.2

    print("KERNEL_OK")
</pallas_src>

<mosaic_0001>
module attributes {stable_mosaic.version = 11 : i64} {
  func.func @_mm_bias_act_kernel(%arg0: i32, %arg1: i32, %arg2: i32, %arg3: memref<64x128xbf16, #tpu.memory_space<vmem>>, %arg4: memref<128x128xbf16, #tpu.memory_space<vmem>>, %arg5: memref<1x128xf32, #tpu.memory_space<vmem>>, %arg6: memref<64x128xbf16, #tpu.memory_space<vmem>>, %arg7: memref<64x128xf32, #tpu.memory_space<vmem>>) attributes {dimension_semantics = [#tpu.dimension_semantics<parallel>, #tpu.dimension_semantics<parallel>, #tpu.dimension_semantics<arbitrary>], iteration_bounds = array<i64: 2, 1, 1>, scalar_prefetch = 0 : i64, scratch_operands = 1 : i64, tpu.core_type = #tpu.core_type<tc>, window_params = [{transform_indices = @transform_0, window_bounds = array<i64: 64, 128>}, {transform_indices = @transform_1, window_bounds = array<i64: 128, 128>}, {transform_indices = @transform_2, window_bounds = array<i64: 1, 128>}, {transform_indices = @transform_3, window_bounds = array<i64: 64, 128>}]} {
    %c0_i32 = arith.constant 0 : i32
    %0 = arith.cmpi eq, %arg2, %c0_i32 : i32
    %1 = arith.extui %0 : i1 to i32
    %c0_i32_0 = arith.constant 0 : i32
    %2 = arith.cmpi ne, %1, %c0_i32_0 : i32
    scf.if %2 {
      %c0_10 = arith.constant 0 : index
      %c0_11 = arith.constant 0 : index
      %12 = vector.load %arg5[%c0_10, %c0_11] : memref<1x128xf32, #tpu.memory_space<vmem>>, vector<1x128xf32>
      %13 = vector.shape_cast %12 : vector<1x128xf32> to vector<1x128xf32>
      %14 = vector.broadcast %13 : vector<1x128xf32> to vector<64x128xf32>
      %c0_12 = arith.constant 0 : index
      %c0_13 = arith.constant 0 : index
      %15 = vector.load %arg7[%c0_12, %c0_13] : memref<64x128xf32, #tpu.memory_space<vmem>>, vector<64x128xf32>
      tpu.vector_store %arg7[%c0_12, %c0_13], %14 {strides = array<i32>} : memref<64x128xf32, #tpu.memory_space<vmem>>, vector<64x128xf32>,
    } else {
    }
    %c0 = arith.constant 0 : index
    %c0_1 = arith.constant 0 : index
    %3 = vector.load %arg7[%c0, %c0_1] : memref<64x128xf32, #tpu.memory_space<vmem>>, vector<64x128xf32>
    %c0_2 = arith.constant 0 : index
    %c0_3 = arith.constant 0 : index
    %4 = vector.load %arg3[%c0_2, %c0_3] : memref<64x128xbf16, #tpu.memory_space<vmem>>, vector<64x128xbf16>
    %c0_4 = arith.constant 0 : index
    %c0_5 = arith.constant 0 : index
    %5 = vector.load %arg4[%c0_4, %c0_5] : memref<128x128xbf16, #tpu.memory_space<vmem>>, vector<128x128xbf16>
    %cst = arith.constant dense<0.000000e+00> : vector<64x128xf32>
    %6 = tpu.matmul %4, %5, %cst {dimension_numbers = #tpu.dot_dimension_numbers<[1], [0], [0], [1], [0, 0, 1, 1], [], []>} : vector<64x128xbf16>, vector<128x128xbf16>, vector<64x128xf32> -> vector<64x128xf32>
    %7 = arith.addf %3, %6 : vector<64x128xf32>
    %c0_6 = arith.constant 0 : index
    %c0_7 = arith.constant 0 : index
    %8 = vector.load %arg7[%c0_6, %c0_7] : memref<64x128xf32, #tpu.memory_space<vmem>>, vector<64x128xf32>
    tpu.vector_store %arg7[%c0_6, %c0_7], %7 {strides = array<i32>} : memref<64x128xf32, #tpu.memory_space<vmem>>, vector<64x128xf32>,
    %c0_i32_8 = arith.constant 0 : i32
    %9 = arith.cmpi eq, %arg2, %c0_i32_8 : i32
    %10 = arith.extui %9 : i1 to i32
    %c0_i32_9 = arith.constant 0 : i32
    %11 = arith.cmpi ne, %10, %c0_i32_9 : i32
    scf.if %11 {
      %c0_10 = arith.constant 0 : index
      %c0_11 = arith.constant 0 : index
      %12 = vector.load %arg7[%c0_10, %c0_11] : memref<64x128xf32, #tpu.memory_space<vmem>>, vector<64x128xf32>
      %cst_12 = arith.constant 1.000000e-01 : f32
      %13 = vector.broadcast %cst_12 : f32 to vector<64x128xf32>
      %14 = arith.mulf %13, %12 : vector<64x128xf32>
      %15 = arith.maximumf %12, %14 : vector<64x128xf32>
      %16 = arith.truncf %15 : vector<64x128xf32> to vector<64x128xbf16>
      %c0_13 = arith.constant 0 : index
      %c0_14 = arith.constant 0 : index
      %17 = vector.load %arg6[%c0_13, %c0_14] : memref<64x128xbf16, #tpu.memory_space<vmem>>, vector<64x128xbf16>
      tpu.vector_store %arg6[%c0_13, %c0_14], %16 {strides = array<i32>} : memref<64x128xbf16, #tpu.memory_space<vmem>>, vector<64x128xbf16>,
    } else {
    }
    return
  }
  func.func @transform_0(%arg0: i32, %arg1: i32, %arg2: i32) -> (i32, i32) {
    %c0_i32 = arith.constant 0 : i32
    return %arg0, %arg2 : i32, i32
  }
  func.func @transform_1(%arg0: i32, %arg1: i32, %arg2: i32) -> (i32, i32) {
    %c0_i32 = arith.constant 0 : i32
    return %arg2, %arg1 : i32, i32
  }
  func.func @transform_2(%arg0: i32, %arg1: i32, %arg2: i32) -> (i32, i32) {
    %c0_i32 = arith.constant 0 : i32
    %c0_i32_0 = arith.constant 0 : i32
    return %c0_i32, %arg1 : i32, i32
  }
  func.func @transform_3(%arg0: i32, %arg1: i32, %arg2: i32) -> (i32, i32) {
    %c0_i32 = arith.constant 0 : i32
    return %arg0, %arg1 : i32, i32
  }
}

module attributes {stable_mosaic.version = 11 : i64} {
  func.func @kernel(%arg0: i32, %arg1: i32, %arg2: i32, %arg3: memref<1x8x10x128xbf16, #tpu.memory_space<vmem>>, %arg4: memref<1x8x10x128xbf16, #tpu.memory_space<vmem>>, %arg5: memref<1x8x10x128xbf16, #tpu.memory_space<vmem>>, %arg6: memref<9x128x128xbf16, #tpu.memory_space<vmem>>, %arg7: memref<1x128xf32, #tpu.memory_space<vmem>>, %arg8: memref<1x8x8x128xbf16, #tpu.memory_space<vmem>>, %arg9: memref<1x8x8x128xf32, #tpu.memory_space<vmem>>, %arg10: memref<1x8x8x128xf32, #tpu.memory_space<vmem>>) attributes {dimension_semantics = [#tpu.dimension_semantics<parallel>, #tpu.dimension_semantics<parallel>, #tpu.dimension_semantics<parallel>], iteration_bounds = array<i64: 2, 1, 1>, scalar_prefetch = 0 : i64, scratch_operands = 0 : i64, tpu.core_type = #tpu.core_type<tc>, window_params = [{transform_indices = @transform_0, window_bounds = array<i64: 1, 8, 10, 128>}, {transform_indices = @transform_1, window_bounds = array<i64: 1, 8, 10, 128>}, {transform_indices = @transform_2, window_bounds = array<i64: 1, 8, 10, 128>}, {transform_indices = @transform_3, window_bounds = array<i64: 9, 128, 128>}, {transform_indices = @transform_4, window_bounds = array<i64: 1, 128>}, {transform_indices = @transform_5, window_bounds = array<i64: 1, 8, 8, 128>}, {transform_indices = @transform_6, window_bounds = array<i64: 1, 8, 8, 128>}, {transform_indices = @transform_7, window_bounds = array<i64: 1, 8, 8, 128>}]} {
    %c0 = arith.constant 0 : index
    %c0_0 = arith.constant 0 : index
    %0 = vector.load %arg7[%c0, %c0_0] : memref<1x128xf32, #tpu.memory_space<vmem>>, vector<1x128xf32>
    %1 = vector.shape_cast %0 : vector<1x128xf32> to vector<1x128xf32>
    %2 = vector.broadcast %1 : vector<1x128xf32> to vector<8x128xf32>
    %c0_i32 = arith.constant 0 : i32
    %c8_i32 = arith.constant 8 : i32
    %3 = arith.addi %c0_i32, %c8_i32 : i32
    %c1_i32 = arith.constant 1 : i32
    scf.for %arg11 = %c0_i32 to %3 step %c1_i32  : i32 {
      %c0_2 = arith.constant 0 : index
      %4 = arith.index_cast %arg11 : i32 to index
      %c0_3 = arith.constant 0 : index
      %c0_4 = arith.constant 0 : index
      %5 = vector.load %arg3[%c0_2, %4, %c0_3, %c0_4] : memref<1x8x10x128xbf16, #tpu.memory_space<vmem>>, vector<1x1x8x128xbf16>
      %6 = vector.shape_cast %5 : vector<1x1x8x128xbf16> to vector<8x128xbf16>
      %c0_5 = arith.constant 0 : index
      %c0_6 = arith.constant 0 : index
      %c0_7 = arith.constant 0 : index
      %7 = vector.load %arg6[%c0_5, %c0_6, %c0_7] : memref<9x128x128xbf16, #tpu.memory_space<vmem>>, vector<1x128x128xbf16>
      %8 = vector.shape_cast %7 : vector<1x128x128xbf16> to vector<128x128xbf16>
      %cst = arith.constant dense<0.000000e+00> : vector<8x128xf32>
      %9 = tpu.matmul %6, %8, %cst {dimension_numbers = #tpu.dot_dimension_numbers<[1], [0], [0], [1], [0, 0, 1, 1], [], []>} : vector<8x128xbf16>, vector<128x128xbf16>, vector<8x128xf32> -> vector<8x128xf32>
      %10 = arith.addf %2, %9 : vector<8x128xf32>
      %c0_8 = arith.constant 0 : index
      %11 = arith.index_cast %arg11 : i32 to index
      %c1 = arith.constant 1 : index
      %c0_9 = arith.constant 0 : index
      %12 = vector.load %arg3[%c0_8, %11, %c1, %c0_9] : memref<1x8x10x128xbf16, #tpu.memory_space<vmem>>, vector<1x1x8x128xbf16>
      %13 = vector.shape_cast %12 : vector<1x1x8x128xbf16> to vector<8x128xbf16>
      %c1_10 = arith.constant 1 : index
      %c0_11 = arith.constant 0 : index
      %c0_12 = arith.constant 0 : index
      %14 = vector.load %arg6[%c1_10, %c0_11, %c0_12] : memref<9x128x128xbf16, #tpu.memory_space<vmem>>, vector<1x128x128xbf16>
      %15 = vector.shape_cast %14 : vector<1x128x128xbf16> to vector<128x128xbf16>
      %cst_13 = arith.constant dense<0.000000e+00> : vector<8x128xf32>
      %16 = tpu.matmul %13, %15, %cst_13 {dimension_numbers = #tpu.dot_dimension_numbers<[1], [0], [0], [1], [0, 0, 1, 1], [], []>} : vector<8x128xbf16>, vector<128x128xbf16>, vector<8x128xf32> -> vector<8x128xf32>
      %17 = arith.addf %10, %16 : vector<8x128xf32>
      %c0_14 = arith.constant 0 : index
      %18 = arith.index_cast %arg11 : i32 to index
      %c2 = arith.constant 2 : index
      %c0_15 = arith.constant 0 : index
      %19 = vector.load %arg3[%c0_14, %18, %c2, %c0_15] : memref<1x8x10x128xbf16, #tpu.memory_space<vmem>>, vector<1x1x8x128xbf16>
      %20 = vector.shape_cast %19 : vector<1x1x8x128xbf16> to vector<8x128xbf16>
      %c2_16 = arith.constant 2 : index
      %c0_17 = arith.constant 0 : index
      %c0_18 = arith.constant 0 : index
      %21 = vector.load %arg6[%c2_16, %c0_17, %c0_18] : memref<9x128x128xbf16, #tpu.memory_space<vmem>>, vector<1x128x128xbf16>
      %22 = vector.shape_cast %21 : vector<1x128x128xbf16> to vector<128x128xbf16>
      %cst_19 = arith.constant dense<0.000000e+00> : vector<8x128xf32>
      %23 = tpu.matmul %20, %22, %cst_19 {dimension_numbers = #tpu.dot_dimension_numbers<[1], [0], [0], [1], [0, 0, 1, 1], [], []>} : vector<8x128xbf16>, vector<128x128xbf16>, vector<8x128xf32> -> vector<8x128xf32>
      %24 = arith.addf %17, %23 : vector<8x128xf32>
      %c0_20 = arith.constant 0 : index
      %25 = arith.index_cast %arg11 : i32 to index
      %c0_21 = arith.constant 0 : index
      %c0_22 = arith.constant 0 : index
      %26 = vector.load %arg4[%c0_20, %25, %c0_21, %c0_22] : memref<1x8x10x128xbf16, #tpu.memory_space<vmem>>, vector<1x1x8x128xbf16>
      %27 = vector.shape_cast %26 : vector<1x1x8x128xbf16> to vector<8x128xbf16>
      %c3 = arith.constant 3 : index
      %c0_23 = arith.constant 0 : index
      %c0_24 = arith.constant 0 : index
      %28 = vector.load %arg6[%c3, %c0_23, %c0_24] : memref<9x128x128xbf16, #tpu.memory_space<vmem>>, vector<1x128x128xbf16>
      %29 = vector.shape_cast %28 : vector<1x128x128xbf16> to vector<128x128xbf16>
      %cst_25 = arith.constant dense<0.000000e+00> : vector<8x128xf32>
      %30 = tpu.matmul %27, %29, %cst_25 {dimension_numbers = #tpu.dot_dimension_numbers<[1], [0], [0], [1], [0, 0, 1, 1], [], []>} : vector<8x128xbf16>, vector<128x128xbf16>, vector<8x128xf32> -> vector<8x128xf32>
      %31 = arith.addf %24, %30 : vector<8x128xf32>
      %c0_26 = arith.constant 0 : index
      %32 = arith.index_cast %arg11 : i32 to index
      %c1_27 = arith.constant 1 : index
      %c0_28 = arith.constant 0 : index
      %33 = vector.load %arg4[%c0_26, %32, %c1_27, %c0_28] : memref<1x8x10x128xbf16, #tpu.memory_space<vmem>>, vector<1x1x8x128xbf16>
      %34 = vector.shape_cast %33 : vector<1x1x8x128xbf16> to vector<8x128xbf16>
      %c4 = arith.constant 4 : index
      %c0_29 = arith.constant 0 : index
      %c0_30 = arith.constant 0 : index
      %35 = vector.load %arg6[%c4, %c0_29, %c0_30] : memref<9x128x128xbf16, #tpu.memory_space<vmem>>, vector<1x128x128xbf16>
      %36 = vector.shape_cast %35 : vector<1x128x128xbf16> to vector<128x128xbf16>
      %cst_31 = arith.constant dense<0.000000e+00> : vector<8x128xf32>
      %37 = tpu.matmul %34, %36, %cst_31 {dimension_numbers = #tpu.dot_dimension_numbers<[1], [0], [0], [1], [0, 0, 1, 1], [], []>} : vector<8x128xbf16>, vector<128x128xbf16>, vector<8x128xf32> -> vector<8x128xf32>
      %38 = arith.addf %31, %37 : vector<8x128xf32>
      %c0_32 = arith.constant 0 : index
      %39 = arith.index_cast %arg11 : i32 to index
      %c2_33 = arith.constant 2 : index
      %c0_34 = arith.constant 0 : index
      %40 = vector.load %arg4[%c0_32, %39, %c2_33, %c0_34] : memref<1x8x10x128xbf16, #tpu.memory_space<vmem>>, vector<1x1x8x128xbf16>
      %41 = vector.shape_cast %40 : vector<1x1x8x128xbf16> to vector<8x128xbf16>
      %c5 = arith.constant 5 : index
      %c0_35 = arith.constant 0 : index
      %c0_36 = arith.constant 0 : index
      %42 = vector.load %arg6[%c5, %c0_35, %c0_36] : memref<9x128x128xbf16, #tpu.memory_space<vmem>>, vector<1x128x128xbf16>
      %43 = vector.shape_cast %42 : vector<1x128x128xbf16> to vector<128x128xbf16>
      %cst_37 = arith.constant dense<0.000000e+00> : vector<8x128xf32>
      %44 = tpu.matmul %41, %43, %cst_37 {dimension_numbers = #tpu.dot_dimension_numbers<[1], [0], [0], [1], [0, 0, 1, 1], [], []>} : vector<8x128xbf16>, vector<128x128xbf16>, vector<8x128xf32> -> vector<8x128xf32>
      %45 = arith.addf %38, %44 : vector<8x128xf32>
      %c0_38 = arith.constant 0 : index
      %46 = arith.index_cast %arg11 : i32 to index
      %c0_39 = arith.constant 0 : index
      %c0_40 = arith.constant 0 : index
      %47 = vector.load %arg5[%c0_38, %46, %c0_39, %c0_40] : memref<1x8x10x128xbf16, #tpu.memory_space<vmem>>, vector<1x1x8x128xbf16>
      %48 = vector.shape_cast %47 : vector<1x1x8x128xbf16> to vector<8x128xbf16>
      %c6 = arith.constant 6 : index
      %c0_41 = arith.constant 0 : index
      %c0_42 = arith.constant 0 : index
      %49 = vector.load %arg6[%c6, %c0_41, %c0_42] : memref<9x128x128xbf16, #tpu.memory_space<vmem>>, vector<1x128x128xbf16>
      %50 = vector.shape_cast %49 : vector<1x128x128xbf16> to vector<128x128xbf16>
      %cst_43 = arith.constant dense<0.000000e+00> : vector<8x128xf32>
      %51 = tpu.matmul %48, %50, %cst_43 {dimension_numbers = #tpu.dot_dimension_numbers<[1], [0], [0], [1], [0, 0, 1, 1], [], []>} : vector<8x128xbf16>, vector<128x128xbf16>, vector<8x128xf32> -> vector<8x128xf32>
      %52 = arith.addf %45, %51 : vector<8x128xf32>
      %c0_44 = arith.constant 0 : index
      %53 = arith.index_cast %arg11 : i32 to index
      %c1_45 = arith.constant 1 : index
      %c0_46 = arith.constant 0 : index
      %54 = vector.load %arg5[%c0_44, %53, %c1_45, %c0_46] : memref<1x8x10x128xbf16, #tpu.memory_space<vmem>>, vector<1x1x8x128xbf16>
      %55 = vector.shape_cast %54 : vector<1x1x8x128xbf16> to vector<8x128xbf16>
      %c7 = arith.constant 7 : index
      %c0_47 = arith.constant 0 : index
      %c0_48 = arith.constant 0 : index
      %56 = vector.load %arg6[%c7, %c0_47, %c0_48] : memref<9x128x128xbf16, #tpu.memory_space<vmem>>, vector<1x128x128xbf16>
      %57 = vector.shape_cast %56 : vector<1x128x128xbf16> to vector<128x128xbf16>
      %cst_49 = arith.constant dense<0.000000e+00> : vector<8x128xf32>
      %58 = tpu.matmul %55, %57, %cst_49 {dimension_numbers = #tpu.dot_dimension_numbers<[1], [0], [0], [1], [0, 0, 1, 1], [], []>} : vector<8x128xbf16>, vector<128x128xbf16>, vector<8x128xf32> -> vector<8x128xf32>
      %59 = arith.addf %52, %58 : vector<8x128xf32>
      %c0_50 = arith.constant 0 : index
      %60 = arith.index_cast %arg11 : i32 to index
      %c2_51 = arith.constant 2 : index
      %c0_52 = arith.constant 0 : index
      %61 = vector.load %arg5[%c0_50, %60, %c2_51, %c0_52] : memref<1x8x10x128xbf16, #tpu.memory_space<vmem>>, vector<1x1x8x128xbf16>
      %62 = vector.shape_cast %61 : vector<1x1x8x128xbf16> to vector<8x128xbf16>
      %c8 = arith.constant 8 : index
      %c0_53 = arith.constant 0 : index
      %c0_54 = arith.constant 0 : index
      %63 = vector.load %arg6[%c8, %c0_53, %c0_54] : memref<9x128x128xbf16, #tpu.memory_space<vmem>>, vector<1x128x128xbf16>
      %64 = vector.shape_cast %63 : vector<1x128x128xbf16> to vector<128x128xbf16>
      %cst_55 = arith.constant dense<0.000000e+00> : vector<8x128xf32>
      %65 = tpu.matmul %62, %64, %cst_55 {dimension_numbers = #tpu.dot_dimension_numbers<[1], [0], [0], [1], [0, 0, 1, 1], [], []>} : vector<8x128xbf16>, vector<128x128xbf16>, vector<8x128xf32> -> vector<8x128xf32>
      %66 = arith.addf %59, %65 : vector<8x128xf32>
      %cst_56 = arith.constant 1.000000e-01 : f32
      %67 = vector.broadcast %cst_56 : f32 to vector<8x128xf32>
      %68 = arith.mulf %67, %66 : vector<8x128xf32>
      %69 = arith.maximumf %66, %68 : vector<8x128xf32>
      %c0_57 = arith.constant 0 : index
      %70 = arith.index_cast %arg11 : i32 to index
      %c0_58 = arith.constant 0 : index
      %c0_59 = arith.constant 0 : index
      %71 = vector.load %arg8[%c0_57, %70, %c0_58, %c0_59] : memref<1x8x8x128xbf16, #tpu.memory_space<vmem>>, vector<1x1x8x128xbf16>
      %72 = vector.shape_cast %71 : vector<1x1x8x128xbf16> to vector<8x128xbf16>
      %73 = arith.extf %72 : vector<8x128xbf16> to vector<8x128xf32>
      %74 = arith.addf %69, %73 : vector<8x128xf32>
      %c0_60 = arith.constant 0 : index
      %75 = arith.index_cast %arg11 : i32 to index
      %c0_61 = arith.constant 0 : index
      %c0_62 = arith.constant 0 : index
      %76 = vector.load %arg9[%c0_60, %75, %c0_61, %c0_62] : memref<1x8x8x128xf32, #tpu.memory_space<vmem>>, vector<1x1x8x128xf32>
      %77 = vector.shape_cast %76 : vector<1x1x8x128xf32> to vector<8x128xf32>
      %78 = vector.shape_cast %69 : vector<8x128xf32> to vector<1x1x8x128xf32>
      tpu.vector_store %arg9[%c0_60, %75, %c0_61, %c0_62], %78 {strides = array<i32>} : memref<1x8x8x128xf32, #tpu.memory_space<vmem>>, vector<1x1x8x128xf32>,
      %c0_63 = arith.constant 0 : index
      %79 = arith.index_cast %arg11 : i32 to index
      %c0_64 = arith.constant 0 : index
      %c0_65 = arith.constant 0 : index
      %80 = vector.load %arg10[%c0_63, %79, %c0_64, %c0_65] : memref<1x8x8x128xf32, #tpu.memory_space<vmem>>, vector<1x1x8x128xf32>
      %81 = vector.shape_cast %80 : vector<1x1x8x128xf32> to vector<8x128xf32>
      %82 = vector.shape_cast %74 : vector<8x128xf32> to vector<1x1x8x128xf32>
      tpu.vector_store %arg10[%c0_63, %79, %c0_64, %c0_65], %82 {strides = array<i32>} : memref<1x8x8x128xf32, #tpu.memory_space<vmem>>, vector<1x1x8x128xf32>,
    }
    %c8_i32_1 = arith.constant 8 : i32
    return
  }
  func.func @transform_0(%arg0: i32, %arg1: i32, %arg2: i32) -> (i32, i32, i32, i32) {
    %c0_i32 = arith.constant 0 : i32
    %c0_i32_0 = arith.constant 0 : i32
    %c0_i32_1 = arith.constant 0 : i32
    return %arg0, %arg2, %c0_i32, %c0_i32_0 : i32, i32, i32, i32
  }
  func.func @transform_1(%arg0: i32, %arg1: i32, %arg2: i32) -> (i32, i32, i32, i32) {
    %c0_i32 = arith.constant 0 : i32
    %c0_i32_0 = arith.constant 0 : i32
    %c0_i32_1 = arith.constant 0 : i32
    return %arg0, %arg2, %c0_i32, %c0_i32_0 : i32, i32, i32, i32
  }
  func.func @transform_2(%arg0: i32, %arg1: i32, %arg2: i32) -> (i32, i32, i32, i32) {
    %c0_i32 = arith.constant 0 : i32
    %c0_i32_0 = arith.constant 0 : i32
    %c0_i32_1 = arith.constant 0 : i32
    return %arg0, %arg2, %c0_i32, %c0_i32_0 : i32, i32, i32, i32
  }
  func.func @transform_3(%arg0: i32, %arg1: i32, %arg2: i32) -> (i32, i32, i32) {
    %c0_i32 = arith.constant 0 : i32
    %c0_i32_0 = arith.constant 0 : i32
    %c0_i32_1 = arith.constant 0 : i32
    return %c0_i32, %c0_i32_0, %arg1 : i32, i32, i32
  }
  func.func @transform_4(%arg0: i32, %arg1: i32, %arg2: i32) -> (i32, i32) {
    %c0_i32 = arith.constant 0 : i32
    %c0_i32_0 = arith.constant 0 : i32
    return %c0_i32, %arg1 : i32, i32
  }
  func.func @transform_5(%arg0: i32, %arg1: i32, %arg2: i32) -> (i32, i32, i32, i32) {
    %c0_i32 = arith.constant 0 : i32
    %c0_i32_0 = arith.constant 0 : i32
    return %arg0, %arg2, %c0_i32, %arg1 : i32, i32, i32, i32
  }
  func.func @transform_6(%arg0: i32, %arg1: i32, %arg2: i32) -> (i32, i32, i32, i32) {
    %c0_i32 = arith.constant 0 : i32
    %c0_i32_0 = arith.constant 0 : i32
    return %arg0, %arg2, %c0_i32, %arg1 : i32, i32, i32, i32
  }
  func.func @transform_7(%arg0: i32, %arg1: i32, %arg2: i32) -> (i32, i32, i32, i32) {
    %c0_i32 = arith.constant 0 : i32
    %c0_i32_0 = arith.constant 0 : i32
    return %arg0, %arg2, %c0_i32, %arg1 : i32, i32, i32, i32
  }
}

module attributes {stable_mosaic.version = 11 : i64} {
  func.func @kernel(%arg0: i32, %arg1: i32, %arg2: i32, %arg3: memref<1x8x9x128xbf16, #tpu.memory_space<vmem>>, %arg4: memref<1x8x9x128xbf16, #tpu.memory_space<vmem>>, %arg5: memref<1x8x9x128xbf16, #tpu.memory_space<vmem>>, %arg6: memref<1x8x9x128xbf16, #tpu.memory_space<vmem>>, %arg7: memref<1x8x9x128xbf16, #tpu.memory_space<vmem>>, %arg8: memref<1x8x9x128xbf16, #tpu.memory_space<vmem>>, %arg9: memref<9x128x128xbf16, #tpu.memory_space<vmem>>, %arg10: memref<1x128xf32, #tpu.memory_space<vmem>>, %arg11: memref<1x8x8x128xbf16, #tpu.memory_space<vmem>>) attributes {dimension_semantics = [#tpu.dimension_semantics<parallel>, #tpu.dimension_semantics<parallel>, #tpu.dimension_semantics<parallel>], iteration_bounds = array<i64: 2, 1, 1>, scalar_prefetch = 0 : i64, scratch_operands = 0 : i64, tpu.core_type = #tpu.core_type<tc>, window_params = [{transform_indices = @transform_0, window_bounds = array<i64: 1, 8, 9, 128>}, {transform_indices = @transform_1, window_bounds = array<i64: 1, 8, 9, 128>}, {transform_indices = @transform_2, window_bounds = array<i64: 1, 8, 9, 128>}, {transform_indices = @transform_3, window_bounds = array<i64: 1, 8, 9, 128>}, {transform_indices = @transform_4, window_bounds = array<i64: 1, 8, 9, 128>}, {transform_indices = @transform_5, window_bounds = array<i64: 1, 8, 9, 128>}, {transform_indices = @transform_6, window_bounds = array<i64: 9, 128, 128>}, {transform_indices = @transform_7, window_bounds = array<i64: 1, 128>}, {transform_indices = @transform_8, window_bounds = array<i64: 1, 8, 8, 128>}]} {
    %c0 = arith.constant 0 : index
    %c0_0 = arith.constant 0 : index
    %0 = vector.load %arg10[%c0, %c0_0] : memref<1x128xf32, #tpu.memory_space<vmem>>, vector<1x128xf32>
    %1 = vector.shape_cast %0 : vector<1x128xf32> to vector<1x128xf32>
    %2 = vector.broadcast %1 : vector<1x128xf32> to vector<8x128xf32>
    %c0_i32 = arith.constant 0 : i32
    %c8_i32 = arith.constant 8 : i32
    %3 = arith.addi %c0_i32, %c8_i32 : i32
    %c1_i32 = arith.constant 1 : i32
    scf.for %arg12 = %c0_i32 to %3 step %c1_i32  : i32 {
      %c0_2 = arith.constant 0 : index
      %4 = arith.index_cast %arg12 : i32 to index
      %c0_3 = arith.constant 0 : index
      %c0_4 = arith.constant 0 : index
      %5 = vector.load %arg3[%c0_2, %4, %c0_3, %c0_4] : memref<1x8x9x128xbf16, #tpu.memory_space<vmem>>, vector<1x1x8x128xbf16>
      %6 = vector.shape_cast %5 : vector<1x1x8x128xbf16> to vector<8x128xbf16>
      %c0_5 = arith.constant 0 : index
      %c0_6 = arith.constant 0 : index
      %c0_7 = arith.constant 0 : index
      %7 = vector.load %arg9[%c0_5, %c0_6, %c0_7] : memref<9x128x128xbf16, #tpu.memory_space<vmem>>, vector<1x128x128xbf16>
      %8 = vector.shape_cast %7 : vector<1x128x128xbf16> to vector<128x128xbf16>
      %cst = arith.constant dense<0.000000e+00> : vector<8x128xf32>
      %9 = tpu.matmul %6, %8, %cst {dimension_numbers = #tpu.dot_dimension_numbers<[1], [0], [0], [1], [0, 0, 1, 1], [], []>} : vector<8x128xbf16>, vector<128x128xbf16>, vector<8x128xf32> -> vector<8x128xf32>
      %10 = arith.addf %2, %9 : vector<8x128xf32>
      %c0_8 = arith.constant 0 : index
      %11 = arith.index_cast %arg12 : i32 to index
      %c0_9 = arith.constant 0 : index
      %c0_10 = arith.constant 0 : index
      %12 = vector.load %arg4[%c0_8, %11, %c0_9, %c0_10] : memref<1x8x9x128xbf16, #tpu.memory_space<vmem>>, vector<1x1x8x128xbf16>
      %13 = vector.shape_cast %12 : vector<1x1x8x128xbf16> to vector<8x128xbf16>
      %c1 = arith.constant 1 : index
      %c0_11 = arith.constant 0 : index
      %c0_12 = arith.constant 0 : index
      %14 = vector.load %arg9[%c1, %c0_11, %c0_12] : memref<9x128x128xbf16, #tpu.memory_space<vmem>>, vector<1x128x128xbf16>
      %15 = vector.shape_cast %14 : vector<1x128x128xbf16> to vector<128x128xbf16>
      %cst_13 = arith.constant dense<0.000000e+00> : vector<8x128xf32>
      %16 = tpu.matmul %13, %15, %cst_13 {dimension_numbers = #tpu.dot_dimension_numbers<[1], [0], [0], [1], [0, 0, 1, 1], [], []>} : vector<8x128xbf16>, vector<128x128xbf16>, vector<8x128xf32> -> vector<8x128xf32>
      %17 = arith.addf %10, %16 : vector<8x128xf32>
      %c0_14 = arith.constant 0 : index
      %18 = arith.index_cast %arg12 : i32 to index
      %c1_15 = arith.constant 1 : index
      %c0_16 = arith.constant 0 : index
      %19 = vector.load %arg3[%c0_14, %18, %c1_15, %c0_16] : memref<1x8x9x128xbf16, #tpu.memory_space<vmem>>, vector<1x1x8x128xbf16>
      %20 = vector.shape_cast %19 : vector<1x1x8x128xbf16> to vector<8x128xbf16>
      %c2 = arith.constant 2 : index
      %c0_17 = arith.constant 0 : index
      %c0_18 = arith.constant 0 : index
      %21 = vector.load %arg9[%c2, %c0_17, %c0_18] : memref<9x128x128xbf16, #tpu.memory_space<vmem>>, vector<1x128x128xbf16>
      %22 = vector.shape_cast %21 : vector<1x128x128xbf16> to vector<128x128xbf16>
      %cst_19 = arith.constant dense<0.000000e+00> : vector<8x128xf32>
      %23 = tpu.matmul %20, %22, %cst_19 {dimension_numbers = #tpu.dot_dimension_numbers<[1], [0], [0], [1], [0, 0, 1, 1], [], []>} : vector<8x128xbf16>, vector<128x128xbf16>, vector<8x128xf32> -> vector<8x128xf32>
      %24 = arith.addf %17, %23 : vector<8x128xf32>
      %c0_20 = arith.constant 0 : index
      %25 = arith.index_cast %arg12 : i32 to index
      %c0_21 = arith.constant 0 : index
      %c0_22 = arith.constant 0 : index
      %26 = vector.load %arg5[%c0_20, %25, %c0_21, %c0_22] : memref<1x8x9x128xbf16, #tpu.memory_space<vmem>>, vector<1x1x8x128xbf16>
      %27 = vector.shape_cast %26 : vector<1x1x8x128xbf16> to vector<8x128xbf16>
      %c3 = arith.constant 3 : index
      %c0_23 = arith.constant 0 : index
      %c0_24 = arith.constant 0 : index
      %28 = vector.load %arg9[%c3, %c0_23, %c0_24] : memref<9x128x128xbf16, #tpu.memory_space<vmem>>, vector<1x128x128xbf16>
      %29 = vector.shape_cast %28 : vector<1x128x128xbf16> to vector<128x128xbf16>
      %cst_25 = arith.constant dense<0.000000e+00> : vector<8x128xf32>
      %30 = tpu.matmul %27, %29, %cst_25 {dimension_numbers = #tpu.dot_dimension_numbers<[1], [0], [0], [1], [0, 0, 1, 1], [], []>} : vector<8x128xbf16>, vector<128x128xbf16>, vector<8x128xf32> -> vector<8x128xf32>
      %31 = arith.addf %24, %30 : vector<8x128xf32>
      %c0_26 = arith.constant 0 : index
      %32 = arith.index_cast %arg12 : i32 to index
      %c0_27 = arith.constant 0 : index
      %c0_28 = arith.constant 0 : index
      %33 = vector.load %arg6[%c0_26, %32, %c0_27, %c0_28] : memref<1x8x9x128xbf16, #tpu.memory_space<vmem>>, vector<1x1x8x128xbf16>
      %34 = vector.shape_cast %33 : vector<1x1x8x128xbf16> to vector<8x128xbf16>
      %c4 = arith.constant 4 : index
      %c0_29 = arith.constant 0 : index
      %c0_30 = arith.constant 0 : index
      %35 = vector.load %arg9[%c4, %c0_29, %c0_30] : memref<9x128x128xbf16, #tpu.memory_space<vmem>>, vector<1x128x128xbf16>
      %36 = vector.shape_cast %35 : vector<1x128x128xbf16> to vector<128x128xbf16>
      %cst_31 = arith.constant dense<0.000000e+00> : vector<8x128xf32>
      %37 = tpu.matmul %34, %36, %cst_31 {dimension_numbers = #tpu.dot_dimension_numbers<[1], [0], [0], [1], [0, 0, 1, 1], [], []>} : vector<8x128xbf16>, vector<128x128xbf16>, vector<8x128xf32> -> vector<8x128xf32>
      %38 = arith.addf %31, %37 : vector<8x128xf32>
      %c0_32 = arith.constant 0 : index
      %39 = arith.index_cast %arg12 : i32 to index
      %c1_33 = arith.constant 1 : index
      %c0_34 = arith.constant 0 : index
      %40 = vector.load %arg5[%c0_32, %39, %c1_33, %c0_34] : memref<1x8x9x128xbf16, #tpu.memory_space<vmem>>, vector<1x1x8x128xbf16>
      %41 = vector.shape_cast %40 : vector<1x1x8x128xbf16> to vector<8x128xbf16>
      %c5 = arith.constant 5 : index
      %c0_35 = arith.constant 0 : index
      %c0_36 = arith.constant 0 : index
      %42 = vector.load %arg9[%c5, %c0_35, %c0_36] : memref<9x128x128xbf16, #tpu.memory_space<vmem>>, vector<1x128x128xbf16>
      %43 = vector.shape_cast %42 : vector<1x128x128xbf16> to vector<128x128xbf16>
      %cst_37 = arith.constant dense<0.000000e+00> : vector<8x128xf32>
      %44 = tpu.matmul %41, %43, %cst_37 {dimension_numbers = #tpu.dot_dimension_numbers<[1], [0], [0], [1], [0, 0, 1, 1], [], []>} : vector<8x128xbf16>, vector<128x128xbf16>, vector<8x128xf32> -> vector<8x128xf32>
      %45 = arith.addf %38, %44 : vector<8x128xf32>
      %c0_38 = arith.constant 0 : index
      %46 = arith.index_cast %arg12 : i32 to index
      %c0_39 = arith.constant 0 : index
      %c0_40 = arith.constant 0 : index
      %47 = vector.load %arg7[%c0_38, %46, %c0_39, %c0_40] : memref<1x8x9x128xbf16, #tpu.memory_space<vmem>>, vector<1x1x8x128xbf16>
      %48 = vector.shape_cast %47 : vector<1x1x8x128xbf16> to vector<8x128xbf16>
      %c6 = arith.constant 6 : index
      %c0_41 = arith.constant 0 : index
      %c0_42 = arith.constant 0 : index
      %49 = vector.load %arg9[%c6, %c0_41, %c0_42] : memref<9x128x128xbf16, #tpu.memory_space<vmem>>, vector<1x128x128xbf16>
      %50 = vector.shape_cast %49 : vector<1x128x128xbf16> to vector<128x128xbf16>
      %cst_43 = arith.constant dense<0.000000e+00> : vector<8x128xf32>
      %51 = tpu.matmul %48, %50, %cst_43 {dimension_numbers = #tpu.dot_dimension_numbers<[1], [0], [0], [1], [0, 0, 1, 1], [], []>} : vector<8x128xbf16>, vector<128x128xbf16>, vector<8x128xf32> -> vector<8x128xf32>
      %52 = arith.addf %45, %51 : vector<8x128xf32>
      %c0_44 = arith.constant 0 : index
      %53 = arith.index_cast %arg12 : i32 to index
      %c0_45 = arith.constant 0 : index
      %c0_46 = arith.constant 0 : index
      %54 = vector.load %arg8[%c0_44, %53, %c0_45, %c0_46] : memref<1x8x9x128xbf16, #tpu.memory_space<vmem>>, vector<1x1x8x128xbf16>
      %55 = vector.shape_cast %54 : vector<1x1x8x128xbf16> to vector<8x128xbf16>
      %c7 = arith.constant 7 : index
      %c0_47 = arith.constant 0 : index
      %c0_48 = arith.constant 0 : index
      %56 = vector.load %arg9[%c7, %c0_47, %c0_48] : memref<9x128x128xbf16, #tpu.memory_space<vmem>>, vector<1x128x128xbf16>
      %57 = vector.shape_cast %56 : vector<1x128x128xbf16> to vector<128x128xbf16>
      %cst_49 = arith.constant dense<0.000000e+00> : vector<8x128xf32>
      %58 = tpu.matmul %55, %57, %cst_49 {dimension_numbers = #tpu.dot_dimension_numbers<[1], [0], [0], [1], [0, 0, 1, 1], [], []>} : vector<8x128xbf16>, vector<128x128xbf16>, vector<8x128xf32> -> vector<8x128xf32>
      %59 = arith.addf %52, %58 : vector<8x128xf32>
      %c0_50 = arith.constant 0 : index
      %60 = arith.index_cast %arg12 : i32 to index
      %c1_51 = arith.constant 1 : index
      %c0_52 = arith.constant 0 : index
      %61 = vector.load %arg7[%c0_50, %60, %c1_51, %c0_52] : memref<1x8x9x128xbf16, #tpu.memory_space<vmem>>, vector<1x1x8x128xbf16>
      %62 = vector.shape_cast %61 : vector<1x1x8x128xbf16> to vector<8x128xbf16>
      %c8 = arith.constant 8 : index
      %c0_53 = arith.constant 0 : index
      %c0_54 = arith.constant 0 : index
      %63 = vector.load %arg9[%c8, %c0_53, %c0_54] : memref<9x128x128xbf16, #tpu.memory_space<vmem>>, vector<1x128x128xbf16>
      %64 = vector.shape_cast %63 : vector<1x128x128xbf16> to vector<128x128xbf16>
      %cst_55 = arith.constant dense<0.000000e+00> : vector<8x128xf32>
      %65 = tpu.matmul %62, %64, %cst_55 {dimension_numbers = #tpu.dot_dimension_numbers<[1], [0], [0], [1], [0, 0, 1, 1], [], []>} : vector<8x128xbf16>, vector<128x128xbf16>, vector<8x128xf32> -> vector<8x128xf32>
      %66 = arith.addf %59, %65 : vector<8x128xf32>
      %cst_56 = arith.constant 1.000000e-01 : f32
      %67 = vector.broadcast %cst_56 : f32 to vector<8x128xf32>
      %68 = arith.mulf %67, %66 : vector<8x128xf32>
      %69 = arith.maximumf %66, %68 : vector<8x128xf32>
      %70 = arith.truncf %69 : vector<8x128xf32> to vector<8x128xbf16>
      %c0_57 = arith.constant 0 : index
      %71 = arith.index_cast %arg12 : i32 to index
      %c0_58 = arith.constant 0 : index
      %c0_59 = arith.constant 0 : index
      %72 = vector.load %arg11[%c0_57, %71, %c0_58, %c0_59] : memref<1x8x8x128xbf16, #tpu.memory_space<vmem>>, vector<1x1x8x128xbf16>
      %73 = vector.shape_cast %72 : vector<1x1x8x128xbf16> to vector<8x128xbf16>
      %74 = vector.shape_cast %70 : vector<8x128xbf16> to vector<1x1x8x128xbf16>
      tpu.vector_store %arg11[%c0_57, %71, %c0_58, %c0_59], %74 {strides = array<i32>} : memref<1x8x8x128xbf16, #tpu.memory_space<vmem>>, vector<1x1x8x128xbf16>,
    }
    %c8_i32_1 = arith.constant 8 : i32
    return
  }
  func.func @transform_0(%arg0: i32, %arg1: i32, %arg2: i32) -> (i32, i32, i32, i32) {
    %c0_i32 = arith.constant 0 : i32
    %c0_i32_0 = arith.constant 0 : i32
    %c0_i32_1 = arith.constant 0 : i32
    return %arg0, %arg2, %c0_i32, %c0_i32_0 : i32, i32, i32, i32
  }
  func.func @transform_1(%arg0: i32, %arg1: i32, %arg2: i32) -> (i32, i32, i32, i32) {
    %c0_i32 = arith.constant 0 : i32
    %c0_i32_0 = arith.constant 0 : i32
    %c0_i32_1 = arith.constant 0 : i32
    return %arg0, %arg2, %c0_i32, %c0_i32_0 : i32, i32, i32, i32
  }
  func.func @transform_2(%arg0: i32, %arg1: i32, %arg2: i32) -> (i32, i32, i32, i32) {
    %c0_i32 = arith.constant 0 : i32
    %c0_i32_0 = arith.constant 0 : i32
    %c0_i32_1 = arith.constant 0 : i32
    return %arg0, %arg2, %c0_i32, %c0_i32_0 : i32, i32, i32, i32
  }
  func.func @transform_3(%arg0: i32, %arg1: i32, %arg2: i32) -> (i32, i32, i32, i32) {
    %c0_i32 = arith.constant 0 : i32
    %c0_i32_0 = arith.constant 0 : i32
    %c0_i32_1 = arith.constant 0 : i32
    return %arg0, %arg2, %c0_i32, %c0_i32_0 : i32, i32, i32, i32
  }
  func.func @transform_4(%arg0: i32, %arg1: i32, %arg2: i32) -> (i32, i32, i32, i32) {
    %c0_i32 = arith.constant 0 : i32
    %c0_i32_0 = arith.constant 0 : i32
    %c0_i32_1 = arith.constant 0 : i32
    return %arg0, %arg2, %c0_i32, %c0_i32_0 : i32, i32, i32, i32
  }
  func.func @transform_5(%arg0: i32, %arg1: i32, %arg2: i32) -> (i32, i32, i32, i32) {
    %c0_i32 = arith.constant 0 : i32
    %c0_i32_0 = arith.constant 0 : i32
    %c0_i32_1 = arith.constant 0 : i32
    return %arg0, %arg2, %c0_i32, %c0_i32_0 : i32, i32, i32, i32
  }
  func.func @transform_6(%arg0: i32, %arg1: i32, %arg2: i32) -> (i32, i32, i32) {
    %c0_i32 = arith.constant 0 : i32
    %c0_i32_0 = arith.constant 0 : i32
    %c0_i32_1 = arith.constant 0 : i32
    return %c0_i32, %c0_i32_0, %arg1 : i32, i32, i32
  }
  func.func @transform_7(%arg0: i32, %arg1: i32, %arg2: i32) -> (i32, i32) {
    %c0_i32 = arith.constant 0 : i32
    %c0_i32_0 = arith.constant 0 : i32
    return %c0_i32, %arg1 : i32, i32
  }
  func.func @transform_8(%arg0: i32, %arg1: i32, %arg2: i32) -> (i32, i32, i32, i32) {
    %c0_i32 = arith.constant 0 : i32
    %c0_i32_0 = arith.constant 0 : i32
    return %arg0, %arg2, %c0_i32, %arg1 : i32, i32, i32, i32
  }
}

</mosaic_0001>

<llo_original>
// kernel: downsample_forward.4
$region0: #{downsample_forward.4}
  #allocation0 [shape = 'u32[]', space=smem, size = 0x4, offset = 0x4, fixed_abs, tag = 'smem constant byte address 0x4 - core index']
  #allocation1 [shape = 'u32[144,128]{1,0:T(1,128)}', space=vmem, size = 0x12000, scoped, tag = 'internal scratch']
  #allocation2 [shape = 'f32[64,128]{1,0:T(8,128)}', space=vmem, size = 0x8000, scoped, tag = 'scratch operand']
  %s0 = inlined_call_operand.vmem [shape: bf16[128,128], index: 0, kind: input, shape index: {}]
  %s1 = inlined_call_operand.vmem [shape: bf16[128,128], index: 1, kind: input, shape index: {}]
  %s2 = inlined_call_operand.vmem [shape: f32[1,128], index: 2, kind: input, shape index: {}]
  %s3 = inlined_call_operand.vmem [shape: bf16[128,128], index: 3, kind: output, shape index: {}]
  %s4 = sld [smem:[#allocation0]]
  $region53: #{downsample_forward.4} parent=0
    _
  %s6 = ssub.s32 1, %s4
  %s7 = scalar_select 0, %s6, %s4
  loop: start=0, step=1, limit=4
  $region2: #{downsample_forward.4} parent=0 // loop_pre_header
    _
  $region3: #{downsample_forward.4} parent=0 // loop_header
    %s9 = sphi 0, %s13
    %p10 = scmp.ge.s32.totalorder %s9, 4
    %s16 = sphi 0, %s35
    %s17 = sphi 0, %s31
    %s18 = sphi 0, %s27
    %s19 = sphi 0, %s16
    %s20 = sphi 0, %s17
    %s21 = sphi 0, %s18
    %s22 = sphi 0, %s19
    %s23 = sphi 0, %s20
    %s24 = sphi 0, %s21
    %s40 = sphi 0, %s42
    %s43 = sphi 0, %s40
    %s44 = sphi 0, %s43
    %s60 = sphi 0, %s44
    %s68 = sphi 0, %s70
    %s71 = sphi 0, %s68
    %s72 = sphi 0, %s71
    %s88 = sphi 0, %s72
    %s94 = sphi 0, %s96
    %s97 = sphi 0, %s94
    %s98 = sphi 0, %s97
    %s114 = sphi 0, %s98
    %s122 = sphi 0, %s124
    %s125 = sphi 0, %s122
    %s126 = sphi 0, %s125
    %s142 = sphi 0, %s126
  $region4: #{downsample_forward.4} parent=0 // loop_header_branch
    %12 = sbr.rel (%p10) target = $region8
  $region5: #{downsample_forward.4} parent=0 // loop_body
    %s14 = ssub.s32 %s9, 1
    %s15 = ssub.s32 %s9, 2
    %s25 = sadd.s32 1, %s18
    %p26 = scmp.ge.s32.totalorder %s25, 1
    %s27 = scalar_select %p26, 0, %s25
    %s28 = sadd.s32 1, %s17
    %s29 = scalar_select %p26, %s28, %s17
    %p30 = scmp.ge.s32.totalorder %s29, 1
    %s31 = scalar_select %p30, 0, %s29
    %s32 = sadd.s32 1, %s16
    %s33 = scalar_select %p30, %s32, %s16
    %p34 = scmp.ge.s32.totalorder %s33, 2
    %s35 = scalar_select %p34, 0, %s33
    %s36 = ssub.s32 %s16, %s35
    %s37 = ssub.s32 %s18, %s27
    %s38 = sor.u32 %s36, %s37
    %p39 = scmp.eq.s32.totalorder %s38, 0
    %s41 = sadd.s32 %s40, 1
    %s42 = scalar_select %p39, %s40, %s41
    %p45 = pneg %p39
    %p46 = scmp.eq.s32.totalorder %s9, 1
    %p47 = por %p45, %p46
    %p48 = scmp.ne.s32.totalorder %s40, %s43
    %p49 = scmp.eq.s32.totalorder %s9, 0
    %p50 = por %p48, %p49
    %p51 = scmp.ne.s32.totalorder %s40, %s43
    %p52 = scmp.eq.s32.totalorder %s14, 1
    %p53 = por %p51, %p52
    %p54 = scmp.ne.s32.totalorder %s43, %s44
    %p55 = scmp.eq.s32.totalorder %s14, 0
    %p56 = por %p54, %p55
    %p57 = scmp.ne.s32.totalorder %s43, %s44
    %p58 = scmp.eq.s32.totalorder %s15, 1
    %p59 = por %p57, %p58
    %p61 = scmp.ne.s32.totalorder %s44, %s60
    %p62 = scmp.eq.s32.totalorder %s15, 0
    %p63 = por %p61, %p62
    %s64 = ssub.s32 %s18, %s27
    %s65 = ssub.s32 %s17, %s31
    %s66 = sor.u32 %s64, %s65
    %p67 = scmp.eq.s32.totalorder %s66, 0
    %s69 = sadd.s32 %s68, 1
    %s70 = scalar_select %p67, %s68, %s69
    %p73 = pneg %p67
    %p74 = scmp.eq.s32.totalorder %s9, 1
    %p75 = por %p73, %p74
    %p76 = scmp.ne.s32.totalorder %s68, %s71
    %p77 = scmp.eq.s32.totalorder %s9, 0
    %p78 = por %p76, %p77
    %p79 = scmp.ne.s32.totalorder %s68, %s71
    %p80 = scmp.eq.s32.totalorder %s14, 1
    %p81 = por %p79, %p80
    %p82 = scmp.ne.s32.totalorder %s71, %s72
    %p83 = scmp.eq.s32.totalorder %s14, 0
    %p84 = por %p82, %p83
    %p85 = scmp.ne.s32.totalorder %s71, %s72
    %p86 = scmp.eq.s32.totalorder %s15, 1
    %p87 = por %p85, %p86
    %p89 = scmp.ne.s32.totalorder %s72, %s88
    %p90 = scmp.eq.s32.totalorder %s15, 0
    %p91 = por %p89, %p90
    %s92 = ssub.s32 %s17, %s31
    %p93 = scmp.eq.s32.totalorder %s92, 0
    %s95 = sadd.s32 %s94, 1
    %s96 = scalar_select %p93, %s94, %s95
    %p99 = pneg %p93
    %p100 = scmp.eq.s32.totalorder %s9, 1
    %p101 = por %p99, %p100
    %p102 = scmp.ne.s32.totalorder %s94, %s97
    %p103 = scmp.eq.s32.totalorder %s9, 0
    %p104 = por %p102, %p103
    %p105 = scmp.ne.s32.totalorder %s94, %s97
    %p106 = scmp.eq.s32.totalorder %s14, 1
    %p107 = por %p105, %p106
    %p108 = scmp.ne.s32.totalorder %s97, %s98
    %p109 = scmp.eq.s32.totalorder %s14, 0
    %p110 = por %p108, %p109
    %p111 = scmp.ne.s32.totalorder %s97, %s98
    %p112 = scmp.eq.s32.totalorder %s15, 1
    %p113 = por %p111, %p112
    %p115 = scmp.ne.s32.totalorder %s98, %s114
    %p116 = scmp.eq.s32.totalorder %s15, 0
    %p117 = por %p115, %p116
    %s118 = ssub.s32 %s16, %s35
    %s119 = ssub.s32 %s17, %s31
    %s120 = sor.u32 %s118, %s119
    %p121 = scmp.eq.s32.totalorder %s120, 0
    %s123 = sadd.s32 %s122, 1
    %s124 = scalar_select %p121, %s122, %s123
    %p127 = pneg %p121
    %p128 = scmp.eq.s32.totalorder %s9, 1
    %p129 = por %p127, %p128
    %p130 = scmp.ne.s32.totalorder %s122, %s125
    %p131 = scmp.eq.s32.totalorder %s9, 0
    %p132 = por %p130, %p131
    %p133 = scmp.ne.s32.totalorder %s122, %s125
    %p134 = scmp.eq.s32.totalorder %s14, 1
    %p135 = por %p133, %p134
    %p136 = scmp.ne.s32.totalorder %s125, %s126
    %p137 = scmp.eq.s32.totalorder %s14, 0
    %p138 = por %p136, %p137
    %p139 = scmp.ne.s32.totalorder %s125, %s126
    %p140 = scmp.eq.s32.totalorder %s15, 1
    %p141 = por %p139, %p140
    %p143 = scmp.ne.s32.totalorder %s126, %s142
    %p144 = scmp.eq.s32.totalorder %s15, 0
    %p145 = por %p143, %p144
    %p146 = scmp.le.s32.totalorder 1, %s9
    %p147 = scmp.lt.s32.totalorder %s9, 3
    %p148 = pnand %p146, %p147
    %p149 = pneg %p148
    // Predicated region
    $region9: #{downsample_forward.4} parent=5 // pred_check
      _
    $region10: #{downsample_forward.4} parent=5 // pred_check_branch
      %151 = sbr.rel (%p148) target = $region12
    $region11: #{downsample_forward.4} parent=5 // pred_region
      %s152 = ssub.s32 %s9, 1
      // Predicated region
      $region13: #{downsample_forward.4} parent=11 // pred_check
        %p153 = pneg %p84
      $region14: #{downsample_forward.4} parent=11 // pred_check_branch
        %155 = sbr.rel (%p153) target = $region16
      $region15: #{downsample_forward.4} parent=11 // pred_region
        %s156 = smul.u32 16, %s21
        %p157 = scmp.lt.s32.totalorder %s156, 15
        %s158 = scalar_select %p157, %s156, 15
        %p159 = scmp.lt.s32.totalorder %s20, 0
        %s160 = scalar_select %p159, %s20, 0
        %s161 = sadd.s32 %s160, %s158
        %s162 = smul.addr %s161, 4
        %s163 = scalar_lea.vmem %s1, %s162
        %s164 = smul.u32 16, %s21
      $region16: #{downsample_forward.4} parent=11 // pred_fallthru
        _
      // Predicated region
      $region17: #{downsample_forward.4} parent=11 // pred_check
        %p165 = pneg %p110
      $region18: #{downsample_forward.4} parent=11 // pred_check_branch
        %167 = sbr.rel (%p165) target = $region20
      $region19: #{downsample_forward.4} parent=11 // pred_region
        %p168 = scmp.lt.s32.totalorder %s20, 0
        %s169 = scalar_select %p168, %s20, 0
        %s170 = scalar_lea.vmem %s2, %s169
      $region20: #{downsample_forward.4} parent=11 // pred_fallthru
        _
    $region12: #{downsample_forward.4} parent=5 // pred_fallthru
      _
    %p171 = scmp.lt.s32.totalorder %s9, 2
    // Predicated region
    $region21: #{downsample_forward.4} parent=5 // pred_check
      %p172 = pneg %p171
    $region22: #{downsample_forward.4} parent=5 // pred_check_branch
      %174 = sbr.rel (%p172) target = $region24
    $region23: #{downsample_forward.4} parent=5 // pred_region
      // Predicated region
      $region25: #{downsample_forward.4} parent=23 // pred_check
        %p175 = pneg %p50
      $region26: #{downsample_forward.4} parent=23 // pred_check_branch
        %177 = sbr.rel (%p175) target = $region28
      $region27: #{downsample_forward.4} parent=23 // pred_region
        %s178 = smul.u32 8, %s16
        %p179 = scmp.lt.s32.totalorder %s178, 15
        %s180 = scalar_select %p179, %s178, 15
        %p181 = scmp.lt.s32.totalorder %s18, 0
        %s182 = scalar_select %p181, %s18, 0
        %s183 = sadd.s32 %s182, %s180
        %s184 = smul.addr %s183, 4
        %s185 = scalar_lea.vmem %s0, %s184
        %s186 = smul.u32 8, %s16
      $region28: #{downsample_forward.4} parent=23 // pred_fallthru
        _
    $region24: #{downsample_forward.4} parent=5 // pred_fallthru
      _
    %p187 = scmp.le.s32.totalorder 1, %s9
    %p188 = scmp.lt.s32.totalorder %s9, 3
    %p189 = pnand %p187, %p188
    %p190 = pneg %p189
    // Predicated region
    $region29: #{downsample_forward.4} parent=5 // pred_check
      _
    $region30: #{downsample_forward.4} parent=5 // pred_check_branch
      %192 = sbr.rel (%p189) target = $region32
    $region31: #{downsample_forward.4} parent=5 // pred_region
      %s193 = ssub.s32 %s9, 1
      %s194 = smul.u32 8, %s19
      %p195 = scmp.lt.s32.totalorder %s194, 15
      %s196 = scalar_select %p195, %s194, 15
      %p197 = scmp.lt.s32.totalorder %s21, 0
      %s198 = scalar_select %p197, %s21, 0
      %s199 = sadd.s32 %s198, %s196
      %s200 = smul.addr %s199, 4
      %s201 = scalar_lea.vmem %s0, %s200
      %p202 = pneg %p56
      %p203 = pneg %p53
      %s204 = smul.u32 16, %s21
      %p205 = scmp.lt.s32.totalorder %s204, 15
      %s206 = scalar_select %p205, %s204, 15
      %p207 = scmp.lt.s32.totalorder %s20, 0
      %s208 = scalar_select %p207, %s20, 0
      %s209 = sadd.s32 %s208, %s206
      %s210 = smul.addr %s209, 4
      %s211 = scalar_lea.vmem %s1, %s210
      %p212 = pneg %p84
      %p213 = pneg %p81
      %p214 = scmp.lt.s32.totalorder %s20, 0
      %s215 = scalar_select %p214, %s20, 0
      %s216 = scalar_lea.vmem %s2, %s215
      %p217 = pneg %p110
      %p218 = pneg %p107
      %p219 = pneg %p138
      %p220 = pneg %p135
      %s221 = smul.u32 8, %s19
      %p222 = scmp.lt.s32.totalorder %s221, 15
      %s223 = scalar_select %p222, %s221, 15
      %p224 = scmp.lt.s32.totalorder %s20, 0
      %s225 = scalar_select %p224, %s20, 0
      %s226 = sadd.s32 %s225, %s223
      %s227 = smul.addr %s226, 4
      %s228 = scalar_lea.vmem %s3, %s227
      %s229 = smul.u32 8, %s19
      %p230 = scmp.lt.s32.totalorder %s229, 15
      %s231 = scalar_select %p230, %s229, 15
      %p232 = scmp.lt.s32.totalorder %s21, 0
      %s233 = scalar_select %p232, %s21, 0
      %s234 = sadd.s32 %s233, %s231
      %s235 = smul.addr %s234, 4
      %s236 = scalar_lea.vmem %s0, %s235
      %s237 = smul.u32 8, %s19
      %s238 = smul.u32 16, %s21
      %p239 = scmp.lt.s32.totalorder %s238, 15
      %s240 = scalar_select %p239, %s238, 15
      %p241 = scmp.lt.s32.totalorder %s20, 0
      %s242 = scalar_select %p241, %s20, 0
      %s243 = sadd.s32 %s242, %s240
      %s244 = smul.addr %s243, 4
      %s245 = scalar_lea.vmem %s1, %s244
      %s246 = smul.u32 16, %s21
      %p247 = scmp.lt.s32.totalorder %s20, 0
      %s248 = scalar_select %p247, %s20, 0
      %s249 = scalar_lea.vmem %s2, %s248
      %s250 = smul.u32 8, %s19
      %p251 = scmp.lt.s32.totalorder %s250, 15
      %s252 = scalar_select %p251, %s250, 15
      %p253 = scmp.lt.s32.totalorder %s20, 0
      %s254 = scalar_select %p253, %s20, 0
      %s255 = sadd.s32 %s254, %s252
      %s256 = smul.addr %s255, 4
      %s257 = scalar_lea.vmem %s3, %s256
      %s258 = smul.u32 8, %s19
      %p260 = scmp.eq.s32.totalorder %s21, 0
      // Predicated region
      $region33: #{downsample_forward.4} parent=31 // pred_check
        %p261 = pneg %p260
      $region34: #{downsample_forward.4} parent=31 // pred_check_branch
        %263 = sbr.rel (%p261) target = $region36
      $region35: #{downsample_forward.4} parent=31 // pred_region
        %v264 = vld [vmem:[%s249] sm:$0x1]
        %v266 = vlaneseq
        %v267 = vshrl.u32 %v266, 7
        %v268 = vsub.s32 0, %v267
        %v269 = vrot.slane %v264, %v268
        %271 = vst [vmem:[#allocation2] sm:$0xff] %v269
        %272 = vst [vmem:[#allocation2 + $0x8] sm:$0xff] %v269
        %273 = vst [vmem:[#allocation2 + $0x10] sm:$0xff] %v269
        %274 = vst [vmem:[#allocation2 + $0x18] sm:$0xff] %v269
        %275 = vst [vmem:[#allocation2 + $0x20] sm:$0xff] %v269
        %276 = vst [vmem:[#allocation2 + $0x28] sm:$0xff] %v269
        %277 = vst [vmem:[#allocation2 + $0x30] sm:$0xff] %v269
        %278 = vst [vmem:[#allocation2 + $0x38] sm:$0xff] %v269
      $region36: #{downsample_forward.4} parent=31 // pred_fallthru
        _
      %v279 = vld [vmem:[#allocation2] sm:$0xff]
      %v280 = vld [vmem:[#allocation2 + $0x8] sm:$0xff]
      %v281 = vld [vmem:[#allocation2 + $0x10] sm:$0xff]
      %v282 = vld [vmem:[#allocation2 + $0x18] sm:$0xff]
      %v283 = vld [vmem:[#allocation2 + $0x20] sm:$0xff]
      %v284 = vld [vmem:[#allocation2 + $0x28] sm:$0xff]
      %v285 = vld [vmem:[#allocation2 + $0x30] sm:$0xff]
      %v286 = vld [vmem:[#allocation2 + $0x38] sm:$0xff]
      %v287 = vld [vmem:[%s236] sm:$0xf]
      %v288 = vld [vmem:[%s236 + $0x4] sm:$0xf]
      %v289 = vld [vmem:[%s236 + $0x8] sm:$0xf]
      %v290 = vld [vmem:[%s236 + $0xc] sm:$0xf]
      %v291 = vld [vmem:[%s236 + $0x10] sm:$0xf]
      %v292 = vld [vmem:[%s236 + $0x14] sm:$0xf]
      %v293 = vld [vmem:[%s236 + $0x18] sm:$0xf]
      %v294 = vld [vmem:[%s236 + $0x1c] sm:$0xf]
      %v295 = vld [vmem:[%s245] sm:$0xf]
      %v296 = vld [vmem:[%s245 + $0x4] sm:$0xf]
      %v297 = vld [vmem:[%s245 + $0x8] sm:$0xf]
      %v298 = vld [vmem:[%s245 + $0xc] sm:$0xf]
      %v299 = vld [vmem:[%s245 + $0x10] sm:$0xf]
      %v300 = vld [vmem:[%s245 + $0x14] sm:$0xf]
      %v301 = vld [vmem:[%s245 + $0x18] sm:$0xf]
      %v302 = vld [vmem:[%s245 + $0x1c] sm:$0xf]
      %v303 = vld [vmem:[%s245 + $0x20] sm:$0xf]
      %v304 = vld [vmem:[%s245 + $0x24] sm:$0xf]
      %v305 = vld [vmem:[%s245 + $0x28] sm:$0xf]
      %v306 = vld [vmem:[%s245 + $0x2c] sm:$0xf]
      %v307 = vld [vmem:[%s245 + $0x30] sm:$0xf]
      %v308 = vld [vmem:[%s245 + $0x34] sm:$0xf]
      %v309 = vld [vmem:[%s245 + $0x38] sm:$0xf]
      %v310 = vld [vmem:[%s245 + $0x3c] sm:$0xf]
      %v319 = vunpack.c.l.b16 %v287
      %v320 = vunpack.c.l.b16 %v288
      %v321 = vunpack.c.l.b16 %v289
      %v322 = vunpack.c.l.b16 %v290
      %v323 = vunpack.c.l.b16 %v291
      %v324 = vunpack.c.l.b16 %v292
      %v325 = vunpack.c.l.b16 %v293
      %v326 = vunpack.c.l.b16 %v294
      %v327 = vpack.c.b16 %v320, %v319
      %v328 = vpack.c.b16 %v322, %v321
      %v329 = vpack.c.b16 %v324, %v323
      %v330 = vpack.c.b16 %v326, %v325
      %v351 = vunpack.c.l.b16 %v295
      %v352 = vunpack.c.l.b16 %v296
      %v353 = vunpack.c.l.b16 %v297
      %v354 = vunpack.c.l.b16 %v298
      %v355 = vunpack.c.l.b16 %v299
      %v356 = vunpack.c.l.b16 %v300
      %v357 = vunpack.c.l.b16 %v301
      %v358 = vunpack.c.l.b16 %v302
      %v359 = vunpack.c.l.b16 %v303
      %v360 = vunpack.c.l.b16 %v304
      %v361 = vunpack.c.l.b16 %v305
      %v362 = vunpack.c.l.b16 %v306
      %v363 = vunpack.c.l.b16 %v307
      %v364 = vunpack.c.l.b16 %v308
      %v365 = vunpack.c.l.b16 %v309
      %v366 = vunpack.c.l.b16 %v310
      %v367 = vpack.c.b16 %v352, %v351
      %v368 = vpack.c.b16 %v354, %v353
      %v369 = vpack.c.b16 %v356, %v355
      %v370 = vpack.c.b16 %v358, %v357
      %v371 = vpack.c.b16 %v360, %v359
      %v372 = vpack.c.b16 %v362, %v361
      %v373 = vpack.c.b16 %v364, %v363
      %v374 = vpack.c.b16 %v366, %v365
      %383 = vmatprep.subr.bf16.mxu0 0
      %384 = vmatpush1.bf16.msra.mxu0 %v374
      %385 = vmatprep.subr.bf16.mxu0 0
      %386 = vmatpush1.bf16.msra.mxu0 %v373
      %387 = vmatprep.subr.bf16.mxu0 0
      %388 = vmatpush1.bf16.msra.mxu0 %v372
      %389 = vmatprep.subr.bf16.mxu0 0
      %390 = vmatpush1.bf16.msra.mxu0 %v371
      %391 = vmatprep.subr.bf16.mxu0 0
      %392 = vmatpush1.bf16.msra.mxu0 %v370
      %393 = vmatprep.subr.bf16.mxu0 0
      %394 = vmatpush1.bf16.msra.mxu0 %v369
      %395 = vmatprep.subr.bf16.mxu0 0
      %396 = vmatpush1.bf16.msra.mxu0 %v368
      %397 = vmatprep.subr.bf16.mxu0 0
      %398 = vmatpush1.bf16.msra.mxu0 %v367
      %399 = vmatprep.subr.bf16.mxu0 0
      %400 = vmatpush2.bf16.msra.mxu0 0
      %401 = vmatprep.subr.bf16.mxu0 0
      %402 = vmatpush2.bf16.msra.mxu0 0
      %403 = vmatprep.subr.bf16.mxu0 0
      %404 = vmatpush2.bf16.msra.mxu0 0
      %405 = vmatprep.subr.bf16.mxu0 0
      %406 = vmatpush2.bf16.msra.mxu0 0
      %407 = vmatprep.subr.bf16.mxu0 0
      %408 = vmatpush2.bf16.msra.mxu0 0
      %409 = vmatprep.subr.bf16.mxu0 0
      %410 = vmatpush2.bf16.msra.mxu0 0
      %411 = vmatprep.subr.bf16.mxu0 0
      %412 = vmatpush2.bf16.msra.mxu0 0
      %413 = vmatprep.subr.bf16.mxu0 0
      %414 = vmatpush2.bf16.msra.mxu0 0
      %415 = vmatprep.mubr.bf16.mxu0 0
      %416 = vmatmul.mubr.bf16.gmra.mxu0 %v327
      %v417 = vpop.f32.mrf.mxu0
      %v418 = vadd.f32 0.0, %v417
      %v419 = vpop.f32.mrf.mxu0
      %v420 = vpop.f32.mrf.mxu0
      %v421 = vadd.f32 0.0, %v420
      %v422 = vpop.f32.mrf.mxu0
      %423 = vmatprep.mubr.bf16.mxu0 0
      %424 = vmatmul.mubr.bf16.gmra.mxu0 %v328
      %v425 = vpop.f32.mrf.mxu0
      %v426 = vadd.f32 0.0, %v425
      %v427 = vpop.f32.mrf.mxu0
      %v428 = vpop.f32.mrf.mxu0
      %v429 = vadd.f32 0.0, %v428
      %v430 = vpop.f32.mrf.mxu0
      %431 = vmatprep.mubr.bf16.mxu0 0
      %432 = vmatmul.mubr.bf16.gmra.mxu0 %v329
      %v433 = vpop.f32.mrf.mxu0
      %v434 = vadd.f32 0.0, %v433
      %v435 = vpop.f32.mrf.mxu0
      %v436 = vpop.f32.mrf.mxu0
      %v437 = vadd.f32 0.0, %v436
      %v438 = vpop.f32.mrf.mxu0
      %439 = vmatprep.mubr.bf16.mxu0 0
      %440 = vmatmul.mubr.bf16.gmra.mxu0 %v330
      %v441 = vpop.f32.mrf.mxu0
      %v442 = vadd.f32 0.0, %v441
      %v443 = vpop.f32.mrf.mxu0
      %v444 = vpop.f32.mrf.mxu0
      %v445 = vadd.f32 0.0, %v444
      %v446 = vpop.f32.mrf.mxu0
      %447 = vdwg.mxu0
      %v448 = vadd.f32 %v279, %v418
      %v449 = vadd.f32 %v280, %v421
      %v450 = vadd.f32 %v281, %v426
      %v451 = vadd.f32 %v282, %v429
      %v452 = vadd.f32 %v283, %v434
      %v453 = vadd.f32 %v284, %v437
      %v454 = vadd.f32 %v285, %v442
      %v455 = vadd.f32 %v286, %v445
      %456 = vst [vmem:[#allocation2] sm:$0xff] %v448
      %457 = vst [vmem:[#allocation2 + $0x8] sm:$0xff] %v449
      %458 = vst [vmem:[#allocation2 + $0x10] sm:$0xff] %v450
      %459 = vst [vmem:[#allocation2 + $0x18] sm:$0xff] %v451
      %460 = vst [vmem:[#allocation2 + $0x20] sm:$0xff] %v452
      %461 = vst [vmem:[#allocation2 + $0x28] sm:$0xff] %v453
      %462 = vst [vmem:[#allocation2 + $0x30] sm:$0xff] %v454
      %463 = vst [vmem:[#allocation2 + $0x38] sm:$0xff] %v455
      // Predicated region
      $region37: #{downsample_forward.4} parent=31 // pred_check
        %p464 = pneg %p260
      $region38: #{downsample_forward.4} parent=31 // pred_check_branch
        %466 = sbr.rel (%p464) target = $region40
      $region39: #{downsample_forward.4} parent=31 // pred_region
        %v467 = vld [vmem:[#allocation2] sm:$0xff]
        %v468 = vld [vmem:[#allocation2 + $0x8] sm:$0xff]
        %v469 = vld [vmem:[#allocation2 + $0x10] sm:$0xff]
        %v470 = vld [vmem:[#allocation2 + $0x18] sm:$0xff]
        %v471 = vld [vmem:[#allocation2 + $0x20] sm:$0xff]
        %v472 = vld [vmem:[#allocation2 + $0x28] sm:$0xff]
        %v473 = vld [vmem:[#allocation2 + $0x30] sm:$0xff]
        %v474 = vld [vmem:[#allocation2 + $0x38] sm:$0xff]
        %v475 = vmul.f32 %v467, 0.1
        %v476 = vmul.f32 %v468, 0.1
        %v477 = vmul.f32 %v469, 0.1
        %v478 = vmul.f32 %v470, 0.1
        %v479 = vmul.f32 %v471, 0.1
        %v480 = vmul.f32 %v472, 0.1
        %v481 = vmul.f32 %v473, 0.1
        %v482 = vmul.f32 %v474, 0.1
        %v483 = vmax.f32 %v467, %v475
        %v484 = vmax.f32 %v468, %v476
        %v485 = vmax.f32 %v469, %v477
        %v486 = vmax.f32 %v470, %v478
        %v487 = vmax.f32 %v471, %v479
        %v488 = vmax.f32 %v472, %v480
        %v489 = vmax.f32 %v473, %v481
        %v490 = vmax.f32 %v474, %v482
        %v491 = vpack.c.bf16 %v484, %v483
        %v492 = vpack.c.bf16 %v486, %v485
        %v493 = vpack.c.bf16 %v488, %v487
        %v494 = vpack.c.bf16 %v490, %v489
        %v499 = vunpack.c.l.b16 %v491
        %v500 = vunpack.c.h.b16 %v491
        %v501 = vunpack.c.l.b16 %v492
        %v502 = vunpack.c.h.b16 %v492
        %v503 = vunpack.c.l.b16 %v493
        %v504 = vunpack.c.h.b16 %v493
        %v505 = vunpack.c.l.b16 %v494
        %v506 = vunpack.c.h.b16 %v494
        %v507 = vpack.c.b16 %v499, %v499
        %v508 = vpack.c.b16 %v500, %v500
        %v509 = vpack.c.b16 %v501, %v501
        %v510 = vpack.c.b16 %v502, %v502
        %v511 = vpack.c.b16 %v503, %v503
        %v512 = vpack.c.b16 %v504, %v504
        %v513 = vpack.c.b16 %v505, %v505
        %v514 = vpack.c.b16 %v506, %v506
        %523 = vst [vmem:[%s257] sm:$0xf] %v507
        %524 = vst [vmem:[%s257 + $0x4] sm:$0xf] %v508
        %525 = vst [vmem:[%s257 + $0x8] sm:$0xf] %v509
        %526 = vst [vmem:[%s257 + $0xc] sm:$0xf] %v510
        %527 = vst [vmem:[%s257 + $0x10] sm:$0xf] %v511
        %528 = vst [vmem:[%s257 + $0x14] sm:$0xf] %v512
        %529 = vst [vmem:[%s257 + $0x18] sm:$0xf] %v513
        %530 = vst [vmem:[%s257 + $0x1c] sm:$0xf] %v514
      $region40: #{downsample_forward.4} parent=31 // pred_fallthru
        _
      %s531 = smul.u32 8, %s19
      %p532 = scmp.lt.s32.totalorder %s531, 15
      %s533 = scalar_select %p532, %s531, 15
      %p534 = scmp.lt.s32.totalorder %s20, 0
      %s535 = scalar_select %p534, %s20, 0
      %s536 = sadd.s32 %s535, %s533
      %s537 = smul.addr %s536, 4
      %s538 = scalar_lea.vmem %s3, %s537
      // Predicated region
      $region41: #{downsample_forward.4} parent=31 // pred_check
        %p539 = pneg %p135
      $region42: #{downsample_forward.4} parent=31 // pred_check_branch
        %541 = sbr.rel (%p539) target = $region44
      $region43: #{downsample_forward.4} parent=31 // pred_region
        %s542 = smul.u32 8, %s19
      $region44: #{downsample_forward.4} parent=31 // pred_fallthru
        _
    $region32: #{downsample_forward.4} parent=5 // pred_fallthru
      _
    %p543 = scmp.le.s32.totalorder 2, %s9
    // Predicated region
    $region45: #{downsample_forward.4} parent=5 // pred_check
      %p544 = pneg %p543
    $region46: #{downsample_forward.4} parent=5 // pred_check_branch
      %546 = sbr.rel (%p544) target = $region48
    $region47: #{downsample_forward.4} parent=5 // pred_region
      %s547 = ssub.s32 %s9, 2
      // Predicated region
      $region49: #{downsample_forward.4} parent=47 // pred_check
        %p548 = pneg %p141
      $region50: #{downsample_forward.4} parent=47 // pred_check_branch
        %550 = sbr.rel (%p548) target = $region52
      $region51: #{downsample_forward.4} parent=47 // pred_region
        %s551 = smul.u32 8, %s22
        %p552 = scmp.lt.s32.totalorder %s551, 15
        %s553 = scalar_select %p552, %s551, 15
        %p554 = scmp.lt.s32.totalorder %s23, 0
        %s555 = scalar_select %p554, %s23, 0
        %s556 = sadd.s32 %s555, %s553
        %s557 = smul.addr %s556, 4
        %s558 = scalar_lea.vmem %s3, %s557
      $region52: #{downsample_forward.4} parent=47 // pred_fallthru
        _
    $region48: #{downsample_forward.4} parent=5 // pred_fallthru
      _
  $region6: #{downsample_forward.4} parent=0 // loop_footer
    %s13 = sadd.s32 1, %s9
  $region7: #{downsample_forward.4} parent=0 // loop_footer_branch
    %8 = sbr.rel target = $region3
  $region8: #{downsample_forward.4} parent=0 // loop_exit
    _

// kernel: downsample_forward.5
$region0: #{downsample_forward.5}
  #allocation0 [shape = 'u32[]', space=smem, size = 0x4, offset = 0x4, fixed_abs, tag = 'smem constant byte address 0x4 - core index']
  #allocation1 [shape = 'u32[144,128]{1,0:T(1,128)}', space=vmem, size = 0x12000, scoped, tag = 'internal scratch']
  %s0 = inlined_call_operand.vmem [shape: bf16[2,8,10,128], index: 0, kind: input, shape index: {}]
  %s1 = inlined_call_operand.vmem [shape: bf16[2,8,10,128], index: 1, kind: input, shape index: {}]
  %s2 = inlined_call_operand.vmem [shape: bf16[2,8,10,128], index: 2, kind: input, shape index: {}]
  %s3 = inlined_call_operand.vmem [shape: bf16[9,128,128], index: 3, kind: input, shape index: {}]
  %s4 = inlined_call_operand.vmem [shape: f32[1,128], index: 4, kind: input, shape index: {}]
  %s5 = inlined_call_operand.vmem [shape: bf16[2,8,8,128], index: 5, kind: input, shape index: {}]
  %s6 = inlined_call_operand.vmem [shape: f32[2,8,8,128], index: 6, kind: output, shape index: {0}]
  %s7 = inlined_call_operand.vmem [shape: f32[2,8,8,128], index: 7, kind: output, shape index: {1}]
  %8 = xla_tuple %s6, %s7
  %s9 = sld [smem:[#allocation0]]
  $region72: #{downsample_forward.5} parent=0
    _
  %s11 = ssub.s32 1, %s9
  %s12 = scalar_select 0, %s11, %s9
  loop: start=0, step=1, limit=4
  $region2: #{downsample_forward.5} parent=0 // loop_pre_header
    _
  $region3: #{downsample_forward.5} parent=0 // loop_header
    %s14 = sphi 0, %s18
    %p15 = scmp.ge.s32.totalorder %s14, 4
    %s21 = sphi 0, %s40
    %s22 = sphi 0, %s36
    %s23 = sphi 0, %s32
    %s24 = sphi 0, %s21
    %s25 = sphi 0, %s22
    %s26 = sphi 0, %s23
    %s27 = sphi 0, %s24
    %s28 = sphi 0, %s25
    %s29 = sphi 0, %s26
    %s45 = sphi 0, %s47
    %s48 = sphi 0, %s45
    %s49 = sphi 0, %s48
    %s65 = sphi 0, %s49
    %s73 = sphi 0, %s75
    %s76 = sphi 0, %s73
    %s77 = sphi 0, %s76
    %s93 = sphi 0, %s77
    %s101 = sphi 0, %s103
    %s104 = sphi 0, %s101
    %s105 = sphi 0, %s104
    %s121 = sphi 0, %s105
    %s127 = sphi 0, %s129
    %s130 = sphi 0, %s127
    %s131 = sphi 0, %s130
    %s147 = sphi 0, %s131
    %s153 = sphi 0, %s155
    %s156 = sphi 0, %s153
    %s157 = sphi 0, %s156
    %s173 = sphi 0, %s157
    %s183 = sphi 0, %s185
    %s186 = sphi 0, %s183
    %s187 = sphi 0, %s186
    %s203 = sphi 0, %s187
    %s213 = sphi 0, %s215
    %s216 = sphi 0, %s213
    %s217 = sphi 0, %s216
    %s233 = sphi 0, %s217
    %s243 = sphi 0, %s245
    %s246 = sphi 0, %s243
    %s247 = sphi 0, %s246
    %s263 = sphi 0, %s247
  $region4: #{downsample_forward.5} parent=0 // loop_header_branch
    %17 = sbr.rel (%p15) target = $region8
  $region5: #{downsample_forward.5} parent=0 // loop_body
    %s19 = ssub.s32 %s14, 1
    %s20 = ssub.s32 %s14, 2
    %s30 = sadd.s32 1, %s23
    %p31 = scmp.ge.s32.totalorder %s30, 1
    %s32 = scalar_select %p31, 0, %s30
    %s33 = sadd.s32 1, %s22
    %s34 = scalar_select %p31, %s33, %s22
    %p35 = scmp.ge.s32.totalorder %s34, 1
    %s36 = scalar_select %p35, 0, %s34
    %s37 = sadd.s32 1, %s21
    %s38 = scalar_select %p35, %s37, %s21
    %p39 = scmp.ge.s32.totalorder %s38, 2
    %s40 = scalar_select %p39, 0, %s38
    %s41 = ssub.s32 %s21, %s40
    %s42 = ssub.s32 %s23, %s32
    %s43 = sor.u32 %s41, %s42
    %p44 = scmp.eq.s32.totalorder %s43, 0
    %s46 = sadd.s32 %s45, 1
    %s47 = scalar_select %p44, %s45, %s46
    %p50 = pneg %p44
    %p51 = scmp.eq.s32.totalorder %s14, 1
    %p52 = por %p50, %p51
    %p53 = scmp.ne.s32.totalorder %s45, %s48
    %p54 = scmp.eq.s32.totalorder %s14, 0
    %p55 = por %p53, %p54
    %p56 = scmp.ne.s32.totalorder %s45, %s48
    %p57 = scmp.eq.s32.totalorder %s19, 1
    %p58 = por %p56, %p57
    %p59 = scmp.ne.s32.totalorder %s48, %s49
    %p60 = scmp.eq.s32.totalorder %s19, 0
    %p61 = por %p59, %p60
    %p62 = scmp.ne.s32.totalorder %s48, %s49
    %p63 = scmp.eq.s32.totalorder %s20, 1
    %p64 = por %p62, %p63
    %p66 = scmp.ne.s32.totalorder %s49, %s65
    %p67 = scmp.eq.s32.totalorder %s20, 0
    %p68 = por %p66, %p67
    %s69 = ssub.s32 %s21, %s40
    %s70 = ssub.s32 %s23, %s32
    %s71 = sor.u32 %s69, %s70
    %p72 = scmp.eq.s32.totalorder %s71, 0
    %s74 = sadd.s32 %s73, 1
    %s75 = scalar_select %p72, %s73, %s74
    %p78 = pneg %p72
    %p79 = scmp.eq.s32.totalorder %s14, 1
    %p80 = por %p78, %p79
    %p81 = scmp.ne.s32.totalorder %s73, %s76
    %p82 = scmp.eq.s32.totalorder %s14, 0
    %p83 = por %p81, %p82
    %p84 = scmp.ne.s32.totalorder %s73, %s76
    %p85 = scmp.eq.s32.totalorder %s19, 1
    %p86 = por %p84, %p85
    %p87 = scmp.ne.s32.totalorder %s76, %s77
    %p88 = scmp.eq.s32.totalorder %s19, 0
    %p89 = por %p87, %p88
    %p90 = scmp.ne.s32.totalorder %s76, %s77
    %p91 = scmp.eq.s32.totalorder %s20, 1
    %p92 = por %p90, %p91
    %p94 = scmp.ne.s32.totalorder %s77, %s93
    %p95 = scmp.eq.s32.totalorder %s20, 0
    %p96 = por %p94, %p95
    %s97 = ssub.s32 %s21, %s40
    %s98 = ssub.s32 %s23, %s32
    %s99 = sor.u32 %s97, %s98
    %p100 = scmp.eq.s32.totalorder %s99, 0
    %s102 = sadd.s32 %s101, 1
    %s103 = scalar_select %p100, %s101, %s102
    %p106 = pneg %p100
    %p107 = scmp.eq.s32.totalorder %s14, 1
    %p108 = por %p106, %p107
    %p109 = scmp.ne.s32.totalorder %s101, %s104
    %p110 = scmp.eq.s32.totalorder %s14, 0
    %p111 = por %p109, %p110
    %p112 = scmp.ne.s32.totalorder %s101, %s104
    %p113 = scmp.eq.s32.totalorder %s19, 1
    %p114 = por %p112, %p113
    %p115 = scmp.ne.s32.totalorder %s104, %s105
    %p116 = scmp.eq.s32.totalorder %s19, 0
    %p117 = por %p115, %p116
    %p118 = scmp.ne.s32.totalorder %s104, %s105
    %p119 = scmp.eq.s32.totalorder %s20, 1
    %p120 = por %p118, %p119
    %p122 = scmp.ne.s32.totalorder %s105, %s121
    %p123 = scmp.eq.s32.totalorder %s20, 0
    %p124 = por %p122, %p123
    %s125 = ssub.s32 %s22, %s36
    %p126 = scmp.eq.s32.totalorder %s125, 0
    %s128 = sadd.s32 %s127, 1
    %s129 = scalar_select %p126, %s127, %s128
    %p132 = pneg %p126
    %p133 = scmp.eq.s32.totalorder %s14, 1
    %p134 = por %p132, %p133
    %p135 = scmp.ne.s32.totalorder %s127, %s130
    %p136 = scmp.eq.s32.totalorder %s14, 0
    %p137 = por %p135, %p136
    %p138 = scmp.ne.s32.totalorder %s127, %s130
    %p139 = scmp.eq.s32.totalorder %s19, 1
    %p140 = por %p138, %p139
    %p141 = scmp.ne.s32.totalorder %s130, %s131
    %p142 = scmp.eq.s32.totalorder %s19, 0
    %p143 = por %p141, %p142
    %p144 = scmp.ne.s32.totalorder %s130, %s131
    %p145 = scmp.eq.s32.totalorder %s20, 1
    %p146 = por %p144, %p145
    %p148 = scmp.ne.s32.totalorder %s131, %s147
    %p149 = scmp.eq.s32.totalorder %s20, 0
    %p150 = por %p148, %p149
    %s151 = ssub.s32 %s22, %s36
    %p152 = scmp.eq.s32.totalorder %s151, 0
    %s154 = sadd.s32 %s153, 1
    %s155 = scalar_select %p152, %s153, %s154
    %p158 = pneg %p152
    %p159 = scmp.eq.s32.totalorder %s14, 1
    %p160 = por %p158, %p159
    %p161 = scmp.ne.s32.totalorder %s153, %s156
    %p162 = scmp.eq.s32.totalorder %s14, 0
    %p163 = por %p161, %p162
    %p164 = scmp.ne.s32.totalorder %s153, %s156
    %p165 = scmp.eq.s32.totalorder %s19, 1
    %p166 = por %p164, %p165
    %p167 = scmp.ne.s32.totalorder %s156, %s157
    %p168 = scmp.eq.s32.totalorder %s19, 0
    %p169 = por %p167, %p168
    %p170 = scmp.ne.s32.totalorder %s156, %s157
    %p171 = scmp.eq.s32.totalorder %s20, 1
    %p172 = por %p170, %p171
    %p174 = scmp.ne.s32.totalorder %s157, %s173
    %p175 = scmp.eq.s32.totalorder %s20, 0
    %p176 = por %p174, %p175
    %s177 = ssub.s32 %s21, %s40
    %s178 = ssub.s32 %s23, %s32
    %s179 = sor.u32 %s177, %s178
    %s180 = ssub.s32 %s22, %s36
    %s181 = sor.u32 %s179, %s180
    %p182 = scmp.eq.s32.totalorder %s181, 0
    %s184 = sadd.s32 %s183, 1
    %s185 = scalar_select %p182, %s183, %s184
    %p188 = pneg %p182
    %p189 = scmp.eq.s32.totalorder %s14, 1
    %p190 = por %p188, %p189
    %p191 = scmp.ne.s32.totalorder %s183, %s186
    %p192 = scmp.eq.s32.totalorder %s14, 0
    %p193 = por %p191, %p192
    %p194 = scmp.ne.s32.totalorder %s183, %s186
    %p195 = scmp.eq.s32.totalorder %s19, 1
    %p196 = por %p194, %p195
    %p197 = scmp.ne.s32.totalorder %s186, %s187
    %p198 = scmp.eq.s32.totalorder %s19, 0
    %p199 = por %p197, %p198
    %p200 = scmp.ne.s32.totalorder %s186, %s187
    %p201 = scmp.eq.s32.totalorder %s20, 1
    %p202 = por %p200, %p201
    %p204 = scmp.ne.s32.totalorder %s187, %s203
    %p205 = scmp.eq.s32.totalorder %s20, 0
    %p206 = por %p204, %p205
    %s207 = ssub.s32 %s21, %s40
    %s208 = ssub.s32 %s23, %s32
    %s209 = sor.u32 %s207, %s208
    %s210 = ssub.s32 %s22, %s36
    %s211 = sor.u32 %s209, %s210
    %p212 = scmp.eq.s32.totalorder %s211, 0
    %s214 = sadd.s32 %s213, 1
    %s215 = scalar_select %p212, %s213, %s214
    %p218 = pneg %p212
    %p219 = scmp.eq.s32.totalorder %s14, 1
    %p220 = por %p218, %p219
    %p221 = scmp.ne.s32.totalorder %s213, %s216
    %p222 = scmp.eq.s32.totalorder %s14, 0
    %p223 = por %p221, %p222
    %p224 = scmp.ne.s32.totalorder %s213, %s216
    %p225 = scmp.eq.s32.totalorder %s19, 1
    %p226 = por %p224, %p225
    %p227 = scmp.ne.s32.totalorder %s216, %s217
    %p228 = scmp.eq.s32.totalorder %s19, 0
    %p229 = por %p227, %p228
    %p230 = scmp.ne.s32.totalorder %s216, %s217
    %p231 = scmp.eq.s32.totalorder %s20, 1
    %p232 = por %p230, %p231
    %p234 = scmp.ne.s32.totalorder %s217, %s233
    %p235 = scmp.eq.s32.totalorder %s20, 0
    %p236 = por %p234, %p235
    %s237 = ssub.s32 %s21, %s40
    %s238 = ssub.s32 %s23, %s32
    %s239 = sor.u32 %s237, %s238
    %s240 = ssub.s32 %s22, %s36
    %s241 = sor.u32 %s239, %s240
    %p242 = scmp.eq.s32.totalorder %s241, 0
    %s244 = sadd.s32 %s243, 1
    %s245 = scalar_select %p242, %s243, %s244
    %p248 = pneg %p242
    %p249 = scmp.eq.s32.totalorder %s14, 1
    %p250 = por %p248, %p249
    %p251 = scmp.ne.s32.totalorder %s243, %s246
    %p252 = scmp.eq.s32.totalorder %s14, 0
    %p253 = por %p251, %p252
    %p254 = scmp.ne.s32.totalorder %s243, %s246
    %p255 = scmp.eq.s32.totalorder %s19, 1
    %p256 = por %p254, %p255
    %p257 = scmp.ne.s32.totalorder %s246, %s247
    %p258 = scmp.eq.s32.totalorder %s19, 0
    %p259 = por %p257, %p258
    %p260 = scmp.ne.s32.totalorder %s246, %s247
    %p261 = scmp.eq.s32.totalorder %s20, 1
    %p262 = por %p260, %p261
    %p264 = scmp.ne.s32.totalorder %s247, %s263
    %p265 = scmp.eq.s32.totalorder %s20, 0
    %p266 = por %p264, %p265
    %p267 = scmp.le.s32.totalorder 1, %s14
    %p268 = scmp.lt.s32.totalorder %s14, 3
    %p269 = pnand %p267, %p268
    %p270 = pneg %p269
    // Predicated region
    $region9: #{downsample_forward.5} parent=5 // pred_check
      _
    $region10: #{downsample_forward.5} parent=5 // pred_check_branch
      %272 = sbr.rel (%p269) target = $region12
    $region11: #{downsample_forward.5} parent=5 // pred_region
      %s273 = ssub.s32 %s14, 1
      // Predicated region
      $region13: #{downsample_forward.5} parent=11 // pred_check
        %p274 = pneg %p143
      $region14: #{downsample_forward.5} parent=11 // pred_check_branch
        %276 = sbr.rel (%p274) target = $region16
      $region15: #{downsample_forward.5} parent=11 // pred_region
        %p277 = scmp.lt.s32.totalorder %s25, 0
        %s278 = scalar_select %p277, %s25, 0
        %s279 = smul.addr %s278, 4
        %s280 = scalar_lea.vmem %s3, %s279
      $region16: #{downsample_forward.5} parent=11 // pred_fallthru
        _
      // Predicated region
      $region17: #{downsample_forward.5} parent=11 // pred_check
        %p281 = pneg %p169
      $region18: #{downsample_forward.5} parent=11 // pred_check_branch
        %283 = sbr.rel (%p281) target = $region20
      $region19: #{downsample_forward.5} parent=11 // pred_region
        %p284 = scmp.lt.s32.totalorder %s25, 0
        %s285 = scalar_select %p284, %s25, 0
        %s286 = scalar_lea.vmem %s4, %s285
      $region20: #{downsample_forward.5} parent=11 // pred_fallthru
        _
    $region12: #{downsample_forward.5} parent=5 // pred_fallthru
      _
    %p287 = scmp.lt.s32.totalorder %s14, 2
    // Predicated region
    $region21: #{downsample_forward.5} parent=5 // pred_check
      %p288 = pneg %p287
    $region22: #{downsample_forward.5} parent=5 // pred_check_branch
      %290 = sbr.rel (%p288) target = $region24
    $region23: #{downsample_forward.5} parent=5 // pred_region
      // Predicated region
      $region25: #{downsample_forward.5} parent=23 // pred_check
        %p291 = pneg %p55
      $region26: #{downsample_forward.5} parent=23 // pred_check_branch
        %293 = sbr.rel (%p291) target = $region28
      $region27: #{downsample_forward.5} parent=23 // pred_region
        %s294 = smul.u32 8, %s23
        %p295 = scmp.lt.s32.totalorder %s21, 1
        %s296 = scalar_select %p295, %s21, 1
        %p297 = scmp.lt.s32.totalorder %s294, 7
        %s298 = scalar_select %p297, %s294, 7
        %s299 = smul.addr %s298, 2
        %s300 = smul.addr %s296, 16
        %s301 = sadd.s32 %s299, %s300
        %s302 = smul.addr %s301, 4
        %s303 = scalar_lea.vmem %s0, %s302
        %s304 = smul.u32 8, %s23
      $region28: #{downsample_forward.5} parent=23 // pred_fallthru
        _
      // Predicated region
      $region29: #{downsample_forward.5} parent=23 // pred_check
        %p305 = pneg %p83
      $region30: #{downsample_forward.5} parent=23 // pred_check_branch
        %307 = sbr.rel (%p305) target = $region32
      $region31: #{downsample_forward.5} parent=23 // pred_region
        %s308 = smul.u32 8, %s23
        %p309 = scmp.lt.s32.totalorder %s21, 1
        %s310 = scalar_select %p309, %s21, 1
        %p311 = scmp.lt.s32.totalorder %s308, 7
        %s312 = scalar_select %p311, %s308, 7
        %s313 = smul.addr %s312, 2
        %s314 = smul.addr %s310, 16
        %s315 = sadd.s32 %s313, %s314
        %s316 = smul.addr %s315, 4
        %s317 = scalar_lea.vmem %s1, %s316
        %s318 = smul.u32 8, %s23
      $region32: #{downsample_forward.5} parent=23 // pred_fallthru
        _
      // Predicated region
      $region33: #{downsample_forward.5} parent=23 // pred_check
        %p319 = pneg %p111
      $region34: #{downsample_forward.5} parent=23 // pred_check_branch
        %321 = sbr.rel (%p319) target = $region36
      $region35: #{downsample_forward.5} parent=23 // pred_region
        %s322 = smul.u32 8, %s23
        %p323 = scmp.lt.s32.totalorder %s21, 1
        %s324 = scalar_select %p323, %s21, 1
        %p325 = scmp.lt.s32.totalorder %s322, 7
        %s326 = scalar_select %p325, %s322, 7
        %s327 = smul.addr %s326, 2
        %s328 = smul.addr %s324, 16
        %s329 = sadd.s32 %s327, %s328
        %s330 = smul.addr %s329, 4
        %s331 = scalar_lea.vmem %s2, %s330
        %s332 = smul.u32 8, %s23
      $region36: #{downsample_forward.5} parent=23 // pred_fallthru
        _
      // Predicated region
      $region37: #{downsample_forward.5} parent=23 // pred_check
        %p333 = pneg %p193
      $region38: #{downsample_forward.5} parent=23 // pred_check_branch
        %335 = sbr.rel (%p333) target = $region40
      $region39: #{downsample_forward.5} parent=23 // pred_region
        %s336 = smul.u32 8, %s23
        %p337 = scmp.lt.s32.totalorder %s21, 1
        %s338 = scalar_select %p337, %s21, 1
        %p339 = scmp.lt.s32.totalorder %s336, 7
        %s340 = scalar_select %p339, %s336, 7
        %p341 = scmp.lt.s32.totalorder %s22, 0
        %s342 = scalar_select %p341, %s22, 0
        %s343 = sadd.s32 %s342, %s340
        %s344 = smul.addr %s338, 8
        %s345 = sadd.s32 %s343, %s344
        %s346 = smul.addr %s345, 4
        %s347 = scalar_lea.vmem %s5, %s346
        %s348 = smul.u32 8, %s23
      $region40: #{downsample_forward.5} parent=23 // pred_fallthru
        _
    $region24: #{downsample_forward.5} parent=5 // pred_fallthru
      _
    %p349 = scmp.le.s32.totalorder 1, %s14
    %p350 = scmp.lt.s32.totalorder %s14, 3
    %p351 = pnand %p349, %p350
    %p352 = pneg %p351
    // Predicated region
    $region41: #{downsample_forward.5} parent=5 // pred_check
      _
    $region42: #{downsample_forward.5} parent=5 // pred_check_branch
      %354 = sbr.rel (%p351) target = $region44
    $region43: #{downsample_forward.5} parent=5 // pred_region
      %s355 = ssub.s32 %s14, 1
      %s356 = smul.u32 8, %s26
      %p357 = scmp.lt.s32.totalorder %s24, 1
      %s358 = scalar_select %p357, %s24, 1
      %p359 = scmp.lt.s32.totalorder %s356, 7
      %s360 = scalar_select %p359, %s356, 7
      %s361 = smul.addr %s360, 2
      %s362 = smul.addr %s358, 16
      %s363 = sadd.s32 %s361, %s362
      %s364 = smul.addr %s363, 4
      %s365 = scalar_lea.vmem %s0, %s364
      %p366 = pneg %p61
      %p367 = pneg %p58
      %s368 = smul.u32 8, %s26
      %p369 = scmp.lt.s32.totalorder %s24, 1
      %s370 = scalar_select %p369, %s24, 1
      %p371 = scmp.lt.s32.totalorder %s368, 7
      %s372 = scalar_select %p371, %s368, 7
      %s373 = smul.addr %s372, 2
      %s374 = smul.addr %s370, 16
      %s375 = sadd.s32 %s373, %s374
      %s376 = smul.addr %s375, 4
      %s377 = scalar_lea.vmem %s1, %s376
      %p378 = pneg %p89
      %p379 = pneg %p86
      %s380 = smul.u32 8, %s26
      %p381 = scmp.lt.s32.totalorder %s24, 1
      %s382 = scalar_select %p381, %s24, 1
      %p383 = scmp.lt.s32.totalorder %s380, 7
      %s384 = scalar_select %p383, %s380, 7
      %s385 = smul.addr %s384, 2
      %s386 = smul.addr %s382, 16
      %s387 = sadd.s32 %s385, %s386
      %s388 = smul.addr %s387, 4
      %s389 = scalar_lea.vmem %s2, %s388
      %p390 = pneg %p117
      %p391 = pneg %p114
      %p392 = scmp.lt.s32.totalorder %s25, 0
      %s393 = scalar_select %p392, %s25, 0
      %s394 = smul.addr %s393, 4
      %s395 = scalar_lea.vmem %s3, %s394
      %p396 = pneg %p143
      %p397 = pneg %p140
      %p398 = scmp.lt.s32.totalorder %s25, 0
      %s399 = scalar_select %p398, %s25, 0
      %s400 = scalar_lea.vmem %s4, %s399
      %p401 = pneg %p169
      %p402 = pneg %p166
      %s403 = smul.u32 8, %s26
      %p404 = scmp.lt.s32.totalorder %s24, 1
      %s405 = scalar_select %p404, %s24, 1
      %p406 = scmp.lt.s32.totalorder %s403, 7
      %s407 = scalar_select %p406, %s403, 7
      %p408 = scmp.lt.s32.totalorder %s25, 0
      %s409 = scalar_select %p408, %s25, 0
      %s410 = sadd.s32 %s409, %s407
      %s411 = smul.addr %s405, 8
      %s412 = sadd.s32 %s410, %s411
      %s413 = smul.addr %s412, 4
      %s414 = scalar_lea.vmem %s5, %s413
      %p415 = pneg %p199
      %p416 = pneg %p196
      %p417 = pneg %p229
      %p418 = pneg %p226
      %s419 = smul.u32 8, %s26
      %p420 = scmp.lt.s32.totalorder %s24, 1
      %s421 = scalar_select %p420, %s24, 1
      %p422 = scmp.lt.s32.totalorder %s419, 7
      %s423 = scalar_select %p422, %s419, 7
      %p424 = scmp.lt.s32.totalorder %s25, 0
      %s425 = scalar_select %p424, %s25, 0
      %s426 = sadd.s32 %s425, %s423
      %s427 = smul.addr %s421, 8
      %s428 = sadd.s32 %s426, %s427
      %s429 = smul.addr %s428, 8
      %s430 = scalar_lea.vmem %s6, %s429
      %p431 = pneg %p259
      %p432 = pneg %p256
      %s433 = smul.u32 8, %s26
      %p434 = scmp.lt.s32.totalorder %s24, 1
      %s435 = scalar_select %p434, %s24, 1
      %p436 = scmp.lt.s32.totalorder %s433, 7
      %s437 = scalar_select %p436, %s433, 7
      %p438 = scmp.lt.s32.totalorder %s25, 0
      %s439 = scalar_select %p438, %s25, 0
      %s440 = sadd.s32 %s439, %s437
      %s441 = smul.addr %s435, 8
      %s442 = sadd.s32 %s440, %s441
      %s443 = smul.addr %s442, 8
      %s444 = scalar_lea.vmem %s7, %s443
      %s445 = smul.u32 8, %s26
      %p446 = scmp.lt.s32.totalorder %s24, 1
      %s447 = scalar_select %p446, %s24, 1
      %p448 = scmp.lt.s32.totalorder %s445, 7
      %s449 = scalar_select %p448, %s445, 7
      %s450 = smul.addr %s449, 2
      %s451 = smul.addr %s447, 16
      %s452 = sadd.s32 %s450, %s451
      %s453 = smul.addr %s452, 4
      %s454 = scalar_lea.vmem %s0, %s453
      %s455 = smul.u32 8, %s26
      %s456 = smul.u32 8, %s26
      %p457 = scmp.lt.s32.totalorder %s24, 1
      %s458 = scalar_select %p457, %s24, 1
      %p459 = scmp.lt.s32.totalorder %s456, 7
      %s460 = scalar_select %p459, %s456, 7
      %s461 = smul.addr %s460, 2
      %s462 = smul.addr %s458, 16
      %s463 = sadd.s32 %s461, %s462
      %s464 = smul.addr %s463, 4
      %s465 = scalar_lea.vmem %s1, %s464
      %s466 = smul.u32 8, %s26
      %s467 = smul.u32 8, %s26
      %p468 = scmp.lt.s32.totalorder %s24, 1
      %s469 = scalar_select %p468, %s24, 1
      %p470 = scmp.lt.s32.totalorder %s467, 7
      %s471 = scalar_select %p470, %s467, 7
      %s472 = smul.addr %s471, 2
      %s473 = smul.addr %s469, 16
      %s474 = sadd.s32 %s472, %s473
      %s475 = smul.addr %s474, 4
      %s476 = scalar_lea.vmem %s2, %s475
      %s477 = smul.u32 8, %s26
      %p478 = scmp.lt.s32.totalorder %s25, 0
      %s479 = scalar_select %p478, %s25, 0
      %s480 = smul.addr %s479, 4
      %s481 = scalar_lea.vmem %s3, %s480
      %p482 = scmp.lt.s32.totalorder %s25, 0
      %s483 = scalar_select %p482, %s25, 0
      %s484 = scalar_lea.vmem %s4, %s483
      %s485 = smul.u32 8, %s26
      %p486 = scmp.lt.s32.totalorder %s24, 1
      %s487 = scalar_select %p486, %s24, 1
      %p488 = scmp.lt.s32.totalorder %s485, 7
      %s489 = scalar_select %p488, %s485, 7
      %p490 = scmp.lt.s32.totalorder %s25, 0
      %s491 = scalar_select %p490, %s25, 0
      %s492 = sadd.s32 %s491, %s489
      %s493 = smul.addr %s487, 8
      %s494 = sadd.s32 %s492, %s493
      %s495 = smul.addr %s494, 4
      %s496 = scalar_lea.vmem %s5, %s495
      %s497 = smul.u32 8, %s26
      %s498 = smul.u32 8, %s26
      %p499 = scmp.lt.s32.totalorder %s24, 1
      %s500 = scalar_select %p499, %s24, 1
      %p501 = scmp.lt.s32.totalorder %s498, 7
      %s502 = scalar_select %p501, %s498, 7
      %p503 = scmp.lt.s32.totalorder %s25, 0
      %s504 = scalar_select %p503, %s25, 0
      %s505 = sadd.s32 %s504, %s502
      %s506 = smul.addr %s500, 8
      %s507 = sadd.s32 %s505, %s506
      %s508 = smul.addr %s507, 8
      %s509 = scalar_lea.vmem %s6, %s508
      %s510 = smul.u32 8, %s26
      %s511 = smul.u32 8, %s26
      %p512 = scmp.lt.s32.totalorder %s24, 1
      %s513 = scalar_select %p512, %s24, 1
      %p514 = scmp.lt.s32.totalorder %s511, 7
      %s515 = scalar_select %p514, %s511, 7
      %p516 = scmp.lt.s32.totalorder %s25, 0
      %s517 = scalar_select %p516, %s25, 0
      %s518 = sadd.s32 %s517, %s515
      %s519 = smul.addr %s513, 8
      %s520 = sadd.s32 %s518, %s519
      %s521 = smul.addr %s520, 8
      %s522 = scalar_lea.vmem %s7, %s521
      %s523 = smul.u32 8, %s26
      %v525 = vld [vmem:[%s484] sm:$0x1]
      %v527 = vlaneseq
      %v528 = vshrl.u32 %v527, 7
      %v529 = vsub.s32 0, %v528
      %v530 = vrot.slane %v525, %v529
      loop: start=0, step=1, limit=8
      $region45: #{downsample_forward.5} parent=43 // loop_pre_header
        _
      $region46: #{downsample_forward.5} parent=43 // loop_header
        %s533 = sphi 0, %s537
        %p534 = scmp.ge.s32.totalorder %s533, 8
      $region47: #{downsample_forward.5} parent=43 // loop_header_branch
        %536 = sbr.rel (%p534) target = $region51
      $region48: #{downsample_forward.5} parent=43 // loop_body
        %s538 = smul.u32 %s533, 2
        %s539 = smul.addr %s538, 4
        %s540 = scalar_lea.vmem %s454, %s539
        %v541 = vld [vmem:[%s540] sm:$0xf]
        %v542 = vld [vmem:[%s481] sm:$0xf]
        %v543 = vld [vmem:[%s481 + $0x4] sm:$0xf]
        %v544 = vld [vmem:[%s481 + $0x8] sm:$0xf]
        %v545 = vld [vmem:[%s481 + $0xc] sm:$0xf]
        %v546 = vld [vmem:[%s481 + $0x10] sm:$0xf]
        %v547 = vld [vmem:[%s481 + $0x14] sm:$0xf]
        %v548 = vld [vmem:[%s481 + $0x18] sm:$0xf]
        %v549 = vld [vmem:[%s481 + $0x1c] sm:$0xf]
        %v550 = vld [vmem:[%s481 + $0x20] sm:$0xf]
        %v551 = vld [vmem:[%s481 + $0x24] sm:$0xf]
        %v552 = vld [vmem:[%s481 + $0x28] sm:$0xf]
        %v553 = vld [vmem:[%s481 + $0x2c] sm:$0xf]
        %v554 = vld [vmem:[%s481 + $0x30] sm:$0xf]
        %v555 = vld [vmem:[%s481 + $0x34] sm:$0xf]
        %v556 = vld [vmem:[%s481 + $0x38] sm:$0xf]
        %v557 = vld [vmem:[%s481 + $0x3c] sm:$0xf]
        %v574 = vunpack.c.l.b16 %v542
        %v575 = vunpack.c.l.b16 %v543
        %v576 = vunpack.c.l.b16 %v544
        %v577 = vunpack.c.l.b16 %v545
        %v578 = vunpack.c.l.b16 %v546
        %v579 = vunpack.c.l.b16 %v547
        %v580 = vunpack.c.l.b16 %v548
        %v581 = vunpack.c.l.b16 %v549
        %v582 = vunpack.c.l.b16 %v550
        %v583 = vunpack.c.l.b16 %v551
        %v584 = vunpack.c.l.b16 %v552
        %v585 = vunpack.c.l.b16 %v553
        %v586 = vunpack.c.l.b16 %v554
        %v587 = vunpack.c.l.b16 %v555
        %v588 = vunpack.c.l.b16 %v556
        %v589 = vunpack.c.l.b16 %v557
        %v590 = vpack.c.b16 %v575, %v574
        %v591 = vpack.c.b16 %v577, %v576
        %v592 = vpack.c.b16 %v579, %v578
        %v593 = vpack.c.b16 %v581, %v580
        %v594 = vpack.c.b16 %v583, %v582
        %v595 = vpack.c.b16 %v585, %v584
        %v596 = vpack.c.b16 %v587, %v586
        %v597 = vpack.c.b16 %v589, %v588
        %606 = vmatprep.subr.bf16.mxu0 0
        %607 = vmatpush1.bf16.msra.mxu0 %v597
        %608 = vmatprep.subr.bf16.mxu0 0
        %609 = vmatpush1.bf16.msra.mxu0 %v596
        %610 = vmatprep.subr.bf16.mxu0 0
        %611 = vmatpush1.bf16.msra.mxu0 %v595
        %612 = vmatprep.subr.bf16.mxu0 0
        %613 = vmatpush1.bf16.msra.mxu0 %v594
        %614 = vmatprep.subr.bf16.mxu0 0
        %615 = vmatpush1.bf16.msra.mxu0 %v593
        %616 = vmatprep.subr.bf16.mxu0 0
        %617 = vmatpush1.bf16.msra.mxu0 %v592
        %618 = vmatprep.subr.bf16.mxu0 0
        %619 = vmatpush1.bf16.msra.mxu0 %v591
        %620 = vmatprep.subr.bf16.mxu0 0
        %621 = vmatpush1.bf16.msra.mxu0 %v590
        %622 = vmatprep.subr.bf16.mxu0 0
        %623 = vmatpush2.bf16.msra.mxu0 0
        %624 = vmatprep.subr.bf16.mxu0 0
        %625 = vmatpush2.bf16.msra.mxu0 0
        %626 = vmatprep.subr.bf16.mxu0 0
        %627 = vmatpush2.bf16.msra.mxu0 0
        %628 = vmatprep.subr.bf16.mxu0 0
        %629 = vmatpush2.bf16.msra.mxu0 0
        %630 = vmatprep.subr.bf16.mxu0 0
        %631 = vmatpush2.bf16.msra.mxu0 0
        %632 = vmatprep.subr.bf16.mxu0 0
        %633 = vmatpush2.bf16.msra.mxu0 0
        %634 = vmatprep.subr.bf16.mxu0 0
        %635 = vmatpush2.bf16.msra.mxu0 0
        %636 = vmatprep.subr.bf16.mxu0 0
        %637 = vmatpush2.bf16.msra.mxu0 0
        %638 = vmatprep.mubr.bf16.mxu0 0
        %639 = vmatmul.mubr.bf16.gmra.mxu0 %v541
        %v640 = vpop.f32.mrf.mxu0
        %v641 = vadd.f32 0.0, %v640
        %v642 = vpop.f32.mrf.mxu0
        %v643 = vpop.f32.mrf.mxu0
        %v644 = vpop.f32.mrf.mxu0
        %645 = vdwg.mxu0
        %v646 = vadd.f32 %v530, %v641
        %v647 = vld [vmem:[%s540] sm:$0xf]
        %v648 = vld [vmem:[%s540 + $0x4] sm:$0x1]
        %s649 = scalar_lea.vmem %s481, 64
        %v650 = vld [vmem:[%s649] sm:$0xf]
        %v651 = vld [vmem:[%s649 + $0x4] sm:$0xf]
        %v652 = vld [vmem:[%s649 + $0x8] sm:$0xf]
        %v653 = vld [vmem:[%s649 + $0xc] sm:$0xf]
        %v654 = vld [vmem:[%s649 + $0x10] sm:$0xf]
        %v655 = vld [vmem:[%s649 + $0x14] sm:$0xf]
        %v656 = vld [vmem:[%s649 + $0x18] sm:$0xf]
        %v657 = vld [vmem:[%s649 + $0x1c] sm:$0xf]
        %v658 = vld [vmem:[%s649 + $0x20] sm:$0xf]
        %v659 = vld [vmem:[%s649 + $0x24] sm:$0xf]
        %v660 = vld [vmem:[%s649 + $0x28] sm:$0xf]
        %v661 = vld [vmem:[%s649 + $0x2c] sm:$0xf]
        %v662 = vld [vmem:[%s649 + $0x30] sm:$0xf]
        %v663 = vld [vmem:[%s649 + $0x34] sm:$0xf]
        %v664 = vld [vmem:[%s649 + $0x38] sm:$0xf]
        %v665 = vld [vmem:[%s649 + $0x3c] sm:$0xf]
        %v668 = vunpack.c.l.b16 %v647
        %v669 = vunpack.c.l.b16 %v648
        %v670 = vpack.c.b16 %v669, %v668
        %v672 = vshrl.u32 %v670, 16
        %v674 = vshll.u32 %v670, 16
        %v676 = vrot.slane %v674, 1
        %v677 = vor.u32 %v672, %v676
        %v695 = vunpack.c.l.b16 %v650
        %v696 = vunpack.c.l.b16 %v651
        %v697 = vunpack.c.l.b16 %v652
        %v698 = vunpack.c.l.b16 %v653
        %v699 = vunpack.c.l.b16 %v654
        %v700 = vunpack.c.l.b16 %v655
        %v701 = vunpack.c.l.b16 %v656
        %v702 = vunpack.c.l.b16 %v657
        %v703 = vunpack.c.l.b16 %v658
        %v704 = vunpack.c.l.b16 %v659
        %v705 = vunpack.c.l.b16 %v660
        %v706 = vunpack.c.l.b16 %v661
        %v707 = vunpack.c.l.b16 %v662
        %v708 = vunpack.c.l.b16 %v663
        %v709 = vunpack.c.l.b16 %v664
        %v710 = vunpack.c.l.b16 %v665
        %v711 = vpack.c.b16 %v696, %v695
        %v712 = vpack.c.b16 %v698, %v697
        %v713 = vpack.c.b16 %v700, %v699
        %v714 = vpack.c.b16 %v702, %v701
        %v715 = vpack.c.b16 %v704, %v703
        %v716 = vpack.c.b16 %v706, %v705
        %v717 = vpack.c.b16 %v708, %v707
        %v718 = vpack.c.b16 %v710, %v709
        %727 = vmatprep.subr.bf16.mxu0 0
        %728 = vmatpush1.bf16.msra.mxu0 %v718
        %729 = vmatprep.subr.bf16.mxu0 0
        %730 = vmatpush1.bf16.msra.mxu0 %v717
        %731 = vmatprep.subr.bf16.mxu0 0
        %732 = vmatpush1.bf16.msra.mxu0 %v716
        %733 = vmatprep.subr.bf16.mxu0 0
        %734 = vmatpush1.bf16.msra.mxu0 %v715
        %735 = vmatprep.subr.bf16.mxu0 0
        %736 = vmatpush1.bf16.msra.mxu0 %v714
        %737 = vmatprep.subr.bf16.mxu0 0
        %738 = vmatpush1.bf16.msra.mxu0 %v713
        %739 = vmatprep.subr.bf16.mxu0 0
        %740 = vmatpush1.bf16.msra.mxu0 %v712
        %741 = vmatprep.subr.bf16.mxu0 0
        %742 = vmatpush1.bf16.msra.mxu0 %v711
        %743 = vmatprep.subr.bf16.mxu0 0
        %744 = vmatpush2.bf16.msra.mxu0 0
        %745 = vmatprep.subr.bf16.mxu0 0
        %746 = vmatpush2.bf16.msra.mxu0 0
        %747 = vmatprep.subr.bf16.mxu0 0
        %748 = vmatpush2.bf16.msra.mxu0 0
        %749 = vmatprep.subr.bf16.mxu0 0
        %750 = vmatpush2.bf16.msra.mxu0 0
        %751 = vmatprep.subr.bf16.mxu0 0
        %752 = vmatpush2.bf16.msra.mxu0 0
        %753 = vmatprep.subr.bf16.mxu0 0
        %754 = vmatpush2.bf16.msra.mxu0 0
        %755 = vmatprep.subr.bf16.mxu0 0
        %756 = vmatpush2.bf16.msra.mxu0 0
        %757 = vmatprep.subr.bf16.mxu0 0
        %758 = vmatpush2.bf16.msra.mxu0 0
        %759 = vmatprep.mubr.bf16.mxu0 0
        %760 = vmatmul.mubr.bf16.gmra.mxu0 %v677
        %v761 = vpop.f32.mrf.mxu0
        %v762 = vadd.f32 0.0, %v761
        %v763 = vpop.f32.mrf.mxu0
        %v764 = vpop.f32.mrf.mxu0
        %v765 = vpop.f32.mrf.mxu0
        %766 = vdwg.mxu0
        %v767 = vadd.f32 %v646, %v762
        %v768 = vld [vmem:[%s540] sm:$0xe]
        %s769 = scalar_lea.vmem %s481, 128
        %v770 = vld [vmem:[%s769] sm:$0xf]
        %v771 = vld [vmem:[%s769 + $0x4] sm:$0xf]
        %v772 = vld [vmem:[%s769 + $0x8] sm:$0xf]
        %v773 = vld [vmem:[%s769 + $0xc] sm:$0xf]
        %v774 = vld [vmem:[%s769 + $0x10] sm:$0xf]
        %v775 = vld [vmem:[%s769 + $0x14] sm:$0xf]
        %v776 = vld [vmem:[%s769 + $0x18] sm:$0xf]
        %v777 = vld [vmem:[%s769 + $0x1c] sm:$0xf]
        %v778 = vld [vmem:[%s769 + $0x20] sm:$0xf]
        %v779 = vld [vmem:[%s769 + $0x24] sm:$0xf]
        %v780 = vld [vmem:[%s769 + $0x28] sm:$0xf]
        %v781 = vld [vmem:[%s769 + $0x2c] sm:$0xf]
        %v782 = vld [vmem:[%s769 + $0x30] sm:$0xf]
        %v783 = vld [vmem:[%s769 + $0x34] sm:$0xf]
        %v784 = vld [vmem:[%s769 + $0x38] sm:$0xf]
        %v785 = vld [vmem:[%s769 + $0x3c] sm:$0xf]
        %v787 = vunpack.c.l.b16 %v768
        %v788 = vpack.c.b16 %v669, %v787
        %v789 = vrot.slane %v788, 1
        %v807 = vunpack.c.l.b16 %v770
        %v808 = vunpack.c.l.b16 %v771
        %v809 = vunpack.c.l.b16 %v772
        %v810 = vunpack.c.l.b16 %v773
        %v811 = vunpack.c.l.b16 %v774
        %v812 = vunpack.c.l.b16 %v775
        %v813 = vunpack.c.l.b16 %v776
        %v814 = vunpack.c.l.b16 %v777
        %v815 = vunpack.c.l.b16 %v778
        %v816 = vunpack.c.l.b16 %v779
        %v817 = vunpack.c.l.b16 %v780
        %v818 = vunpack.c.l.b16 %v781
        %v819 = vunpack.c.l.b16 %v782
        %v820 = vunpack.c.l.b16 %v783
        %v821 = vunpack.c.l.b16 %v784
        %v822 = vunpack.c.l.b16 %v785
        %v823 = vpack.c.b16 %v808, %v807
        %v824 = vpack.c.b16 %v810, %v809
        %v825 = vpack.c.b16 %v812, %v811
        %v826 = vpack.c.b16 %v814, %v813
        %v827 = vpack.c.b16 %v816, %v815
        %v828 = vpack.c.b16 %v818, %v817
        %v829 = vpack.c.b16 %v820, %v819
        %v830 = vpack.c.b16 %v822, %v821
        %839 = vmatprep.subr.bf16.mxu0 0
        %840 = vmatpush1.bf16.msra.mxu0 %v830
        %841 = vmatprep.subr.bf16.mxu0 0
        %842 = vmatpush1.bf16.msra.mxu0 %v829
        %843 = vmatprep.subr.bf16.mxu0 0
        %844 = vmatpush1.bf16.msra.mxu0 %v828
        %845 = vmatprep.subr.bf16.mxu0 0
        %846 = vmatpush1.bf16.msra.mxu0 %v827
        %847 = vmatprep.subr.bf16.mxu0 0
        %848 = vmatpush1.bf16.msra.mxu0 %v826
        %849 = vmatprep.subr.bf16.mxu0 0
        %850 = vmatpush1.bf16.msra.mxu0 %v825
        %851 = vmatprep.subr.bf16.mxu0 0
        %852 = vmatpush1.bf16.msra.mxu0 %v824
        %853 = vmatprep.subr.bf16.mxu0 0
        %854 = vmatpush1.bf16.msra.mxu0 %v823
        %855 = vmatprep.subr.bf16.mxu0 0
        %856 = vmatpush2.bf16.msra.mxu0 0
        %857 = vmatprep.subr.bf16.mxu0 0
        %858 = vmatpush2.bf16.msra.mxu0 0
        %859 = vmatprep.subr.bf16.mxu0 0
        %860 = vmatpush2.bf16.msra.mxu0 0
        %861 = vmatprep.subr.bf16.mxu0 0
        %862 = vmatpush2.bf16.msra.mxu0 0
        %863 = vmatprep.subr.bf16.mxu0 0
        %864 = vmatpush2.bf16.msra.mxu0 0
        %865 = vmatprep.subr.bf16.mxu0 0
        %866 = vmatpush2.bf16.msra.mxu0 0
        %867 = vmatprep.subr.bf16.mxu0 0
        %868 = vmatpush2.bf16.msra.mxu0 0
        %869 = vmatprep.subr.bf16.mxu0 0
        %870 = vmatpush2.bf16.msra.mxu0 0
        %871 = vmatprep.mubr.bf16.mxu0 0
        %872 = vmatmul.mubr.bf16.gmra.mxu0 %v789
        %v873 = vpop.f32.mrf.mxu0
        %v874 = vadd.f32 0.0, %v873
        %v875 = vpop.f32.mrf.mxu0
        %v876 = vpop.f32.mrf.mxu0
        %v877 = vpop.f32.mrf.mxu0
        %878 = vdwg.mxu0
        %v879 = vadd.f32 %v767, %v874
        %s880 = smul.addr %s538, 4
        %s881 = scalar_lea.vmem %s465, %s880
        %v882 = vld [vmem:[%s881] sm:$0xf]
        %s883 = scalar_lea.vmem %s481, 192
        %v884 = vld [vmem:[%s883] sm:$0xf]
        %v885 = vld [vmem:[%s883 + $0x4] sm:$0xf]
        %v886 = vld [vmem:[%s883 + $0x8] sm:$0xf]
        %v887 = vld [vmem:[%s883 + $0xc] sm:$0xf]
        %v888 = vld [vmem:[%s883 + $0x10] sm:$0xf]
        %v889 = vld [vmem:[%s883 + $0x14] sm:$0xf]
        %v890 = vld [vmem:[%s883 + $0x18] sm:$0xf]
        %v891 = vld [vmem:[%s883 + $0x1c] sm:$0xf]
        %v892 = vld [vmem:[%s883 + $0x20] sm:$0xf]
        %v893 = vld [vmem:[%s883 + $0x24] sm:$0xf]
        %v894 = vld [vmem:[%s883 + $0x28] sm:$0xf]
        %v895 = vld [vmem:[%s883 + $0x2c] sm:$0xf]
        %v896 = vld [vmem:[%s883 + $0x30] sm:$0xf]
        %v897 = vld [vmem:[%s883 + $0x34] sm:$0xf]
        %v898 = vld [vmem:[%s883 + $0x38] sm:$0xf]
        %v899 = vld [vmem:[%s883 + $0x3c] sm:$0xf]
        %v916 = vunpack.c.l.b16 %v884
        %v917 = vunpack.c.l.b16 %v885
        %v918 = vunpack.c.l.b16 %v886
        %v919 = vunpack.c.l.b16 %v887
        %v920 = vunpack.c.l.b16 %v888
        %v921 = vunpack.c.l.b16 %v889
        %v922 = vunpack.c.l.b16 %v890
        %v923 = vunpack.c.l.b16 %v891
        %v924 = vunpack.c.l.b16 %v892
        %v925 = vunpack.c.l.b16 %v893
        %v926 = vunpack.c.l.b16 %v894
        %v927 = vunpack.c.l.b16 %v895
        %v928 = vunpack.c.l.b16 %v896
        %v929 = vunpack.c.l.b16 %v897
        %v930 = vunpack.c.l.b16 %v898
        %v931 = vunpack.c.l.b16 %v899
        %v932 = vpack.c.b16 %v917, %v916
        %v933 = vpack.c.b16 %v919, %v918
        %v934 = vpack.c.b16 %v921, %v920
        %v935 = vpack.c.b16 %v923, %v922
        %v936 = vpack.c.b16 %v925, %v924
        %v937 = vpack.c.b16 %v927, %v926
        %v938 = vpack.c.b16 %v929, %v928
        %v939 = vpack.c.b16 %v931, %v930
        %948 = vmatprep.subr.bf16.mxu0 0
        %949 = vmatpush1.bf16.msra.mxu0 %v939
        %950 = vmatprep.subr.bf16.mxu0 0
        %951 = vmatpush1.bf16.msra.mxu0 %v938
        %952 = vmatprep.subr.bf16.mxu0 0
        %953 = vmatpush1.bf16.msra.mxu0 %v937
        %954 = vmatprep.subr.bf16.mxu0 0
        %955 = vmatpush1.bf16.msra.mxu0 %v936
        %956 = vmatprep.subr.bf16.mxu0 0
        %957 = vmatpush1.bf16.msra.mxu0 %v935
        %958 = vmatprep.subr.bf16.mxu0 0
        %959 = vmatpush1.bf16.msra.mxu0 %v934
        %960 = vmatprep.subr.bf16.mxu0 0
        %961 = vmatpush1.bf16.msra.mxu0 %v933
        %962 = vmatprep.subr.bf16.mxu0 0
        %963 = vmatpush1.bf16.msra.mxu0 %v932
        %964 = vmatprep.subr.bf16.mxu0 0
        %965 = vmatpush2.bf16.msra.mxu0 0
        %966 = vmatprep.subr.bf16.mxu0 0
        %967 = vmatpush2.bf16.msra.mxu0 0
        %968 = vmatprep.subr.bf16.mxu0 0
        %969 = vmatpush2.bf16.msra.mxu0 0
        %970 = vmatprep.subr.bf16.mxu0 0
        %971 = vmatpush2.bf16.msra.mxu0 0
        %972 = vmatprep.subr.bf16.mxu0 0
        %973 = vmatpush2.bf16.msra.mxu0 0
        %974 = vmatprep.subr.bf16.mxu0 0
        %975 = vmatpush2.bf16.msra.mxu0 0
        %976 = vmatprep.subr.bf16.mxu0 0
        %977 = vmatpush2.bf16.msra.mxu0 0
        %978 = vmatprep.subr.bf16.mxu0 0
        %979 = vmatpush2.bf16.msra.mxu0 0
        %980 = vmatprep.mubr.bf16.mxu0 0
        %981 = vmatmul.mubr.bf16.gmra.mxu0 %v882
        %v982 = vpop.f32.mrf.mxu0
        %v983 = vadd.f32 0.0, %v982
        %v984 = vpop.f32.mrf.mxu0
        %v985 = vpop.f32.mrf.mxu0
        %v986 = vpop.f32.mrf.mxu0
        %987 = vdwg.mxu0
        %v988 = vadd.f32 %v879, %v983
        %v989 = vld [vmem:[%s881] sm:$0xf]
        %v990 = vld [vmem:[%s881 + $0x4] sm:$0x1]
        %s991 = scalar_lea.vmem %s481, 256
        %v992 = vld [vmem:[%s991] sm:$0xf]
        %v993 = vld [vmem:[%s991 + $0x4] sm:$0xf]
        %v994 = vld [vmem:[%s991 + $0x8] sm:$0xf]
        %v995 = vld [vmem:[%s991 + $0xc] sm:$0xf]
        %v996 = vld [vmem:[%s991 + $0x10] sm:$0xf]
        %v997 = vld [vmem:[%s991 + $0x14] sm:$0xf]
        %v998 = vld [vmem:[%s991 + $0x18] sm:$0xf]
        %v999 = vld [vmem:[%s991 + $0x1c] sm:$0xf]
        %v1000 = vld [vmem:[%s991 + $0x20] sm:$0xf]
        %v1001 = vld [vmem:[%s991 + $0x24] sm:$0xf]
        %v1002 = vld [vmem:[%s991 + $0x28] sm:$0xf]
        %v1003 = vld [vmem:[%s991 + $0x2c] sm:$0xf]
        %v1004 = vld [vmem:[%s991 + $0x30] sm:$0xf]
        %v1005 = vld [vmem:[%s991 + $0x34] sm:$0xf]
        %v1006 = vld [vmem:[%s991 + $0x38] sm:$0xf]
        %v1007 = vld [vmem:[%s991 + $0x3c] sm:$0xf]
        %v1010 = vunpack.c.l.b16 %v989
        %v1011 = vunpack.c.l.b16 %v990
        %v1012 = vpack.c.b16 %v1011, %v1010
        %v1014 = vshrl.u32 %v1012, 16
        %v1016 = vshll.u32 %v1012, 16
        %v1018 = vrot.slane %v1016, 1
        %v1019 = vor.u32 %v1014, %v1018
        %v1037 = vunpack.c.l.b16 %v992
        %v1038 = vunpack.c.l.b16 %v993
        %v1039 = vunpack.c.l.b16 %v994
        %v1040 = vunpack.c.l.b16 %v995
        %v1041 = vunpack.c.l.b16 %v996
        %v1042 = vunpack.c.l.b16 %v997
        %v1043 = vunpack.c.l.b16 %v998
        %v1044 = vunpack.c.l.b16 %v999
        %v1045 = vunpack.c.l.b16 %v1000
        %v1046 = vunpack.c.l.b16 %v1001
        %v1047 = vunpack.c.l.b16 %v1002
        %v1048 = vunpack.c.l.b16 %v1003
        %v1049 = vunpack.c.l.b16 %v1004
        %v1050 = vunpack.c.l.b16 %v1005
        %v1051 = vunpack.c.l.b16 %v1006
        %v1052 = vunpack.c.l.b16 %v1007
        %v1053 = vpack.c.b16 %v1038, %v1037
        %v1054 = vpack.c.b16 %v1040, %v1039
        %v1055 = vpack.c.b16 %v1042, %v1041
        %v1056 = vpack.c.b16 %v1044, %v1043
        %v1057 = vpack.c.b16 %v1046, %v1045
        %v1058 = vpack.c.b16 %v1048, %v1047
        %v1059 = vpack.c.b16 %v1050, %v1049
        %v1060 = vpack.c.b16 %v1052, %v1051
        %1069 = vmatprep.subr.bf16.mxu0 0
        %1070 = vmatpush1.bf16.msra.mxu0 %v1060
        %1071 = vmatprep.subr.bf16.mxu0 0
        %1072 = vmatpush1.bf16.msra.mxu0 %v1059
        %1073 = vmatprep.subr.bf16.mxu0 0
        %1074 = vmatpush1.bf16.msra.mxu0 %v1058
        %1075 = vmatprep.subr.bf16.mxu0 0
        %1076 = vmatpush1.bf16.msra.mxu0 %v1057
        %1077 = vmatprep.subr.bf16.mxu0 0
        %1078 = vmatpush1.bf16.msra.mxu0 %v1056
        %1079 = vmatprep.subr.bf16.mxu0 0
        %1080 = vmatpush1.bf16.msra.mxu0 %v1055
        %1081 = vmatprep.subr.bf16.mxu0 0
        %1082 = vmatpush1.bf16.msra.mxu0 %v1054
        %1083 = vmatprep.subr.bf16.mxu0 0
        %1084 = vmatpush1.bf16.msra.mxu0 %v1053
        %1085 = vmatprep.subr.bf16.mxu0 0
        %1086 = vmatpush2.bf16.msra.mxu0 0
        %1087 = vmatprep.subr.bf16.mxu0 0
        %1088 = vmatpush2.bf16.msra.mxu0 0
        %1089 = vmatprep.subr.bf16.mxu0 0
        %1090 = vmatpush2.bf16.msra.mxu0 0
        %1091 = vmatprep.subr.bf16.mxu0 0
        %1092 = vmatpush2.bf16.msra.mxu0 0
        %1093 = vmatprep.subr.bf16.mxu0 0
        %1094 = vmatpush2.bf16.msra.mxu0 0
        %1095 = vmatprep.subr.bf16.mxu0 0
        %1096 = vmatpush2.bf16.msra.mxu0 0
        %1097 = vmatprep.subr.bf16.mxu0 0
        %1098 = vmatpush2.bf16.msra.mxu0 0
        %1099 = vmatprep.subr.bf16.mxu0 0
        %1100 = vmatpush2.bf16.msra.mxu0 0
        %1101 = vmatprep.mubr.bf16.mxu0 0
        %1102 = vmatmul.mubr.bf16.gmra.mxu0 %v1019
        %v1103 = vpop.f32.mrf.mxu0
        %v1104 = vadd.f32 0.0, %v1103
        %v1105 = vpop.f32.mrf.mxu0
        %v1106 = vpop.f32.mrf.mxu0
        %v1107 = vpop.f32.mrf.mxu0
        %1108 = vdwg.mxu0
        %v1109 = vadd.f32 %v988, %v1104
        %v1110 = vld [vmem:[%s881] sm:$0xe]
        %s1111 = scalar_lea.vmem %s481, 320
        %v1112 = vld [vmem:[%s1111] sm:$0xf]
        %v1113 = vld [vmem:[%s1111 + $0x4] sm:$0xf]
        %v1114 = vld [vmem:[%s1111 + $0x8] sm:$0xf]
        %v1115 = vld [vmem:[%s1111 + $0xc] sm:$0xf]
        %v1116 = vld [vmem:[%s1111 + $0x10] sm:$0xf]
        %v1117 = vld [vmem:[%s1111 + $0x14] sm:$0xf]
        %v1118 = vld [vmem:[%s1111 + $0x18] sm:$0xf]
        %v1119 = vld [vmem:[%s1111 + $0x1c] sm:$0xf]
        %v1120 = vld [vmem:[%s1111 + $0x20] sm:$0xf]
        %v1121 = vld [vmem:[%s1111 + $0x24] sm:$0xf]
        %v1122 = vld [vmem:[%s1111 + $0x28] sm:$0xf]
        %v1123 = vld [vmem:[%s1111 + $0x2c] sm:$0xf]
        %v1124 = vld [vmem:[%s1111 + $0x30] sm:$0xf]
        %v1125 = vld [vmem:[%s1111 + $0x34] sm:$0xf]
        %v1126 = vld [vmem:[%s1111 + $0x38] sm:$0xf]
        %v1127 = vld [vmem:[%s1111 + $0x3c] sm:$0xf]
        %v1129 = vunpack.c.l.b16 %v1110
        %v1130 = vpack.c.b16 %v1011, %v1129
        %v1131 = vrot.slane %v1130, 1
        %v1149 = vunpack.c.l.b16 %v1112
        %v1150 = vunpack.c.l.b16 %v1113
        %v1151 = vunpack.c.l.b16 %v1114
        %v1152 = vunpack.c.l.b16 %v1115
        %v1153 = vunpack.c.l.b16 %v1116
        %v1154 = vunpack.c.l.b16 %v1117
        %v1155 = vunpack.c.l.b16 %v1118
        %v1156 = vunpack.c.l.b16 %v1119
        %v1157 = vunpack.c.l.b16 %v1120
        %v1158 = vunpack.c.l.b16 %v1121
        %v1159 = vunpack.c.l.b16 %v1122
        %v1160 = vunpack.c.l.b16 %v1123
        %v1161 = vunpack.c.l.b16 %v1124
        %v1162 = vunpack.c.l.b16 %v1125
        %v1163 = vunpack.c.l.b16 %v1126
        %v1164 = vunpack.c.l.b16 %v1127
        %v1165 = vpack.c.b16 %v1150, %v1149
        %v1166 = vpack.c.b16 %v1152, %v1151
        %v1167 = vpack.c.b16 %v1154, %v1153
        %v1168 = vpack.c.b16 %v1156, %v1155
        %v1169 = vpack.c.b16 %v1158, %v1157
        %v1170 = vpack.c.b16 %v1160, %v1159
        %v1171 = vpack.c.b16 %v1162, %v1161
        %v1172 = vpack.c.b16 %v1164, %v1163
        %1181 = vmatprep.subr.bf16.mxu0 0
        %1182 = vmatpush1.bf16.msra.mxu0 %v1172
        %1183 = vmatprep.subr.bf16.mxu0 0
        %1184 = vmatpush1.bf16.msra.mxu0 %v1171
        %1185 = vmatprep.subr.bf16.mxu0 0
        %1186 = vmatpush1.bf16.msra.mxu0 %v1170
        %1187 = vmatprep.subr.bf16.mxu0 0
        %1188 = vmatpush1.bf16.msra.mxu0 %v1169
        %1189 = vmatprep.subr.bf16.mxu0 0
        %1190 = vmatpush1.bf16.msra.mxu0 %v1168
        %1191 = vmatprep.subr.bf16.mxu0 0
        %1192 = vmatpush1.bf16.msra.mxu0 %v1167
        %1193 = vmatprep.subr.bf16.mxu0 0
        %1194 = vmatpush1.bf16.msra.mxu0 %v1166
        %1195 = vmatprep.subr.bf16.mxu0 0
        %1196 = vmatpush1.bf16.msra.mxu0 %v1165
        %1197 = vmatprep.subr.bf16.mxu0 0
        %1198 = vmatpush2.bf16.msra.mxu0 0
        %1199 = vmatprep.subr.bf16.mxu0 0
        %1200 = vmatpush2.bf16.msra.mxu0 0
        %1201 = vmatprep.subr.bf16.mxu0 0
        %1202 = vmatpush2.bf16.msra.mxu0 0
        %1203 = vmatprep.subr.bf16.mxu0 0
        %1204 = vmatpush2.bf16.msra.mxu0 0
        %1205 = vmatprep.subr.bf16.mxu0 0
        %1206 = vmatpush2.bf16.msra.mxu0 0
        %1207 = vmatprep.subr.bf16.mxu0 0
        %1208 = vmatpush2.bf16.msra.mxu0 0
        %1209 = vmatprep.subr.bf16.mxu0 0
        %1210 = vmatpush2.bf16.msra.mxu0 0
        %1211 = vmatprep.subr.bf16.mxu0 0
        %1212 = vmatpush2.bf16.msra.mxu0 0
        %1213 = vmatprep.mubr.bf16.mxu0 0
        %1214 = vmatmul.mubr.bf16.gmra.mxu0 %v1131
        %v1215 = vpop.f32.mrf.mxu0
        %v1216 = vadd.f32 0.0, %v1215
        %v1217 = vpop.f32.mrf.mxu0
        %v1218 = vpop.f32.mrf.mxu0
        %v1219 = vpop.f32.mrf.mxu0
        %1220 = vdwg.mxu0
        %v1221 = vadd.f32 %v1109, %v1216
        %s1222 = smul.addr %s538, 4
        %s1223 = scalar_lea.vmem %s476, %s1222
        %v1224 = vld [vmem:[%s1223] sm:$0xf]
        %s1225 = scalar_lea.vmem %s481, 384
        %v1226 = vld [vmem:[%s1225] sm:$0xf]
        %v1227 = vld [vmem:[%s1225 + $0x4] sm:$0xf]
        %v1228 = vld [vmem:[%s1225 + $0x8] sm:$0xf]
        %v1229 = vld [vmem:[%s1225 + $0xc] sm:$0xf]
        %v1230 = vld [vmem:[%s1225 + $0x10] sm:$0xf]
        %v1231 = vld [vmem:[%s1225 + $0x14] sm:$0xf]
        %v1232 = vld [vmem:[%s1225 + $0x18] sm:$0xf]
        %v1233 = vld [vmem:[%s1225 + $0x1c] sm:$0xf]
        %v1234 = vld [vmem:[%s1225 + $0x20] sm:$0xf]
        %v1235 = vld [vmem:[%s1225 + $0x24] sm:$0xf]
        %v1236 = vld [vmem:[%s1225 + $0x28] sm:$0xf]
        %v1237 = vld [vmem:[%s1225 + $0x2c] sm:$0xf]
        %v1238 = vld [vmem:[%s1225 + $0x30] sm:$0xf]
        %v1239 = vld [vmem:[%s1225 + $0x34] sm:$0xf]
        %v1240 = vld [vmem:[%s1225 + $0x38] sm:$0xf]
        %v1241 = vld [vmem:[%s1225 + $0x3c] sm:$0xf]
        %v1258 = vunpack.c.l.b16 %v1226
        %v1259 = vunpack.c.l.b16 %v1227
        %v1260 = vunpack.c.l.b16 %v1228
        %v1261 = vunpack.c.l.b16 %v1229
        %v1262 = vunpack.c.l.b16 %v1230
        %v1263 = vunpack.c.l.b16 %v1231
        %v1264 = vunpack.c.l.b16 %v1232
        %v1265 = vunpack.c.l.b16 %v1233
        %v1266 = vunpack.c.l.b16 %v1234
        %v1267 = vunpack.c.l.b16 %v1235
        %v1268 = vunpack.c.l.b16 %v1236
        %v1269 = vunpack.c.l.b16 %v1237
        %v1270 = vunpack.c.l.b16 %v1238
        %v1271 = vunpack.c.l.b16 %v1239
        %v1272 = vunpack.c.l.b16 %v1240
        %v1273 = vunpack.c.l.b16 %v1241
        %v1274 = vpack.c.b16 %v1259, %v1258
        %v1275 = vpack.c.b16 %v1261, %v1260
        %v1276 = vpack.c.b16 %v1263, %v1262
        %v1277 = vpack.c.b16 %v1265, %v1264
        %v1278 = vpack.c.b16 %v1267, %v1266
        %v1279 = vpack.c.b16 %v1269, %v1268
        %v1280 = vpack.c.b16 %v1271, %v1270
        %v1281 = vpack.c.b16 %v1273, %v1272
        %1290 = vmatprep.subr.bf16.mxu0 0
        %1291 = vmatpush1.bf16.msra.mxu0 %v1281
        %1292 = vmatprep.subr.bf16.mxu0 0
        %1293 = vmatpush1.bf16.msra.mxu0 %v1280
        %1294 = vmatprep.subr.bf16.mxu0 0
        %1295 = vmatpush1.bf16.msra.mxu0 %v1279
        %1296 = vmatprep.subr.bf16.mxu0 0
        %1297 = vmatpush1.bf16.msra.mxu0 %v1278
        %1298 = vmatprep.subr.bf16.mxu0 0
        %1299 = vmatpush1.bf16.msra.mxu0 %v1277
        %1300 = vmatprep.subr.bf16.mxu0 0
        %1301 = vmatpush1.bf16.msra.mxu0 %v1276
        %1302 = vmatprep.subr.bf16.mxu0 0
        %1303 = vmatpush1.bf16.msra.mxu0 %v1275
        %1304 = vmatprep.subr.bf16.mxu0 0
        %1305 = vmatpush1.bf16.msra.mxu0 %v1274
        %1306 = vmatprep.subr.bf16.mxu0 0
        %1307 = vmatpush2.bf16.msra.mxu0 0
        %1308 = vmatprep.subr.bf16.mxu0 0
        %1309 = vmatpush2.bf16.msra.mxu0 0
        %1310 = vmatprep.subr.bf16.mxu0 0
        %1311 = vmatpush2.bf16.msra.mxu0 0
        %1312 = vmatprep.subr.bf16.mxu0 0
        %1313 = vmatpush2.bf16.msra.mxu0 0
        %1314 = vmatprep.subr.bf16.mxu0 0
        %1315 = vmatpush2.bf16.msra.mxu0 0
        %1316 = vmatprep.subr.bf16.mxu0 0
        %1317 = vmatpush2.bf16.msra.mxu0 0
        %1318 = vmatprep.subr.bf16.mxu0 0
        %1319 = vmatpush2.bf16.msra.mxu0 0
        %1320 = vmatprep.subr.bf16.mxu0 0
        %1321 = vmatpush2.bf16.msra.mxu0 0
        %1322 = vmatprep.mubr.bf16.mxu0 0
        %1323 = vmatmul.mubr.bf16.gmra.mxu0 %v1224
        %v1324 = vpop.f32.mrf.mxu0
        %v1325 = vadd.f32 0.0, %v1324
        %v1326 = vpop.f32.mrf.mxu0
        %v1327 = vpop.f32.mrf.mxu0
        %v1328 = vpop.f32.mrf.mxu0
        %1329 = vdwg.mxu0
        %v1330 = vadd.f32 %v1221, %v1325
        %v1331 = vld [vmem:[%s1223] sm:$0xf]
        %v1332 = vld [vmem:[%s1223 + $0x4] sm:$0x1]
        %s1333 = scalar_lea.vmem %s481, 448
        %v1334 = vld [vmem:[%s1333] sm:$0xf]
        %v1335 = vld [vmem:[%s1333 + $0x4] sm:$0xf]
        %v1336 = vld [vmem:[%s1333 + $0x8] sm:$0xf]
        %v1337 = vld [vmem:[%s1333 + $0xc] sm:$0xf]
        %v1338 = vld [vmem:[%s1333 + $0x10] sm:$0xf]
        %v1339 = vld [vmem:[%s1333 + $0x14] sm:$0xf]
        %v1340 = vld [vmem:[%s1333 + $0x18] sm:$0xf]
        %v1341 = vld [vmem:[%s1333 + $0x1c] sm:$0xf]
        %v1342 = vld [vmem:[%s1333 + $0x20] sm:$0xf]
        %v1343 = vld [vmem:[%s1333 + $0x24] sm:$0xf]
        %v1344 = vld [vmem:[%s1333 + $0x28] sm:$0xf]
        %v1345 = vld [vmem:[%s1333 + $0x2c] sm:$0xf]
        %v1346 = vld [vmem:[%s1333 + $0x30] sm:$0xf]
        %v1347 = vld [vmem:[%s1333 + $0x34] sm:$0xf]
        %v1348 = vld [vmem:[%s1333 + $0x38] sm:$0xf]
        %v1349 = vld [vmem:[%s1333 + $0x3c] sm:$0xf]
        %v1352 = vunpack.c.l.b16 %v1331
        %v1353 = vunpack.c.l.b16 %v1332
        %v1354 = vpack.c.b16 %v1353, %v1352
        %v1356 = vshrl.u32 %v1354, 16
        %v1358 = vshll.u32 %v1354, 16
        %v1360 = vrot.slane %v1358, 1
        %v1361 = vor.u32 %v1356, %v1360
        %v1379 = vunpack.c.l.b16 %v1334
        %v1380 = vunpack.c.l.b16 %v1335
        %v1381 = vunpack.c.l.b16 %v1336
        %v1382 = vunpack.c.l.b16 %v1337
        %v1383 = vunpack.c.l.b16 %v1338
        %v1384 = vunpack.c.l.b16 %v1339
        %v1385 = vunpack.c.l.b16 %v1340
        %v1386 = vunpack.c.l.b16 %v1341
        %v1387 = vunpack.c.l.b16 %v1342
        %v1388 = vunpack.c.l.b16 %v1343
        %v1389 = vunpack.c.l.b16 %v1344
        %v1390 = vunpack.c.l.b16 %v1345
        %v1391 = vunpack.c.l.b16 %v1346
        %v1392 = vunpack.c.l.b16 %v1347
        %v1393 = vunpack.c.l.b16 %v1348
        %v1394 = vunpack.c.l.b16 %v1349
        %v1395 = vpack.c.b16 %v1380, %v1379
        %v1396 = vpack.c.b16 %v1382, %v1381
        %v1397 = vpack.c.b16 %v1384, %v1383
        %v1398 = vpack.c.b16 %v1386, %v1385
        %v1399 = vpack.c.b16 %v1388, %v1387
        %v1400 = vpack.c.b16 %v1390, %v1389
        %v1401 = vpack.c.b16 %v1392, %v1391
        %v1402 = vpack.c.b16 %v1394, %v1393
        %1411 = vmatprep.subr.bf16.mxu0 0
        %1412 = vmatpush1.bf16.msra.mxu0 %v1402
        %1413 = vmatprep.subr.bf16.mxu0 0
        %1414 = vmatpush1.bf16.msra.mxu0 %v1401
        %1415 = vmatprep.subr.bf16.mxu0 0
        %1416 = vmatpush1.bf16.msra.mxu0 %v1400
        %1417 = vmatprep.subr.bf16.mxu0 0
        %1418 = vmatpush1.bf16.msra.mxu0 %v1399
        %1419 = vmatprep.subr.bf16.mxu0 0
        %1420 = vmatpush1.bf16.msra.mxu0 %v1398
        %1421 = vmatprep.subr.bf16.mxu0 0
        %1422 = vmatpush1.bf16.msra.mxu0 %v1397
        %1423 = vmatprep.subr.bf16.mxu0 0
        %1424 = vmatpush1.bf16.msra.mxu0 %v1396
        %1425 = vmatprep.subr.bf16.mxu0 0
        %1426 = vmatpush1.bf16.msra.mxu0 %v1395
        %1427 = vmatprep.subr.bf16.mxu0 0
        %1428 = vmatpush2.bf16.msra.mxu0 0
        %1429 = vmatprep.subr.bf16.mxu0 0
        %1430 = vmatpush2.bf16.msra.mxu0 0
        %1431 = vmatprep.subr.bf16.mxu0 0
        %1432 = vmatpush2.bf16.msra.mxu0 0
        %1433 = vmatprep.subr.bf16.mxu0 0
        %1434 = vmatpush2.bf16.msra.mxu0 0
        %1435 = vmatprep.subr.bf16.mxu0 0
        %1436 = vmatpush2.bf16.msra.mxu0 0
        %1437 = vmatprep.subr.bf16.mxu0 0
        %1438 = vmatpush2.bf16.msra.mxu0 0
        %1439 = vmatprep.subr.bf16.mxu0 0
        %1440 = vmatpush2.bf16.msra.mxu0 0
        %1441 = vmatprep.subr.bf16.mxu0 0
        %1442 = vmatpush2.bf16.msra.mxu0 0
        %1443 = vmatprep.mubr.bf16.mxu0 0
        %1444 = vmatmul.mubr.bf16.gmra.mxu0 %v1361
        %v1445 = vpop.f32.mrf.mxu0
        %v1446 = vadd.f32 0.0, %v1445
        %v1447 = vpop.f32.mrf.mxu0
        %v1448 = vpop.f32.mrf.mxu0
        %v1449 = vpop.f32.mrf.mxu0
        %1450 = vdwg.mxu0
        %v1451 = vadd.f32 %v1330, %v1446
        %v1452 = vld [vmem:[%s1223] sm:$0xe]
        %s1453 = scalar_lea.vmem %s481, 512
        %v1454 = vld [vmem:[%s1453] sm:$0xf]
        %v1455 = vld [vmem:[%s1453 + $0x4] sm:$0xf]
        %v1456 = vld [vmem:[%s1453 + $0x8] sm:$0xf]
        %v1457 = vld [vmem:[%s1453 + $0xc] sm:$0xf]
        %v1458 = vld [vmem:[%s1453 + $0x10] sm:$0xf]
        %v1459 = vld [vmem:[%s1453 + $0x14] sm:$0xf]
        %v1460 = vld [vmem:[%s1453 + $0x18] sm:$0xf]
        %v1461 = vld [vmem:[%s1453 + $0x1c] sm:$0xf]
        %v1462 = vld [vmem:[%s1453 + $0x20] sm:$0xf]
        %v1463 = vld [vmem:[%s1453 + $0x24] sm:$0xf]
        %v1464 = vld [vmem:[%s1453 + $0x28] sm:$0xf]
        %v1465 = vld [vmem:[%s1453 + $0x2c] sm:$0xf]
        %v1466 = vld [vmem:[%s1453 + $0x30] sm:$0xf]
        %v1467 = vld [vmem:[%s1453 + $0x34] sm:$0xf]
        %v1468 = vld [vmem:[%s1453 + $0x38] sm:$0xf]
        %v1469 = vld [vmem:[%s1453 + $0x3c] sm:$0xf]
        %v1471 = vunpack.c.l.b16 %v1452
        %v1472 = vpack.c.b16 %v1353, %v1471
        %v1473 = vrot.slane %v1472, 1
        %v1491 = vunpack.c.l.b16 %v1454
        %v1492 = vunpack.c.l.b16 %v1455
        %v1493 = vunpack.c.l.b16 %v1456
        %v1494 = vunpack.c.l.b16 %v1457
        %v1495 = vunpack.c.l.b16 %v1458
        %v1496 = vunpack.c.l.b16 %v1459
        %v1497 = vunpack.c.l.b16 %v1460
        %v1498 = vunpack.c.l.b16 %v1461
        %v1499 = vunpack.c.l.b16 %v1462
        %v1500 = vunpack.c.l.b16 %v1463
        %v1501 = vunpack.c.l.b16 %v1464
        %v1502 = vunpack.c.l.b16 %v1465
        %v1503 = vunpack.c.l.b16 %v1466
        %v1504 = vunpack.c.l.b16 %v1467
        %v1505 = vunpack.c.l.b16 %v1468
        %v1506 = vunpack.c.l.b16 %v1469
        %v1507 = vpack.c.b16 %v1492, %v1491
        %v1508 = vpack.c.b16 %v1494, %v1493
        %v1509 = vpack.c.b16 %v1496, %v1495
        %v1510 = vpack.c.b16 %v1498, %v1497
        %v1511 = vpack.c.b16 %v1500, %v1499
        %v1512 = vpack.c.b16 %v1502, %v1501
        %v1513 = vpack.c.b16 %v1504, %v1503
        %v1514 = vpack.c.b16 %v1506, %v1505
        %1523 = vmatprep.subr.bf16.mxu0 0
        %1524 = vmatpush1.bf16.msra.mxu0 %v1514
        %1525 = vmatprep.subr.bf16.mxu0 0
        %1526 = vmatpush1.bf16.msra.mxu0 %v1513
        %1527 = vmatprep.subr.bf16.mxu0 0
        %1528 = vmatpush1.bf16.msra.mxu0 %v1512
        %1529 = vmatprep.subr.bf16.mxu0 0
        %1530 = vmatpush1.bf16.msra.mxu0 %v1511
        %1531 = vmatprep.subr.bf16.mxu0 0
        %1532 = vmatpush1.bf16.msra.mxu0 %v1510
        %1533 = vmatprep.subr.bf16.mxu0 0
        %1534 = vmatpush1.bf16.msra.mxu0 %v1509
        %1535 = vmatprep.subr.bf16.mxu0 0
        %1536 = vmatpush1.bf16.msra.mxu0 %v1508
        %1537 = vmatprep.subr.bf16.mxu0 0
        %1538 = vmatpush1.bf16.msra.mxu0 %v1507
        %1539 = vmatprep.subr.bf16.mxu0 0
        %1540 = vmatpush2.bf16.msra.mxu0 0
        %1541 = vmatprep.subr.bf16.mxu0 0
        %1542 = vmatpush2.bf16.msra.mxu0 0
        %1543 = vmatprep.subr.bf16.mxu0 0
        %1544 = vmatpush2.bf16.msra.mxu0 0
        %1545 = vmatprep.subr.bf16.mxu0 0
        %1546 = vmatpush2.bf16.msra.mxu0 0
        %1547 = vmatprep.subr.bf16.mxu0 0
        %1548 = vmatpush2.bf16.msra.mxu0 0
        %1549 = vmatprep.subr.bf16.mxu0 0
        %1550 = vmatpush2.bf16.msra.mxu0 0
        %1551 = vmatprep.subr.bf16.mxu0 0
        %1552 = vmatpush2.bf16.msra.mxu0 0
        %1553 = vmatprep.subr.bf16.mxu0 0
        %1554 = vmatpush2.bf16.msra.mxu0 0
        %1555 = vmatprep.mubr.bf16.mxu0 0
        %1556 = vmatmul.mubr.bf16.gmra.mxu0 %v1473
        %v1557 = vpop.f32.mrf.mxu0
        %v1558 = vadd.f32 0.0, %v1557
        %v1559 = vpop.f32.mrf.mxu0
        %v1560 = vpop.f32.mrf.mxu0
        %v1561 = vpop.f32.mrf.mxu0
        %1562 = vdwg.mxu0
        %v1563 = vadd.f32 %v1451, %v1558
        %v1564 = vmul.f32 %v1563, 0.1
        %v1565 = vmax.f32 %v1563, %v1564
        %s1566 = smul.addr %s533, 4
        %s1567 = scalar_lea.vmem %s496, %s1566
        %v1568 = vld [vmem:[%s1567] sm:$0xf]
        %v1569 = vunpack.c.l.bf16 %v1568
        %v1570 = vadd.f32 %v1565, %v1569
        %s1571 = smul.u32 %s533, 8
        %s1572 = scalar_lea.vmem %s509, %s1571
        %1573 = vst [vmem:[%s1572] sm:$0xff] %v1565
        %s1574 = scalar_lea.vmem %s522, %s1571
        %1575 = vst [vmem:[%s1574] sm:$0xff] %v1570
      $region49: #{downsample_forward.5} parent=43 // loop_footer
        %s537 = sadd.s32 1, %s533
      $region50: #{downsample_forward.5} parent=43 // loop_footer_branch
        %532 = sbr.rel target = $region46
      $region51: #{downsample_forward.5} parent=43 // loop_exit
        _
      %s1576 = smul.u32 8, %s26
      %p1577 = scmp.lt.s32.totalorder %s24, 1
      %s1578 = scalar_select %p1577, %s24, 1
      %p1579 = scmp.lt.s32.totalorder %s1576, 7
      %s1580 = scalar_select %p1579, %s1576, 7
      %p1581 = scmp.lt.s32.totalorder %s25, 0
      %s1582 = scalar_select %p1581, %s25, 0
      %s1583 = sadd.s32 %s1582, %s1580
      %s1584 = smul.addr %s1578, 8
      %s1585 = sadd.s32 %s1583, %s1584
      %s1586 = smul.addr %s1585, 8
      %s1587 = scalar_lea.vmem %s6, %s1586
      %s1588 = smul.u32 8, %s26
      %p1589 = scmp.lt.s32.totalorder %s24, 1
      %s1590 = scalar_select %p1589, %s24, 1
      %p1591 = scmp.lt.s32.totalorder %s1588, 7
      %s1592 = scalar_select %p1591, %s1588, 7
      %p1593 = scmp.lt.s32.totalorder %s25, 0
      %s1594 = scalar_select %p1593, %s25, 0
      %s1595 = sadd.s32 %s1594, %s1592
      %s1596 = smul.addr %s1590, 8
      %s1597 = sadd.s32 %s1595, %s1596
      %s1598 = smul.addr %s1597, 8
      %s1599 = scalar_lea.vmem %s7, %s1598
      // Predicated region
      $region52: #{downsample_forward.5} parent=43 // pred_check
        %p1600 = pneg %p226
      $region53: #{downsample_forward.5} parent=43 // pred_check_branch
        %1602 = sbr.rel (%p1600) target = $region55
      $region54: #{downsample_forward.5} parent=43 // pred_region
        %s1603 = smul.u32 8, %s26
      $region55: #{downsample_forward.5} parent=43 // pred_fallthru
        _
      // Predicated region
      $region56: #{downsample_forward.5} parent=43 // pred_check
        %p1604 = pneg %p256
      $region57: #{downsample_forward.5} parent=43 // pred_check_branch
        %1606 = sbr.rel (%p1604) target = $region59
      $region58: #{downsample_forward.5} parent=43 // pred_region
        %s1607 = smul.u32 8, %s26
      $region59: #{downsample_forward.5} parent=43 // pred_fallthru
        _
    $region44: #{downsample_forward.5} parent=5 // pred_fallthru
      _
    %p1608 = scmp.le.s32.totalorder 2, %s14
    // Predicated region
    $region60: #{downsample_forward.5} parent=5 // pred_check
      %p1609 = pneg %p1608
    $region61: #{downsample_forward.5} parent=5 // pred_check_branch
      %1611 = sbr.rel (%p1609) target = $region63
    $region62: #{downsample_forward.5} parent=5 // pred_region
      %s1612 = ssub.s32 %s14, 2
      // Predicated region
      $region64: #{downsample_forward.5} parent=62 // pred_check
        %p1613 = pneg %p232
      $region65: #{downsample_forward.5} parent=62 // pred_check_branch
        %1615 = sbr.rel (%p1613) target = $region67
      $region66: #{downsample_forward.5} parent=62 // pred_region
        %s1616 = smul.u32 8, %s29
        %p1617 = scmp.lt.s32.totalorder %s27, 1
        %s1618 = scalar_select %p1617, %s27, 1
        %p1619 = scmp.lt.s32.totalorder %s1616, 7
        %s1620 = scalar_select %p1619, %s1616, 7
        %p1621 = scmp.lt.s32.totalorder %s28, 0
        %s1622 = scalar_select %p1621, %s28, 0
        %s1623 = sadd.s32 %s1622, %s1620
        %s1624 = smul.addr %s1618, 8
        %s1625 = sadd.s32 %s1623, %s1624
        %s1626 = smul.addr %s1625, 8
        %s1627 = scalar_lea.vmem %s6, %s1626
      $region67: #{downsample_forward.5} parent=62 // pred_fallthru
        _
      // Predicated region
      $region68: #{downsample_forward.5} parent=62 // pred_check
        %p1628 = pneg %p262
      $region69: #{downsample_forward.5} parent=62 // pred_check_branch
        %1630 = sbr.rel (%p1628) target = $region71
      $region70: #{downsample_forward.5} parent=62 // pred_region
        %s1631 = smul.u32 8, %s29
        %p1632 = scmp.lt.s32.totalorder %s27, 1
        %s1633 = scalar_select %p1632, %s27, 1
        %p1634 = scmp.lt.s32.totalorder %s1631, 7
        %s1635 = scalar_select %p1634, %s1631, 7
        %p1636 = scmp.lt.s32.totalorder %s28, 0
        %s1637 = scalar_select %p1636, %s28, 0
        %s1638 = sadd.s32 %s1637, %s1635
        %s1639 = smul.addr %s1633, 8
        %s1640 = sadd.s32 %s1638, %s1639
        %s1641 = smul.addr %s1640, 8
        %s1642 = scalar_lea.vmem %s7, %s1641
      $region71: #{downsample_forward.5} parent=62 // pred_fallthru
        _
    $region63: #{downsample_forward.5} parent=5 // pred_fallthru
      _
  $region6: #{downsample_forward.5} parent=0 // loop_footer
    %s18 = sadd.s32 1, %s14
  $region7: #{downsample_forward.5} parent=0 // loop_footer_branch
    %13 = sbr.rel target = $region3
  $region8: #{downsample_forward.5} parent=0 // loop_exit
    _

// kernel: downsample_forward.3
$region0: #{downsample_forward.3}
  #allocation0 [shape = 'u32[]', space=smem, size = 0x4, offset = 0x4, fixed_abs, tag = 'smem constant byte address 0x4 - core index']
  #allocation1 [shape = 'u32[144,128]{1,0:T(1,128)}', space=vmem, size = 0x12000, scoped, tag = 'internal scratch']
  %s0 = inlined_call_operand.vmem [shape: bf16[2,8,9,128], index: 0, kind: input, shape index: {}]
  %s1 = inlined_call_operand.vmem [shape: bf16[2,8,9,128], index: 1, kind: input, shape index: {}]
  %s2 = inlined_call_operand.vmem [shape: bf16[2,8,9,128], index: 2, kind: input, shape index: {}]
  %s3 = inlined_call_operand.vmem [shape: bf16[2,8,9,128], index: 3, kind: input, shape index: {}]
  %s4 = inlined_call_operand.vmem [shape: bf16[2,8,9,128], index: 4, kind: input, shape index: {}]
  %s5 = inlined_call_operand.vmem [shape: bf16[2,8,9,128], index: 5, kind: input, shape index: {}]
  %s6 = inlined_call_operand.vmem [shape: bf16[9,128,128], index: 6, kind: input, shape index: {}]
  %s7 = inlined_call_operand.vmem [shape: f32[1,128], index: 7, kind: input, shape index: {}]
  %s8 = inlined_call_operand.vmem [shape: bf16[2,8,8,128], index: 8, kind: output, shape index: {}]
  %s9 = sld [smem:[#allocation0]]
  $region72: #{downsample_forward.3} parent=0
    _
  %s11 = ssub.s32 1, %s9
  %s12 = scalar_select 0, %s11, %s9
  loop: start=0, step=1, limit=4
  $region2: #{downsample_forward.3} parent=0 // loop_pre_header
    _
  $region3: #{downsample_forward.3} parent=0 // loop_header
    %s14 = sphi 0, %s18
    %p15 = scmp.ge.s32.totalorder %s14, 4
    %s21 = sphi 0, %s40
    %s22 = sphi 0, %s36
    %s23 = sphi 0, %s32
    %s24 = sphi 0, %s21
    %s25 = sphi 0, %s22
    %s26 = sphi 0, %s23
    %s27 = sphi 0, %s24
    %s28 = sphi 0, %s25
    %s29 = sphi 0, %s26
    %s45 = sphi 0, %s47
    %s48 = sphi 0, %s45
    %s49 = sphi 0, %s48
    %s65 = sphi 0, %s49
    %s73 = sphi 0, %s75
    %s76 = sphi 0, %s73
    %s77 = sphi 0, %s76
    %s93 = sphi 0, %s77
    %s101 = sphi 0, %s103
    %s104 = sphi 0, %s101
    %s105 = sphi 0, %s104
    %s121 = sphi 0, %s105
    %s129 = sphi 0, %s131
    %s132 = sphi 0, %s129
    %s133 = sphi 0, %s132
    %s149 = sphi 0, %s133
    %s157 = sphi 0, %s159
    %s160 = sphi 0, %s157
    %s161 = sphi 0, %s160
    %s177 = sphi 0, %s161
    %s185 = sphi 0, %s187
    %s188 = sphi 0, %s185
    %s189 = sphi 0, %s188
    %s205 = sphi 0, %s189
    %s211 = sphi 0, %s213
    %s214 = sphi 0, %s211
    %s215 = sphi 0, %s214
    %s231 = sphi 0, %s215
    %s237 = sphi 0, %s239
    %s240 = sphi 0, %s237
    %s241 = sphi 0, %s240
    %s257 = sphi 0, %s241
    %s267 = sphi 0, %s269
    %s270 = sphi 0, %s267
    %s271 = sphi 0, %s270
    %s287 = sphi 0, %s271
  $region4: #{downsample_forward.3} parent=0 // loop_header_branch
    %17 = sbr.rel (%p15) target = $region8
  $region5: #{downsample_forward.3} parent=0 // loop_body
    %s19 = ssub.s32 %s14, 1
    %s20 = ssub.s32 %s14, 2
    %s30 = sadd.s32 1, %s23
    %p31 = scmp.ge.s32.totalorder %s30, 1
    %s32 = scalar_select %p31, 0, %s30
    %s33 = sadd.s32 1, %s22
    %s34 = scalar_select %p31, %s33, %s22
    %p35 = scmp.ge.s32.totalorder %s34, 1
    %s36 = scalar_select %p35, 0, %s34
    %s37 = sadd.s32 1, %s21
    %s38 = scalar_select %p35, %s37, %s21
    %p39 = scmp.ge.s32.totalorder %s38, 2
    %s40 = scalar_select %p39, 0, %s38
    %s41 = ssub.s32 %s21, %s40
    %s42 = ssub.s32 %s23, %s32
    %s43 = sor.u32 %s41, %s42
    %p44 = scmp.eq.s32.totalorder %s43, 0
    %s46 = sadd.s32 %s45, 1
    %s47 = scalar_select %p44, %s45, %s46
    %p50 = pneg %p44
    %p51 = scmp.eq.s32.totalorder %s14, 1
    %p52 = por %p50, %p51
    %p53 = scmp.ne.s32.totalorder %s45, %s48
    %p54 = scmp.eq.s32.totalorder %s14, 0
    %p55 = por %p53, %p54
    %p56 = scmp.ne.s32.totalorder %s45, %s48
    %p57 = scmp.eq.s32.totalorder %s19, 1
    %p58 = por %p56, %p57
    %p59 = scmp.ne.s32.totalorder %s48, %s49
    %p60 = scmp.eq.s32.totalorder %s19, 0
    %p61 = por %p59, %p60
    %p62 = scmp.ne.s32.totalorder %s48, %s49
    %p63 = scmp.eq.s32.totalorder %s20, 1
    %p64 = por %p62, %p63
    %p66 = scmp.ne.s32.totalorder %s49, %s65
    %p67 = scmp.eq.s32.totalorder %s20, 0
    %p68 = por %p66, %p67
    %s69 = ssub.s32 %s21, %s40
    %s70 = ssub.s32 %s23, %s32
    %s71 = sor.u32 %s69, %s70
    %p72 = scmp.eq.s32.totalorder %s71, 0
    %s74 = sadd.s32 %s73, 1
    %s75 = scalar_select %p72, %s73, %s74
    %p78 = pneg %p72
    %p79 = scmp.eq.s32.totalorder %s14, 1
    %p80 = por %p78, %p79
    %p81 = scmp.ne.s32.totalorder %s73, %s76
    %p82 = scmp.eq.s32.totalorder %s14, 0
    %p83 = por %p81, %p82
    %p84 = scmp.ne.s32.totalorder %s73, %s76
    %p85 = scmp.eq.s32.totalorder %s19, 1
    %p86 = por %p84, %p85
    %p87 = scmp.ne.s32.totalorder %s76, %s77
    %p88 = scmp.eq.s32.totalorder %s19, 0
    %p89 = por %p87, %p88
    %p90 = scmp.ne.s32.totalorder %s76, %s77
    %p91 = scmp.eq.s32.totalorder %s20, 1
    %p92 = por %p90, %p91
    %p94 = scmp.ne.s32.totalorder %s77, %s93
    %p95 = scmp.eq.s32.totalorder %s20, 0
    %p96 = por %p94, %p95
    %s97 = ssub.s32 %s21, %s40
    %s98 = ssub.s32 %s23, %s32
    %s99 = sor.u32 %s97, %s98
    %p100 = scmp.eq.s32.totalorder %s99, 0
    %s102 = sadd.s32 %s101, 1
    %s103 = scalar_select %p100, %s101, %s102
    %p106 = pneg %p100
    %p107 = scmp.eq.s32.totalorder %s14, 1
    %p108 = por %p106, %p107
    %p109 = scmp.ne.s32.totalorder %s101, %s104
    %p110 = scmp.eq.s32.totalorder %s14, 0
    %p111 = por %p109, %p110
    %p112 = scmp.ne.s32.totalorder %s101, %s104
    %p113 = scmp.eq.s32.totalorder %s19, 1
    %p114 = por %p112, %p113
    %p115 = scmp.ne.s32.totalorder %s104, %s105
    %p116 = scmp.eq.s32.totalorder %s19, 0
    %p117 = por %p115, %p116
    %p118 = scmp.ne.s32.totalorder %s104, %s105
    %p119 = scmp.eq.s32.totalorder %s20, 1
    %p120 = por %p118, %p119
    %p122 = scmp.ne.s32.totalorder %s105, %s121
    %p123 = scmp.eq.s32.totalorder %s20, 0
    %p124 = por %p122, %p123
    %s125 = ssub.s32 %s21, %s40
    %s126 = ssub.s32 %s23, %s32
    %s127 = sor.u32 %s125, %s126
    %p128 = scmp.eq.s32.totalorder %s127, 0
    %s130 = sadd.s32 %s129, 1
    %s131 = scalar_select %p128, %s129, %s130
    %p134 = pneg %p128
    %p135 = scmp.eq.s32.totalorder %s14, 1
    %p136 = por %p134, %p135
    %p137 = scmp.ne.s32.totalorder %s129, %s132
    %p138 = scmp.eq.s32.totalorder %s14, 0
    %p139 = por %p137, %p138
    %p140 = scmp.ne.s32.totalorder %s129, %s132
    %p141 = scmp.eq.s32.totalorder %s19, 1
    %p142 = por %p140, %p141
    %p143 = scmp.ne.s32.totalorder %s132, %s133
    %p144 = scmp.eq.s32.totalorder %s19, 0
    %p145 = por %p143, %p144
    %p146 = scmp.ne.s32.totalorder %s132, %s133
    %p147 = scmp.eq.s32.totalorder %s20, 1
    %p148 = por %p146, %p147
    %p150 = scmp.ne.s32.totalorder %s133, %s149
    %p151 = scmp.eq.s32.totalorder %s20, 0
    %p152 = por %p150, %p151
    %s153 = ssub.s32 %s21, %s40
    %s154 = ssub.s32 %s23, %s32
    %s155 = sor.u32 %s153, %s154
    %p156 = scmp.eq.s32.totalorder %s155, 0
    %s158 = sadd.s32 %s157, 1
    %s159 = scalar_select %p156, %s157, %s158
    %p162 = pneg %p156
    %p163 = scmp.eq.s32.totalorder %s14, 1
    %p164 = por %p162, %p163
    %p165 = scmp.ne.s32.totalorder %s157, %s160
    %p166 = scmp.eq.s32.totalorder %s14, 0
    %p167 = por %p165, %p166
    %p168 = scmp.ne.s32.totalorder %s157, %s160
    %p169 = scmp.eq.s32.totalorder %s19, 1
    %p170 = por %p168, %p169
    %p171 = scmp.ne.s32.totalorder %s160, %s161
    %p172 = scmp.eq.s32.totalorder %s19, 0
    %p173 = por %p171, %p172
    %p174 = scmp.ne.s32.totalorder %s160, %s161
    %p175 = scmp.eq.s32.totalorder %s20, 1
    %p176 = por %p174, %p175
    %p178 = scmp.ne.s32.totalorder %s161, %s177
    %p179 = scmp.eq.s32.totalorder %s20, 0
    %p180 = por %p178, %p179
    %s181 = ssub.s32 %s21, %s40
    %s182 = ssub.s32 %s23, %s32
    %s183 = sor.u32 %s181, %s182
    %p184 = scmp.eq.s32.totalorder %s183, 0
    %s186 = sadd.s32 %s185, 1
    %s187 = scalar_select %p184, %s185, %s186
    %p190 = pneg %p184
    %p191 = scmp.eq.s32.totalorder %s14, 1
    %p192 = por %p190, %p191
    %p193 = scmp.ne.s32.totalorder %s185, %s188
    %p194 = scmp.eq.s32.totalorder %s14, 0
    %p195 = por %p193, %p194
    %p196 = scmp.ne.s32.totalorder %s185, %s188
    %p197 = scmp.eq.s32.totalorder %s19, 1
    %p198 = por %p196, %p197
    %p199 = scmp.ne.s32.totalorder %s188, %s189
    %p200 = scmp.eq.s32.totalorder %s19, 0
    %p201 = por %p199, %p200
    %p202 = scmp.ne.s32.totalorder %s188, %s189
    %p203 = scmp.eq.s32.totalorder %s20, 1
    %p204 = por %p202, %p203
    %p206 = scmp.ne.s32.totalorder %s189, %s205
    %p207 = scmp.eq.s32.totalorder %s20, 0
    %p208 = por %p206, %p207
    %s209 = ssub.s32 %s22, %s36
    %p210 = scmp.eq.s32.totalorder %s209, 0
    %s212 = sadd.s32 %s211, 1
    %s213 = scalar_select %p210, %s211, %s212
    %p216 = pneg %p210
    %p217 = scmp.eq.s32.totalorder %s14, 1
    %p218 = por %p216, %p217
    %p219 = scmp.ne.s32.totalorder %s211, %s214
    %p220 = scmp.eq.s32.totalorder %s14, 0
    %p221 = por %p219, %p220
    %p222 = scmp.ne.s32.totalorder %s211, %s214
    %p223 = scmp.eq.s32.totalorder %s19, 1
    %p224 = por %p222, %p223
    %p225 = scmp.ne.s32.totalorder %s214, %s215
    %p226 = scmp.eq.s32.totalorder %s19, 0
    %p227 = por %p225, %p226
    %p228 = scmp.ne.s32.totalorder %s214, %s215
    %p229 = scmp.eq.s32.totalorder %s20, 1
    %p230 = por %p228, %p229
    %p232 = scmp.ne.s32.totalorder %s215, %s231
    %p233 = scmp.eq.s32.totalorder %s20, 0
    %p234 = por %p232, %p233
    %s235 = ssub.s32 %s22, %s36
    %p236 = scmp.eq.s32.totalorder %s235, 0
    %s238 = sadd.s32 %s237, 1
    %s239 = scalar_select %p236, %s237, %s238
    %p242 = pneg %p236
    %p243 = scmp.eq.s32.totalorder %s14, 1
    %p244 = por %p242, %p243
    %p245 = scmp.ne.s32.totalorder %s237, %s240
    %p246 = scmp.eq.s32.totalorder %s14, 0
    %p247 = por %p245, %p246
    %p248 = scmp.ne.s32.totalorder %s237, %s240
    %p249 = scmp.eq.s32.totalorder %s19, 1
    %p250 = por %p248, %p249
    %p251 = scmp.ne.s32.totalorder %s240, %s241
    %p252 = scmp.eq.s32.totalorder %s19, 0
    %p253 = por %p251, %p252
    %p254 = scmp.ne.s32.totalorder %s240, %s241
    %p255 = scmp.eq.s32.totalorder %s20, 1
    %p256 = por %p254, %p255
    %p258 = scmp.ne.s32.totalorder %s241, %s257
    %p259 = scmp.eq.s32.totalorder %s20, 0
    %p260 = por %p258, %p259
    %s261 = ssub.s32 %s21, %s40
    %s262 = ssub.s32 %s23, %s32
    %s263 = sor.u32 %s261, %s262
    %s264 = ssub.s32 %s22, %s36
    %s265 = sor.u32 %s263, %s264
    %p266 = scmp.eq.s32.totalorder %s265, 0
    %s268 = sadd.s32 %s267, 1
    %s269 = scalar_select %p266, %s267, %s268
    %p272 = pneg %p266
    %p273 = scmp.eq.s32.totalorder %s14, 1
    %p274 = por %p272, %p273
    %p275 = scmp.ne.s32.totalorder %s267, %s270
    %p276 = scmp.eq.s32.totalorder %s14, 0
    %p277 = por %p275, %p276
    %p278 = scmp.ne.s32.totalorder %s267, %s270
    %p279 = scmp.eq.s32.totalorder %s19, 1
    %p280 = por %p278, %p279
    %p281 = scmp.ne.s32.totalorder %s270, %s271
    %p282 = scmp.eq.s32.totalorder %s19, 0
    %p283 = por %p281, %p282
    %p284 = scmp.ne.s32.totalorder %s270, %s271
    %p285 = scmp.eq.s32.totalorder %s20, 1
    %p286 = por %p284, %p285
    %p288 = scmp.ne.s32.totalorder %s271, %s287
    %p289 = scmp.eq.s32.totalorder %s20, 0
    %p290 = por %p288, %p289
    %p291 = scmp.le.s32.totalorder 1, %s14
    %p292 = scmp.lt.s32.totalorder %s14, 3
    %p293 = pnand %p291, %p292
    %p294 = pneg %p293
    // Predicated region
    $region9: #{downsample_forward.3} parent=5 // pred_check
      _
    $region10: #{downsample_forward.3} parent=5 // pred_check_branch
      %296 = sbr.rel (%p293) target = $region12
    $region11: #{downsample_forward.3} parent=5 // pred_region
      %s297 = ssub.s32 %s14, 1
      // Predicated region
      $region13: #{downsample_forward.3} parent=11 // pred_check
        %p298 = pneg %p227
      $region14: #{downsample_forward.3} parent=11 // pred_check_branch
        %300 = sbr.rel (%p298) target = $region16
      $region15: #{downsample_forward.3} parent=11 // pred_region
        %p301 = scmp.lt.s32.totalorder %s25, 0
        %s302 = scalar_select %p301, %s25, 0
        %s303 = smul.addr %s302, 4
        %s304 = scalar_lea.vmem %s6, %s303
      $region16: #{downsample_forward.3} parent=11 // pred_fallthru
        _
      // Predicated region
      $region17: #{downsample_forward.3} parent=11 // pred_check
        %p305 = pneg %p253
      $region18: #{downsample_forward.3} parent=11 // pred_check_branch
        %307 = sbr.rel (%p305) target = $region20
      $region19: #{downsample_forward.3} parent=11 // pred_region
        %p308 = scmp.lt.s32.totalorder %s25, 0
        %s309 = scalar_select %p308, %s25, 0
        %s310 = scalar_lea.vmem %s7, %s309
      $region20: #{downsample_forward.3} parent=11 // pred_fallthru
        _
    $region12: #{downsample_forward.3} parent=5 // pred_fallthru
      _
    %p311 = scmp.lt.s32.totalorder %s14, 2
    // Predicated region
    $region21: #{downsample_forward.3} parent=5 // pred_check
      %p312 = pneg %p311
    $region22: #{downsample_forward.3} parent=5 // pred_check_branch
      %314 = sbr.rel (%p312) target = $region24
    $region23: #{downsample_forward.3} parent=5 // pred_region
      // Predicated region
      $region25: #{downsample_forward.3} parent=23 // pred_check
        %p315 = pneg %p55
      $region26: #{downsample_forward.3} parent=23 // pred_check_branch
        %317 = sbr.rel (%p315) target = $region28
      $region27: #{downsample_forward.3} parent=23 // pred_region
        %s318 = smul.u32 8, %s23
        %p319 = scmp.lt.s32.totalorder %s21, 1
        %s320 = scalar_select %p319, %s21, 1
        %p321 = scmp.lt.s32.totalorder %s318, 7
        %s322 = scalar_select %p321, %s318, 7
        %s323 = smul.addr %s322, 2
        %s324 = smul.addr %s320, 16
        %s325 = sadd.s32 %s323, %s324
        %s326 = smul.addr %s325, 4
        %s327 = scalar_lea.vmem %s0, %s326
        %s328 = smul.u32 8, %s23
      $region28: #{downsample_forward.3} parent=23 // pred_fallthru
        _
      // Predicated region
      $region29: #{downsample_forward.3} parent=23 // pred_check
        %p329 = pneg %p83
      $region30: #{downsample_forward.3} parent=23 // pred_check_branch
        %331 = sbr.rel (%p329) target = $region32
      $region31: #{downsample_forward.3} parent=23 // pred_region
        %s332 = smul.u32 8, %s23
        %p333 = scmp.lt.s32.totalorder %s21, 1
        %s334 = scalar_select %p333, %s21, 1
        %p335 = scmp.lt.s32.totalorder %s332, 7
        %s336 = scalar_select %p335, %s332, 7
        %s337 = smul.addr %s336, 2
        %s338 = smul.addr %s334, 16
        %s339 = sadd.s32 %s337, %s338
        %s340 = smul.addr %s339, 4
        %s341 = scalar_lea.vmem %s1, %s340
        %s342 = smul.u32 8, %s23
      $region32: #{downsample_forward.3} parent=23 // pred_fallthru
        _
      // Predicated region
      $region33: #{downsample_forward.3} parent=23 // pred_check
        %p343 = pneg %p111
      $region34: #{downsample_forward.3} parent=23 // pred_check_branch
        %345 = sbr.rel (%p343) target = $region36
      $region35: #{downsample_forward.3} parent=23 // pred_region
        %s346 = smul.u32 8, %s23
        %p347 = scmp.lt.s32.totalorder %s21, 1
        %s348 = scalar_select %p347, %s21, 1
        %p349 = scmp.lt.s32.totalorder %s346, 7
        %s350 = scalar_select %p349, %s346, 7
        %s351 = smul.addr %s350, 2
        %s352 = smul.addr %s348, 16
        %s353 = sadd.s32 %s351, %s352
        %s354 = smul.addr %s353, 4
        %s355 = scalar_lea.vmem %s2, %s354
        %s356 = smul.u32 8, %s23
      $region36: #{downsample_forward.3} parent=23 // pred_fallthru
        _
      // Predicated region
      $region37: #{downsample_forward.3} parent=23 // pred_check
        %p357 = pneg %p139
      $region38: #{downsample_forward.3} parent=23 // pred_check_branch
        %359 = sbr.rel (%p357) target = $region40
      $region39: #{downsample_forward.3} parent=23 // pred_region
        %s360 = smul.u32 8, %s23
        %p361 = scmp.lt.s32.totalorder %s21, 1
        %s362 = scalar_select %p361, %s21, 1
        %p363 = scmp.lt.s32.totalorder %s360, 7
        %s364 = scalar_select %p363, %s360, 7
        %s365 = smul.addr %s364, 2
        %s366 = smul.addr %s362, 16
        %s367 = sadd.s32 %s365, %s366
        %s368 = smul.addr %s367, 4
        %s369 = scalar_lea.vmem %s3, %s368
        %s370 = smul.u32 8, %s23
      $region40: #{downsample_forward.3} parent=23 // pred_fallthru
        _
      // Predicated region
      $region41: #{downsample_forward.3} parent=23 // pred_check
        %p371 = pneg %p167
      $region42: #{downsample_forward.3} parent=23 // pred_check_branch
        %373 = sbr.rel (%p371) target = $region44
      $region43: #{downsample_forward.3} parent=23 // pred_region
        %s374 = smul.u32 8, %s23
        %p375 = scmp.lt.s32.totalorder %s21, 1
        %s376 = scalar_select %p375, %s21, 1
        %p377 = scmp.lt.s32.totalorder %s374, 7
        %s378 = scalar_select %p377, %s374, 7
        %s379 = smul.addr %s378, 2
        %s380 = smul.addr %s376, 16
        %s381 = sadd.s32 %s379, %s380
        %s382 = smul.addr %s381, 4
        %s383 = scalar_lea.vmem %s4, %s382
        %s384 = smul.u32 8, %s23
      $region44: #{downsample_forward.3} parent=23 // pred_fallthru
        _
      // Predicated region
      $region45: #{downsample_forward.3} parent=23 // pred_check
        %p385 = pneg %p195
      $region46: #{downsample_forward.3} parent=23 // pred_check_branch
        %387 = sbr.rel (%p385) target = $region48
      $region47: #{downsample_forward.3} parent=23 // pred_region
        %s388 = smul.u32 8, %s23
        %p389 = scmp.lt.s32.totalorder %s21, 1
        %s390 = scalar_select %p389, %s21, 1
        %p391 = scmp.lt.s32.totalorder %s388, 7
        %s392 = scalar_select %p391, %s388, 7
        %s393 = smul.addr %s392, 2
        %s394 = smul.addr %s390, 16
        %s395 = sadd.s32 %s393, %s394
        %s396 = smul.addr %s395, 4
        %s397 = scalar_lea.vmem %s5, %s396
        %s398 = smul.u32 8, %s23
      $region48: #{downsample_forward.3} parent=23 // pred_fallthru
        _
    $region24: #{downsample_forward.3} parent=5 // pred_fallthru
      _
    %p399 = scmp.le.s32.totalorder 1, %s14
    %p400 = scmp.lt.s32.totalorder %s14, 3
    %p401 = pnand %p399, %p400
    %p402 = pneg %p401
    // Predicated region
    $region49: #{downsample_forward.3} parent=5 // pred_check
      _
    $region50: #{downsample_forward.3} parent=5 // pred_check_branch
      %404 = sbr.rel (%p401) target = $region52
    $region51: #{downsample_forward.3} parent=5 // pred_region
      %s405 = ssub.s32 %s14, 1
      %s406 = smul.u32 8, %s26
      %p407 = scmp.lt.s32.totalorder %s24, 1
      %s408 = scalar_select %p407, %s24, 1
      %p409 = scmp.lt.s32.totalorder %s406, 7
      %s410 = scalar_select %p409, %s406, 7
      %s411 = smul.addr %s410, 2
      %s412 = smul.addr %s408, 16
      %s413 = sadd.s32 %s411, %s412
      %s414 = smul.addr %s413, 4
      %s415 = scalar_lea.vmem %s0, %s414
      %p416 = pneg %p61
      %p417 = pneg %p58
      %s418 = smul.u32 8, %s26
      %p419 = scmp.lt.s32.totalorder %s24, 1
      %s420 = scalar_select %p419, %s24, 1
      %p421 = scmp.lt.s32.totalorder %s418, 7
      %s422 = scalar_select %p421, %s418, 7
      %s423 = smul.addr %s422, 2
      %s424 = smul.addr %s420, 16
      %s425 = sadd.s32 %s423, %s424
      %s426 = smul.addr %s425, 4
      %s427 = scalar_lea.vmem %s1, %s426
      %p428 = pneg %p89
      %p429 = pneg %p86
      %s430 = smul.u32 8, %s26
      %p431 = scmp.lt.s32.totalorder %s24, 1
      %s432 = scalar_select %p431, %s24, 1
      %p433 = scmp.lt.s32.totalorder %s430, 7
      %s434 = scalar_select %p433, %s430, 7
      %s435 = smul.addr %s434, 2
      %s436 = smul.addr %s432, 16
      %s437 = sadd.s32 %s435, %s436
      %s438 = smul.addr %s437, 4
      %s439 = scalar_lea.vmem %s2, %s438
      %p440 = pneg %p117
      %p441 = pneg %p114
      %s442 = smul.u32 8, %s26
      %p443 = scmp.lt.s32.totalorder %s24, 1
      %s444 = scalar_select %p443, %s24, 1
      %p445 = scmp.lt.s32.totalorder %s442, 7
      %s446 = scalar_select %p445, %s442, 7
      %s447 = smul.addr %s446, 2
      %s448 = smul.addr %s444, 16
      %s449 = sadd.s32 %s447, %s448
      %s450 = smul.addr %s449, 4
      %s451 = scalar_lea.vmem %s3, %s450
      %p452 = pneg %p145
      %p453 = pneg %p142
      %s454 = smul.u32 8, %s26
      %p455 = scmp.lt.s32.totalorder %s24, 1
      %s456 = scalar_select %p455, %s24, 1
      %p457 = scmp.lt.s32.totalorder %s454, 7
      %s458 = scalar_select %p457, %s454, 7
      %s459 = smul.addr %s458, 2
      %s460 = smul.addr %s456, 16
      %s461 = sadd.s32 %s459, %s460
      %s462 = smul.addr %s461, 4
      %s463 = scalar_lea.vmem %s4, %s462
      %p464 = pneg %p173
      %p465 = pneg %p170
      %s466 = smul.u32 8, %s26
      %p467 = scmp.lt.s32.totalorder %s24, 1
      %s468 = scalar_select %p467, %s24, 1
      %p469 = scmp.lt.s32.totalorder %s466, 7
      %s470 = scalar_select %p469, %s466, 7
      %s471 = smul.addr %s470, 2
      %s472 = smul.addr %s468, 16
      %s473 = sadd.s32 %s471, %s472
      %s474 = smul.addr %s473, 4
      %s475 = scalar_lea.vmem %s5, %s474
      %p476 = pneg %p201
      %p477 = pneg %p198
      %p478 = scmp.lt.s32.totalorder %s25, 0
      %s479 = scalar_select %p478, %s25, 0
      %s480 = smul.addr %s479, 4
      %s481 = scalar_lea.vmem %s6, %s480
      %p482 = pneg %p227
      %p483 = pneg %p224
      %p484 = scmp.lt.s32.totalorder %s25, 0
      %s485 = scalar_select %p484, %s25, 0
      %s486 = scalar_lea.vmem %s7, %s485
      %p487 = pneg %p253
      %p488 = pneg %p250
      %p489 = pneg %p283
      %p490 = pneg %p280
      %s491 = smul.u32 8, %s26
      %p492 = scmp.lt.s32.totalorder %s24, 1
      %s493 = scalar_select %p492, %s24, 1
      %p494 = scmp.lt.s32.totalorder %s491, 7
      %s495 = scalar_select %p494, %s491, 7
      %p496 = scmp.lt.s32.totalorder %s25, 0
      %s497 = scalar_select %p496, %s25, 0
      %s498 = sadd.s32 %s497, %s495
      %s499 = smul.addr %s493, 8
      %s500 = sadd.s32 %s498, %s499
      %s501 = smul.addr %s500, 4
      %s502 = scalar_lea.vmem %s8, %s501
      %s503 = smul.u32 8, %s26
      %p504 = scmp.lt.s32.totalorder %s24, 1
      %s505 = scalar_select %p504, %s24, 1
      %p506 = scmp.lt.s32.totalorder %s503, 7
      %s507 = scalar_select %p506, %s503, 7
      %s508 = smul.addr %s507, 2
      %s509 = smul.addr %s505, 16
      %s510 = sadd.s32 %s508, %s509
      %s511 = smul.addr %s510, 4
      %s512 = scalar_lea.vmem %s0, %s511
      %s513 = smul.u32 8, %s26
      %s514 = smul.u32 8, %s26
      %p515 = scmp.lt.s32.totalorder %s24, 1
      %s516 = scalar_select %p515, %s24, 1
      %p517 = scmp.lt.s32.totalorder %s514, 7
      %s518 = scalar_select %p517, %s514, 7
      %s519 = smul.addr %s518, 2
      %s520 = smul.addr %s516, 16
      %s521 = sadd.s32 %s519, %s520
      %s522 = smul.addr %s521, 4
      %s523 = scalar_lea.vmem %s1, %s522
      %s524 = smul.u32 8, %s26
      %s525 = smul.u32 8, %s26
      %p526 = scmp.lt.s32.totalorder %s24, 1
      %s527 = scalar_select %p526, %s24, 1
      %p528 = scmp.lt.s32.totalorder %s525, 7
      %s529 = scalar_select %p528, %s525, 7
      %s530 = smul.addr %s529, 2
      %s531 = smul.addr %s527, 16
      %s532 = sadd.s32 %s530, %s531
      %s533 = smul.addr %s532, 4
      %s534 = scalar_lea.vmem %s2, %s533
      %s535 = smul.u32 8, %s26
      %s536 = smul.u32 8, %s26
      %p537 = scmp.lt.s32.totalorder %s24, 1
      %s538 = scalar_select %p537, %s24, 1
      %p539 = scmp.lt.s32.totalorder %s536, 7
      %s540 = scalar_select %p539, %s536, 7
      %s541 = smul.addr %s540, 2
      %s542 = smul.addr %s538, 16
      %s543 = sadd.s32 %s541, %s542
      %s544 = smul.addr %s543, 4
      %s545 = scalar_lea.vmem %s3, %s544
      %s546 = smul.u32 8, %s26
      %s547 = smul.u32 8, %s26
      %p548 = scmp.lt.s32.totalorder %s24, 1
      %s549 = scalar_select %p548, %s24, 1
      %p550 = scmp.lt.s32.totalorder %s547, 7
      %s551 = scalar_select %p550, %s547, 7
      %s552 = smul.addr %s551, 2
      %s553 = smul.addr %s549, 16
      %s554 = sadd.s32 %s552, %s553
      %s555 = smul.addr %s554, 4
      %s556 = scalar_lea.vmem %s4, %s555
      %s557 = smul.u32 8, %s26
      %s558 = smul.u32 8, %s26
      %p559 = scmp.lt.s32.totalorder %s24, 1
      %s560 = scalar_select %p559, %s24, 1
      %p561 = scmp.lt.s32.totalorder %s558, 7
      %s562 = scalar_select %p561, %s558, 7
      %s563 = smul.addr %s562, 2
      %s564 = smul.addr %s560, 16
      %s565 = sadd.s32 %s563, %s564
      %s566 = smul.addr %s565, 4
      %s567 = scalar_lea.vmem %s5, %s566
      %s568 = smul.u32 8, %s26
      %p569 = scmp.lt.s32.totalorder %s25, 0
      %s570 = scalar_select %p569, %s25, 0
      %s571 = smul.addr %s570, 4
      %s572 = scalar_lea.vmem %s6, %s571
      %p573 = scmp.lt.s32.totalorder %s25, 0
      %s574 = scalar_select %p573, %s25, 0
      %s575 = scalar_lea.vmem %s7, %s574
      %s576 = smul.u32 8, %s26
      %p577 = scmp.lt.s32.totalorder %s24, 1
      %s578 = scalar_select %p577, %s24, 1
      %p579 = scmp.lt.s32.totalorder %s576, 7
      %s580 = scalar_select %p579, %s576, 7
      %p581 = scmp.lt.s32.totalorder %s25, 0
      %s582 = scalar_select %p581, %s25, 0
      %s583 = sadd.s32 %s582, %s580
      %s584 = smul.addr %s578, 8
      %s585 = sadd.s32 %s583, %s584
      %s586 = smul.addr %s585, 4
      %s587 = scalar_lea.vmem %s8, %s586
      %s588 = smul.u32 8, %s26
      %v590 = vld [vmem:[%s575] sm:$0x1]
      %v592 = vlaneseq
      %v593 = vshrl.u32 %v592, 7
      %v594 = vsub.s32 0, %v593
      %v595 = vrot.slane %v590, %v594
      loop: start=0, step=1, limit=8
      $region53: #{downsample_forward.3} parent=51 // loop_pre_header
        _
      $region54: #{downsample_forward.3} parent=51 // loop_header
        %s598 = sphi 0, %s602
        %p599 = scmp.ge.s32.totalorder %s598, 8
      $region55: #{downsample_forward.3} parent=51 // loop_header_branch
        %601 = sbr.rel (%p599) target = $region59
      $region56: #{downsample_forward.3} parent=51 // loop_body
        %s603 = smul.u32 %s598, 2
        %s604 = smul.addr %s603, 4
        %s605 = scalar_lea.vmem %s512, %s604
        %v606 = vld [vmem:[%s605] sm:$0xf]
        %v607 = vld [vmem:[%s572] sm:$0xf]
        %v608 = vld [vmem:[%s572 + $0x4] sm:$0xf]
        %v609 = vld [vmem:[%s572 + $0x8] sm:$0xf]
        %v610 = vld [vmem:[%s572 + $0xc] sm:$0xf]
        %v611 = vld [vmem:[%s572 + $0x10] sm:$0xf]
        %v612 = vld [vmem:[%s572 + $0x14] sm:$0xf]
        %v613 = vld [vmem:[%s572 + $0x18] sm:$0xf]
        %v614 = vld [vmem:[%s572 + $0x1c] sm:$0xf]
        %v615 = vld [vmem:[%s572 + $0x20] sm:$0xf]
        %v616 = vld [vmem:[%s572 + $0x24] sm:$0xf]
        %v617 = vld [vmem:[%s572 + $0x28] sm:$0xf]
        %v618 = vld [vmem:[%s572 + $0x2c] sm:$0xf]
        %v619 = vld [vmem:[%s572 + $0x30] sm:$0xf]
        %v620 = vld [vmem:[%s572 + $0x34] sm:$0xf]
        %v621 = vld [vmem:[%s572 + $0x38] sm:$0xf]
        %v622 = vld [vmem:[%s572 + $0x3c] sm:$0xf]
        %v639 = vunpack.c.l.b16 %v607
        %v640 = vunpack.c.l.b16 %v608
        %v641 = vunpack.c.l.b16 %v609
        %v642 = vunpack.c.l.b16 %v610
        %v643 = vunpack.c.l.b16 %v611
        %v644 = vunpack.c.l.b16 %v612
        %v645 = vunpack.c.l.b16 %v613
        %v646 = vunpack.c.l.b16 %v614
        %v647 = vunpack.c.l.b16 %v615
        %v648 = vunpack.c.l.b16 %v616
        %v649 = vunpack.c.l.b16 %v617
        %v650 = vunpack.c.l.b16 %v618
        %v651 = vunpack.c.l.b16 %v619
        %v652 = vunpack.c.l.b16 %v620
        %v653 = vunpack.c.l.b16 %v621
        %v654 = vunpack.c.l.b16 %v622
        %v655 = vpack.c.b16 %v640, %v639
        %v656 = vpack.c.b16 %v642, %v641
        %v657 = vpack.c.b16 %v644, %v643
        %v658 = vpack.c.b16 %v646, %v645
        %v659 = vpack.c.b16 %v648, %v647
        %v660 = vpack.c.b16 %v650, %v649
        %v661 = vpack.c.b16 %v652, %v651
        %v662 = vpack.c.b16 %v654, %v653
        %671 = vmatprep.subr.bf16.mxu0 0
        %672 = vmatpush1.bf16.msra.mxu0 %v662
        %673 = vmatprep.subr.bf16.mxu0 0
        %674 = vmatpush1.bf16.msra.mxu0 %v661
        %675 = vmatprep.subr.bf16.mxu0 0
        %676 = vmatpush1.bf16.msra.mxu0 %v660
        %677 = vmatprep.subr.bf16.mxu0 0
        %678 = vmatpush1.bf16.msra.mxu0 %v659
        %679 = vmatprep.subr.bf16.mxu0 0
        %680 = vmatpush1.bf16.msra.mxu0 %v658
        %681 = vmatprep.subr.bf16.mxu0 0
        %682 = vmatpush1.bf16.msra.mxu0 %v657
        %683 = vmatprep.subr.bf16.mxu0 0
        %684 = vmatpush1.bf16.msra.mxu0 %v656
        %685 = vmatprep.subr.bf16.mxu0 0
        %686 = vmatpush1.bf16.msra.mxu0 %v655
        %687 = vmatprep.subr.bf16.mxu0 0
        %688 = vmatpush2.bf16.msra.mxu0 0
        %689 = vmatprep.subr.bf16.mxu0 0
        %690 = vmatpush2.bf16.msra.mxu0 0
        %691 = vmatprep.subr.bf16.mxu0 0
        %692 = vmatpush2.bf16.msra.mxu0 0
        %693 = vmatprep.subr.bf16.mxu0 0
        %694 = vmatpush2.bf16.msra.mxu0 0
        %695 = vmatprep.subr.bf16.mxu0 0
        %696 = vmatpush2.bf16.msra.mxu0 0
        %697 = vmatprep.subr.bf16.mxu0 0
        %698 = vmatpush2.bf16.msra.mxu0 0
        %699 = vmatprep.subr.bf16.mxu0 0
        %700 = vmatpush2.bf16.msra.mxu0 0
        %701 = vmatprep.subr.bf16.mxu0 0
        %702 = vmatpush2.bf16.msra.mxu0 0
        %703 = vmatprep.mubr.bf16.mxu0 0
        %704 = vmatmul.mubr.bf16.gmra.mxu0 %v606
        %v705 = vpop.f32.mrf.mxu0
        %v706 = vadd.f32 0.0, %v705
        %v707 = vpop.f32.mrf.mxu0
        %v708 = vpop.f32.mrf.mxu0
        %v709 = vpop.f32.mrf.mxu0
        %710 = vdwg.mxu0
        %v711 = vadd.f32 %v595, %v706
        %s712 = smul.addr %s603, 4
        %s713 = scalar_lea.vmem %s523, %s712
        %v714 = vld [vmem:[%s713] sm:$0xf]
        %s715 = scalar_lea.vmem %s572, 64
        %v716 = vld [vmem:[%s715] sm:$0xf]
        %v717 = vld [vmem:[%s715 + $0x4] sm:$0xf]
        %v718 = vld [vmem:[%s715 + $0x8] sm:$0xf]
        %v719 = vld [vmem:[%s715 + $0xc] sm:$0xf]
        %v720 = vld [vmem:[%s715 + $0x10] sm:$0xf]
        %v721 = vld [vmem:[%s715 + $0x14] sm:$0xf]
        %v722 = vld [vmem:[%s715 + $0x18] sm:$0xf]
        %v723 = vld [vmem:[%s715 + $0x1c] sm:$0xf]
        %v724 = vld [vmem:[%s715 + $0x20] sm:$0xf]
        %v725 = vld [vmem:[%s715 + $0x24] sm:$0xf]
        %v726 = vld [vmem:[%s715 + $0x28] sm:$0xf]
        %v727 = vld [vmem:[%s715 + $0x2c] sm:$0xf]
        %v728 = vld [vmem:[%s715 + $0x30] sm:$0xf]
        %v729 = vld [vmem:[%s715 + $0x34] sm:$0xf]
        %v730 = vld [vmem:[%s715 + $0x38] sm:$0xf]
        %v731 = vld [vmem:[%s715 + $0x3c] sm:$0xf]
        %v748 = vunpack.c.l.b16 %v716
        %v749 = vunpack.c.l.b16 %v717
        %v750 = vunpack.c.l.b16 %v718
        %v751 = vunpack.c.l.b16 %v719
        %v752 = vunpack.c.l.b16 %v720
        %v753 = vunpack.c.l.b16 %v721
        %v754 = vunpack.c.l.b16 %v722
        %v755 = vunpack.c.l.b16 %v723
        %v756 = vunpack.c.l.b16 %v724
        %v757 = vunpack.c.l.b16 %v725
        %v758 = vunpack.c.l.b16 %v726
        %v759 = vunpack.c.l.b16 %v727
        %v760 = vunpack.c.l.b16 %v728
        %v761 = vunpack.c.l.b16 %v729
        %v762 = vunpack.c.l.b16 %v730
        %v763 = vunpack.c.l.b16 %v731
        %v764 = vpack.c.b16 %v749, %v748
        %v765 = vpack.c.b16 %v751, %v750
        %v766 = vpack.c.b16 %v753, %v752
        %v767 = vpack.c.b16 %v755, %v754
        %v768 = vpack.c.b16 %v757, %v756
        %v769 = vpack.c.b16 %v759, %v758
        %v770 = vpack.c.b16 %v761, %v760
        %v771 = vpack.c.b16 %v763, %v762
        %780 = vmatprep.subr.bf16.mxu0 0
        %781 = vmatpush1.bf16.msra.mxu0 %v771
        %782 = vmatprep.subr.bf16.mxu0 0
        %783 = vmatpush1.bf16.msra.mxu0 %v770
        %784 = vmatprep.subr.bf16.mxu0 0
        %785 = vmatpush1.bf16.msra.mxu0 %v769
        %786 = vmatprep.subr.bf16.mxu0 0
        %787 = vmatpush1.bf16.msra.mxu0 %v768
        %788 = vmatprep.subr.bf16.mxu0 0
        %789 = vmatpush1.bf16.msra.mxu0 %v767
        %790 = vmatprep.subr.bf16.mxu0 0
        %791 = vmatpush1.bf16.msra.mxu0 %v766
        %792 = vmatprep.subr.bf16.mxu0 0
        %793 = vmatpush1.bf16.msra.mxu0 %v765
        %794 = vmatprep.subr.bf16.mxu0 0
        %795 = vmatpush1.bf16.msra.mxu0 %v764
        %796 = vmatprep.subr.bf16.mxu0 0
        %797 = vmatpush2.bf16.msra.mxu0 0
        %798 = vmatprep.subr.bf16.mxu0 0
        %799 = vmatpush2.bf16.msra.mxu0 0
        %800 = vmatprep.subr.bf16.mxu0 0
        %801 = vmatpush2.bf16.msra.mxu0 0
        %802 = vmatprep.subr.bf16.mxu0 0
        %803 = vmatpush2.bf16.msra.mxu0 0
        %804 = vmatprep.subr.bf16.mxu0 0
        %805 = vmatpush2.bf16.msra.mxu0 0
        %806 = vmatprep.subr.bf16.mxu0 0
        %807 = vmatpush2.bf16.msra.mxu0 0
        %808 = vmatprep.subr.bf16.mxu0 0
        %809 = vmatpush2.bf16.msra.mxu0 0
        %810 = vmatprep.subr.bf16.mxu0 0
        %811 = vmatpush2.bf16.msra.mxu0 0
        %812 = vmatprep.mubr.bf16.mxu0 0
        %813 = vmatmul.mubr.bf16.gmra.mxu0 %v714
        %v814 = vpop.f32.mrf.mxu0
        %v815 = vadd.f32 0.0, %v814
        %v816 = vpop.f32.mrf.mxu0
        %v817 = vpop.f32.mrf.mxu0
        %v818 = vpop.f32.mrf.mxu0
        %819 = vdwg.mxu0
        %v820 = vadd.f32 %v711, %v815
        %v821 = vld [vmem:[%s605] sm:$0xf]
        %v822 = vld [vmem:[%s605 + $0x4] sm:$0x1]
        %s823 = scalar_lea.vmem %s572, 128
        %v824 = vld [vmem:[%s823] sm:$0xf]
        %v825 = vld [vmem:[%s823 + $0x4] sm:$0xf]
        %v826 = vld [vmem:[%s823 + $0x8] sm:$0xf]
        %v827 = vld [vmem:[%s823 + $0xc] sm:$0xf]
        %v828 = vld [vmem:[%s823 + $0x10] sm:$0xf]
        %v829 = vld [vmem:[%s823 + $0x14] sm:$0xf]
        %v830 = vld [vmem:[%s823 + $0x18] sm:$0xf]
        %v831 = vld [vmem:[%s823 + $0x1c] sm:$0xf]
        %v832 = vld [vmem:[%s823 + $0x20] sm:$0xf]
        %v833 = vld [vmem:[%s823 + $0x24] sm:$0xf]
        %v834 = vld [vmem:[%s823 + $0x28] sm:$0xf]
        %v835 = vld [vmem:[%s823 + $0x2c] sm:$0xf]
        %v836 = vld [vmem:[%s823 + $0x30] sm:$0xf]
        %v837 = vld [vmem:[%s823 + $0x34] sm:$0xf]
        %v838 = vld [vmem:[%s823 + $0x38] sm:$0xf]
        %v839 = vld [vmem:[%s823 + $0x3c] sm:$0xf]
        %v842 = vunpack.c.l.b16 %v821
        %v843 = vunpack.c.l.b16 %v822
        %v844 = vpack.c.b16 %v843, %v842
        %v846 = vshrl.u32 %v844, 16
        %v848 = vshll.u32 %v844, 16
        %v850 = vrot.slane %v848, 1
        %v851 = vor.u32 %v846, %v850
        %v869 = vunpack.c.l.b16 %v824
        %v870 = vunpack.c.l.b16 %v825
        %v871 = vunpack.c.l.b16 %v826
        %v872 = vunpack.c.l.b16 %v827
        %v873 = vunpack.c.l.b16 %v828
        %v874 = vunpack.c.l.b16 %v829
        %v875 = vunpack.c.l.b16 %v830
        %v876 = vunpack.c.l.b16 %v831
        %v877 = vunpack.c.l.b16 %v832
        %v878 = vunpack.c.l.b16 %v833
        %v879 = vunpack.c.l.b16 %v834
        %v880 = vunpack.c.l.b16 %v835
        %v881 = vunpack.c.l.b16 %v836
        %v882 = vunpack.c.l.b16 %v837
        %v883 = vunpack.c.l.b16 %v838
        %v884 = vunpack.c.l.b16 %v839
        %v885 = vpack.c.b16 %v870, %v869
        %v886 = vpack.c.b16 %v872, %v871
        %v887 = vpack.c.b16 %v874, %v873
        %v888 = vpack.c.b16 %v876, %v875
        %v889 = vpack.c.b16 %v878, %v877
        %v890 = vpack.c.b16 %v880, %v879
        %v891 = vpack.c.b16 %v882, %v881
        %v892 = vpack.c.b16 %v884, %v883
        %901 = vmatprep.subr.bf16.mxu0 0
        %902 = vmatpush1.bf16.msra.mxu0 %v892
        %903 = vmatprep.subr.bf16.mxu0 0
        %904 = vmatpush1.bf16.msra.mxu0 %v891
        %905 = vmatprep.subr.bf16.mxu0 0
        %906 = vmatpush1.bf16.msra.mxu0 %v890
        %907 = vmatprep.subr.bf16.mxu0 0
        %908 = vmatpush1.bf16.msra.mxu0 %v889
        %909 = vmatprep.subr.bf16.mxu0 0
        %910 = vmatpush1.bf16.msra.mxu0 %v888
        %911 = vmatprep.subr.bf16.mxu0 0
        %912 = vmatpush1.bf16.msra.mxu0 %v887
        %913 = vmatprep.subr.bf16.mxu0 0
        %914 = vmatpush1.bf16.msra.mxu0 %v886
        %915 = vmatprep.subr.bf16.mxu0 0
        %916 = vmatpush1.bf16.msra.mxu0 %v885
        %917 = vmatprep.subr.bf16.mxu0 0
        %918 = vmatpush2.bf16.msra.mxu0 0
        %919 = vmatprep.subr.bf16.mxu0 0
        %920 = vmatpush2.bf16.msra.mxu0 0
        %921 = vmatprep.subr.bf16.mxu0 0
        %922 = vmatpush2.bf16.msra.mxu0 0
        %923 = vmatprep.subr.bf16.mxu0 0
        %924 = vmatpush2.bf16.msra.mxu0 0
        %925 = vmatprep.subr.bf16.mxu0 0
        %926 = vmatpush2.bf16.msra.mxu0 0
        %927 = vmatprep.subr.bf16.mxu0 0
        %928 = vmatpush2.bf16.msra.mxu0 0
        %929 = vmatprep.subr.bf16.mxu0 0
        %930 = vmatpush2.bf16.msra.mxu0 0
        %931 = vmatprep.subr.bf16.mxu0 0
        %932 = vmatpush2.bf16.msra.mxu0 0
        %933 = vmatprep.mubr.bf16.mxu0 0
        %934 = vmatmul.mubr.bf16.gmra.mxu0 %v851
        %v935 = vpop.f32.mrf.mxu0
        %v936 = vadd.f32 0.0, %v935
        %v937 = vpop.f32.mrf.mxu0
        %v938 = vpop.f32.mrf.mxu0
        %v939 = vpop.f32.mrf.mxu0
        %940 = vdwg.mxu0
        %v941 = vadd.f32 %v820, %v936
        %s942 = smul.addr %s603, 4
        %s943 = scalar_lea.vmem %s534, %s942
        %v944 = vld [vmem:[%s943] sm:$0xf]
        %s945 = scalar_lea.vmem %s572, 192
        %v946 = vld [vmem:[%s945] sm:$0xf]
        %v947 = vld [vmem:[%s945 + $0x4] sm:$0xf]
        %v948 = vld [vmem:[%s945 + $0x8] sm:$0xf]
        %v949 = vld [vmem:[%s945 + $0xc] sm:$0xf]
        %v950 = vld [vmem:[%s945 + $0x10] sm:$0xf]
        %v951 = vld [vmem:[%s945 + $0x14] sm:$0xf]
        %v952 = vld [vmem:[%s945 + $0x18] sm:$0xf]
        %v953 = vld [vmem:[%s945 + $0x1c] sm:$0xf]
        %v954 = vld [vmem:[%s945 + $0x20] sm:$0xf]
        %v955 = vld [vmem:[%s945 + $0x24] sm:$0xf]
        %v956 = vld [vmem:[%s945 + $0x28] sm:$0xf]
        %v957 = vld [vmem:[%s945 + $0x2c] sm:$0xf]
        %v958 = vld [vmem:[%s945 + $0x30] sm:$0xf]
        %v959 = vld [vmem:[%s945 + $0x34] sm:$0xf]
        %v960 = vld [vmem:[%s945 + $0x38] sm:$0xf]
        %v961 = vld [vmem:[%s945 + $0x3c] sm:$0xf]
        %v978 = vunpack.c.l.b16 %v946
        %v979 = vunpack.c.l.b16 %v947
        %v980 = vunpack.c.l.b16 %v948
        %v981 = vunpack.c.l.b16 %v949
        %v982 = vunpack.c.l.b16 %v950
        %v983 = vunpack.c.l.b16 %v951
        %v984 = vunpack.c.l.b16 %v952
        %v985 = vunpack.c.l.b16 %v953
        %v986 = vunpack.c.l.b16 %v954
        %v987 = vunpack.c.l.b16 %v955
        %v988 = vunpack.c.l.b16 %v956
        %v989 = vunpack.c.l.b16 %v957
        %v990 = vunpack.c.l.b16 %v958
        %v991 = vunpack.c.l.b16 %v959
        %v992 = vunpack.c.l.b16 %v960
        %v993 = vunpack.c.l.b16 %v961
        %v994 = vpack.c.b16 %v979, %v978
        %v995 = vpack.c.b16 %v981, %v980
        %v996 = vpack.c.b16 %v983, %v982
        %v997 = vpack.c.b16 %v985, %v984
        %v998 = vpack.c.b16 %v987, %v986
        %v999 = vpack.c.b16 %v989, %v988
        %v1000 = vpack.c.b16 %v991, %v990
        %v1001 = vpack.c.b16 %v993, %v992
        %1010 = vmatprep.subr.bf16.mxu0 0
        %1011 = vmatpush1.bf16.msra.mxu0 %v1001
        %1012 = vmatprep.subr.bf16.mxu0 0
        %1013 = vmatpush1.bf16.msra.mxu0 %v1000
        %1014 = vmatprep.subr.bf16.mxu0 0
        %1015 = vmatpush1.bf16.msra.mxu0 %v999
        %1016 = vmatprep.subr.bf16.mxu0 0
        %1017 = vmatpush1.bf16.msra.mxu0 %v998
        %1018 = vmatprep.subr.bf16.mxu0 0
        %1019 = vmatpush1.bf16.msra.mxu0 %v997
        %1020 = vmatprep.subr.bf16.mxu0 0
        %1021 = vmatpush1.bf16.msra.mxu0 %v996
        %1022 = vmatprep.subr.bf16.mxu0 0
        %1023 = vmatpush1.bf16.msra.mxu0 %v995
        %1024 = vmatprep.subr.bf16.mxu0 0
        %1025 = vmatpush1.bf16.msra.mxu0 %v994
        %1026 = vmatprep.subr.bf16.mxu0 0
        %1027 = vmatpush2.bf16.msra.mxu0 0
        %1028 = vmatprep.subr.bf16.mxu0 0
        %1029 = vmatpush2.bf16.msra.mxu0 0
        %1030 = vmatprep.subr.bf16.mxu0 0
        %1031 = vmatpush2.bf16.msra.mxu0 0
        %1032 = vmatprep.subr.bf16.mxu0 0
        %1033 = vmatpush2.bf16.msra.mxu0 0
        %1034 = vmatprep.subr.bf16.mxu0 0
        %1035 = vmatpush2.bf16.msra.mxu0 0
        %1036 = vmatprep.subr.bf16.mxu0 0
        %1037 = vmatpush2.bf16.msra.mxu0 0
        %1038 = vmatprep.subr.bf16.mxu0 0
        %1039 = vmatpush2.bf16.msra.mxu0 0
        %1040 = vmatprep.subr.bf16.mxu0 0
        %1041 = vmatpush2.bf16.msra.mxu0 0
        %1042 = vmatprep.mubr.bf16.mxu0 0
        %1043 = vmatmul.mubr.bf16.gmra.mxu0 %v944
        %v1044 = vpop.f32.mrf.mxu0
        %v1045 = vadd.f32 0.0, %v1044
        %v1046 = vpop.f32.mrf.mxu0
        %v1047 = vpop.f32.mrf.mxu0
        %v1048 = vpop.f32.mrf.mxu0
        %1049 = vdwg.mxu0
        %v1050 = vadd.f32 %v941, %v1045
        %s1051 = smul.addr %s603, 4
        %s1052 = scalar_lea.vmem %s545, %s1051
        %v1053 = vld [vmem:[%s1052] sm:$0xf]
        %s1054 = scalar_lea.vmem %s572, 256
        %v1055 = vld [vmem:[%s1054] sm:$0xf]
        %v1056 = vld [vmem:[%s1054 + $0x4] sm:$0xf]
        %v1057 = vld [vmem:[%s1054 + $0x8] sm:$0xf]
        %v1058 = vld [vmem:[%s1054 + $0xc] sm:$0xf]
        %v1059 = vld [vmem:[%s1054 + $0x10] sm:$0xf]
        %v1060 = vld [vmem:[%s1054 + $0x14] sm:$0xf]
        %v1061 = vld [vmem:[%s1054 + $0x18] sm:$0xf]
        %v1062 = vld [vmem:[%s1054 + $0x1c] sm:$0xf]
        %v1063 = vld [vmem:[%s1054 + $0x20] sm:$0xf]
        %v1064 = vld [vmem:[%s1054 + $0x24] sm:$0xf]
        %v1065 = vld [vmem:[%s1054 + $0x28] sm:$0xf]
        %v1066 = vld [vmem:[%s1054 + $0x2c] sm:$0xf]
        %v1067 = vld [vmem:[%s1054 + $0x30] sm:$0xf]
        %v1068 = vld [vmem:[%s1054 + $0x34] sm:$0xf]
        %v1069 = vld [vmem:[%s1054 + $0x38] sm:$0xf]
        %v1070 = vld [vmem:[%s1054 + $0x3c] sm:$0xf]
        %v1087 = vunpack.c.l.b16 %v1055
        %v1088 = vunpack.c.l.b16 %v1056
        %v1089 = vunpack.c.l.b16 %v1057
        %v1090 = vunpack.c.l.b16 %v1058
        %v1091 = vunpack.c.l.b16 %v1059
        %v1092 = vunpack.c.l.b16 %v1060
        %v1093 = vunpack.c.l.b16 %v1061
        %v1094 = vunpack.c.l.b16 %v1062
        %v1095 = vunpack.c.l.b16 %v1063
        %v1096 = vunpack.c.l.b16 %v1064
        %v1097 = vunpack.c.l.b16 %v1065
        %v1098 = vunpack.c.l.b16 %v1066
        %v1099 = vunpack.c.l.b16 %v1067
        %v1100 = vunpack.c.l.b16 %v1068
        %v1101 = vunpack.c.l.b16 %v1069
        %v1102 = vunpack.c.l.b16 %v1070
        %v1103 = vpack.c.b16 %v1088, %v1087
        %v1104 = vpack.c.b16 %v1090, %v1089
        %v1105 = vpack.c.b16 %v1092, %v1091
        %v1106 = vpack.c.b16 %v1094, %v1093
        %v1107 = vpack.c.b16 %v1096, %v1095
        %v1108 = vpack.c.b16 %v1098, %v1097
        %v1109 = vpack.c.b16 %v1100, %v1099
        %v1110 = vpack.c.b16 %v1102, %v1101
        %1119 = vmatprep.subr.bf16.mxu0 0
        %1120 = vmatpush1.bf16.msra.mxu0 %v1110
        %1121 = vmatprep.subr.bf16.mxu0 0
        %1122 = vmatpush1.bf16.msra.mxu0 %v1109
        %1123 = vmatprep.subr.bf16.mxu0 0
        %1124 = vmatpush1.bf16.msra.mxu0 %v1108
        %1125 = vmatprep.subr.bf16.mxu0 0
        %1126 = vmatpush1.bf16.msra.mxu0 %v1107
        %1127 = vmatprep.subr.bf16.mxu0 0
        %1128 = vmatpush1.bf16.msra.mxu0 %v1106
        %1129 = vmatprep.subr.bf16.mxu0 0
        %1130 = vmatpush1.bf16.msra.mxu0 %v1105
        %1131 = vmatprep.subr.bf16.mxu0 0
        %1132 = vmatpush1.bf16.msra.mxu0 %v1104
        %1133 = vmatprep.subr.bf16.mxu0 0
        %1134 = vmatpush1.bf16.msra.mxu0 %v1103
        %1135 = vmatprep.subr.bf16.mxu0 0
        %1136 = vmatpush2.bf16.msra.mxu0 0
        %1137 = vmatprep.subr.bf16.mxu0 0
        %1138 = vmatpush2.bf16.msra.mxu0 0
        %1139 = vmatprep.subr.bf16.mxu0 0
        %1140 = vmatpush2.bf16.msra.mxu0 0
        %1141 = vmatprep.subr.bf16.mxu0 0
        %1142 = vmatpush2.bf16.msra.mxu0 0
        %1143 = vmatprep.subr.bf16.mxu0 0
        %1144 = vmatpush2.bf16.msra.mxu0 0
        %1145 = vmatprep.subr.bf16.mxu0 0
        %1146 = vmatpush2.bf16.msra.mxu0 0
        %1147 = vmatprep.subr.bf16.mxu0 0
        %1148 = vmatpush2.bf16.msra.mxu0 0
        %1149 = vmatprep.subr.bf16.mxu0 0
        %1150 = vmatpush2.bf16.msra.mxu0 0
        %1151 = vmatprep.mubr.bf16.mxu0 0
        %1152 = vmatmul.mubr.bf16.gmra.mxu0 %v1053
        %v1153 = vpop.f32.mrf.mxu0
        %v1154 = vadd.f32 0.0, %v1153
        %v1155 = vpop.f32.mrf.mxu0
        %v1156 = vpop.f32.mrf.mxu0
        %v1157 = vpop.f32.mrf.mxu0
        %1158 = vdwg.mxu0
        %v1159 = vadd.f32 %v1050, %v1154
        %v1160 = vld [vmem:[%s943] sm:$0xf]
        %v1161 = vld [vmem:[%s943 + $0x4] sm:$0x1]
        %s1162 = scalar_lea.vmem %s572, 320
        %v1163 = vld [vmem:[%s1162] sm:$0xf]
        %v1164 = vld [vmem:[%s1162 + $0x4] sm:$0xf]
        %v1165 = vld [vmem:[%s1162 + $0x8] sm:$0xf]
        %v1166 = vld [vmem:[%s1162 + $0xc] sm:$0xf]
        %v1167 = vld [vmem:[%s1162 + $0x10] sm:$0xf]
        %v1168 = vld [vmem:[%s1162 + $0x14] sm:$0xf]
        %v1169 = vld [vmem:[%s1162 + $0x18] sm:$0xf]
        %v1170 = vld [vmem:[%s1162 + $0x1c] sm:$0xf]
        %v1171 = vld [vmem:[%s1162 + $0x20] sm:$0xf]
        %v1172 = vld [vmem:[%s1162 + $0x24] sm:$0xf]
        %v1173 = vld [vmem:[%s1162 + $0x28] sm:$0xf]
        %v1174 = vld [vmem:[%s1162 + $0x2c] sm:$0xf]
        %v1175 = vld [vmem:[%s1162 + $0x30] sm:$0xf]
        %v1176 = vld [vmem:[%s1162 + $0x34] sm:$0xf]
        %v1177 = vld [vmem:[%s1162 + $0x38] sm:$0xf]
        %v1178 = vld [vmem:[%s1162 + $0x3c] sm:$0xf]
        %v1181 = vunpack.c.l.b16 %v1160
        %v1182 = vunpack.c.l.b16 %v1161
        %v1183 = vpack.c.b16 %v1182, %v1181
        %v1185 = vshrl.u32 %v1183, 16
        %v1187 = vshll.u32 %v1183, 16
        %v1189 = vrot.slane %v1187, 1
        %v1190 = vor.u32 %v1185, %v1189
        %v1208 = vunpack.c.l.b16 %v1163
        %v1209 = vunpack.c.l.b16 %v1164
        %v1210 = vunpack.c.l.b16 %v1165
        %v1211 = vunpack.c.l.b16 %v1166
        %v1212 = vunpack.c.l.b16 %v1167
        %v1213 = vunpack.c.l.b16 %v1168
        %v1214 = vunpack.c.l.b16 %v1169
        %v1215 = vunpack.c.l.b16 %v1170
        %v1216 = vunpack.c.l.b16 %v1171
        %v1217 = vunpack.c.l.b16 %v1172
        %v1218 = vunpack.c.l.b16 %v1173
        %v1219 = vunpack.c.l.b16 %v1174
        %v1220 = vunpack.c.l.b16 %v1175
        %v1221 = vunpack.c.l.b16 %v1176
        %v1222 = vunpack.c.l.b16 %v1177
        %v1223 = vunpack.c.l.b16 %v1178
        %v1224 = vpack.c.b16 %v1209, %v1208
        %v1225 = vpack.c.b16 %v1211, %v1210
        %v1226 = vpack.c.b16 %v1213, %v1212
        %v1227 = vpack.c.b16 %v1215, %v1214
        %v1228 = vpack.c.b16 %v1217, %v1216
        %v1229 = vpack.c.b16 %v1219, %v1218
        %v1230 = vpack.c.b16 %v1221, %v1220
        %v1231 = vpack.c.b16 %v1223, %v1222
        %1240 = vmatprep.subr.bf16.mxu0 0
        %1241 = vmatpush1.bf16.msra.mxu0 %v1231
        %1242 = vmatprep.subr.bf16.mxu0 0
        %1243 = vmatpush1.bf16.msra.mxu0 %v1230
        %1244 = vmatprep.subr.bf16.mxu0 0
        %1245 = vmatpush1.bf16.msra.mxu0 %v1229
        %1246 = vmatprep.subr.bf16.mxu0 0
        %1247 = vmatpush1.bf16.msra.mxu0 %v1228
        %1248 = vmatprep.subr.bf16.mxu0 0
        %1249 = vmatpush1.bf16.msra.mxu0 %v1227
        %1250 = vmatprep.subr.bf16.mxu0 0
        %1251 = vmatpush1.bf16.msra.mxu0 %v1226
        %1252 = vmatprep.subr.bf16.mxu0 0
        %1253 = vmatpush1.bf16.msra.mxu0 %v1225
        %1254 = vmatprep.subr.bf16.mxu0 0
        %1255 = vmatpush1.bf16.msra.mxu0 %v1224
        %1256 = vmatprep.subr.bf16.mxu0 0
        %1257 = vmatpush2.bf16.msra.mxu0 0
        %1258 = vmatprep.subr.bf16.mxu0 0
        %1259 = vmatpush2.bf16.msra.mxu0 0
        %1260 = vmatprep.subr.bf16.mxu0 0
        %1261 = vmatpush2.bf16.msra.mxu0 0
        %1262 = vmatprep.subr.bf16.mxu0 0
        %1263 = vmatpush2.bf16.msra.mxu0 0
        %1264 = vmatprep.subr.bf16.mxu0 0
        %1265 = vmatpush2.bf16.msra.mxu0 0
        %1266 = vmatprep.subr.bf16.mxu0 0
        %1267 = vmatpush2.bf16.msra.mxu0 0
        %1268 = vmatprep.subr.bf16.mxu0 0
        %1269 = vmatpush2.bf16.msra.mxu0 0
        %1270 = vmatprep.subr.bf16.mxu0 0
        %1271 = vmatpush2.bf16.msra.mxu0 0
        %1272 = vmatprep.mubr.bf16.mxu0 0
        %1273 = vmatmul.mubr.bf16.gmra.mxu0 %v1190
        %v1274 = vpop.f32.mrf.mxu0
        %v1275 = vadd.f32 0.0, %v1274
        %v1276 = vpop.f32.mrf.mxu0
        %v1277 = vpop.f32.mrf.mxu0
        %v1278 = vpop.f32.mrf.mxu0
        %1279 = vdwg.mxu0
        %v1280 = vadd.f32 %v1159, %v1275
        %s1281 = smul.addr %s603, 4
        %s1282 = scalar_lea.vmem %s556, %s1281
        %v1283 = vld [vmem:[%s1282] sm:$0xf]
        %s1284 = scalar_lea.vmem %s572, 384
        %v1285 = vld [vmem:[%s1284] sm:$0xf]
        %v1286 = vld [vmem:[%s1284 + $0x4] sm:$0xf]
        %v1287 = vld [vmem:[%s1284 + $0x8] sm:$0xf]
        %v1288 = vld [vmem:[%s1284 + $0xc] sm:$0xf]
        %v1289 = vld [vmem:[%s1284 + $0x10] sm:$0xf]
        %v1290 = vld [vmem:[%s1284 + $0x14] sm:$0xf]
        %v1291 = vld [vmem:[%s1284 + $0x18] sm:$0xf]
        %v1292 = vld [vmem:[%s1284 + $0x1c] sm:$0xf]
        %v1293 = vld [vmem:[%s1284 + $0x20] sm:$0xf]
        %v1294 = vld [vmem:[%s1284 + $0x24] sm:$0xf]
        %v1295 = vld [vmem:[%s1284 + $0x28] sm:$0xf]
        %v1296 = vld [vmem:[%s1284 + $0x2c] sm:$0xf]
        %v1297 = vld [vmem:[%s1284 + $0x30] sm:$0xf]
        %v1298 = vld [vmem:[%s1284 + $0x34] sm:$0xf]
        %v1299 = vld [vmem:[%s1284 + $0x38] sm:$0xf]
        %v1300 = vld [vmem:[%s1284 + $0x3c] sm:$0xf]
        %v1317 = vunpack.c.l.b16 %v1285
        %v1318 = vunpack.c.l.b16 %v1286
        %v1319 = vunpack.c.l.b16 %v1287
        %v1320 = vunpack.c.l.b16 %v1288
        %v1321 = vunpack.c.l.b16 %v1289
        %v1322 = vunpack.c.l.b16 %v1290
        %v1323 = vunpack.c.l.b16 %v1291
        %v1324 = vunpack.c.l.b16 %v1292
        %v1325 = vunpack.c.l.b16 %v1293
        %v1326 = vunpack.c.l.b16 %v1294
        %v1327 = vunpack.c.l.b16 %v1295
        %v1328 = vunpack.c.l.b16 %v1296
        %v1329 = vunpack.c.l.b16 %v1297
        %v1330 = vunpack.c.l.b16 %v1298
        %v1331 = vunpack.c.l.b16 %v1299
        %v1332 = vunpack.c.l.b16 %v1300
        %v1333 = vpack.c.b16 %v1318, %v1317
        %v1334 = vpack.c.b16 %v1320, %v1319
        %v1335 = vpack.c.b16 %v1322, %v1321
        %v1336 = vpack.c.b16 %v1324, %v1323
        %v1337 = vpack.c.b16 %v1326, %v1325
        %v1338 = vpack.c.b16 %v1328, %v1327
        %v1339 = vpack.c.b16 %v1330, %v1329
        %v1340 = vpack.c.b16 %v1332, %v1331
        %1349 = vmatprep.subr.bf16.mxu0 0
        %1350 = vmatpush1.bf16.msra.mxu0 %v1340
        %1351 = vmatprep.subr.bf16.mxu0 0
        %1352 = vmatpush1.bf16.msra.mxu0 %v1339
        %1353 = vmatprep.subr.bf16.mxu0 0
        %1354 = vmatpush1.bf16.msra.mxu0 %v1338
        %1355 = vmatprep.subr.bf16.mxu0 0
        %1356 = vmatpush1.bf16.msra.mxu0 %v1337
        %1357 = vmatprep.subr.bf16.mxu0 0
        %1358 = vmatpush1.bf16.msra.mxu0 %v1336
        %1359 = vmatprep.subr.bf16.mxu0 0
        %1360 = vmatpush1.bf16.msra.mxu0 %v1335
        %1361 = vmatprep.subr.bf16.mxu0 0
        %1362 = vmatpush1.bf16.msra.mxu0 %v1334
        %1363 = vmatprep.subr.bf16.mxu0 0
        %1364 = vmatpush1.bf16.msra.mxu0 %v1333
        %1365 = vmatprep.subr.bf16.mxu0 0
        %1366 = vmatpush2.bf16.msra.mxu0 0
        %1367 = vmatprep.subr.bf16.mxu0 0
        %1368 = vmatpush2.bf16.msra.mxu0 0
        %1369 = vmatprep.subr.bf16.mxu0 0
        %1370 = vmatpush2.bf16.msra.mxu0 0
        %1371 = vmatprep.subr.bf16.mxu0 0
        %1372 = vmatpush2.bf16.msra.mxu0 0
        %1373 = vmatprep.subr.bf16.mxu0 0
        %1374 = vmatpush2.bf16.msra.mxu0 0
        %1375 = vmatprep.subr.bf16.mxu0 0
        %1376 = vmatpush2.bf16.msra.mxu0 0
        %1377 = vmatprep.subr.bf16.mxu0 0
        %1378 = vmatpush2.bf16.msra.mxu0 0
        %1379 = vmatprep.subr.bf16.mxu0 0
        %1380 = vmatpush2.bf16.msra.mxu0 0
        %1381 = vmatprep.mubr.bf16.mxu0 0
        %1382 = vmatmul.mubr.bf16.gmra.mxu0 %v1283
        %v1383 = vpop.f32.mrf.mxu0
        %v1384 = vadd.f32 0.0, %v1383
        %v1385 = vpop.f32.mrf.mxu0
        %v1386 = vpop.f32.mrf.mxu0
        %v1387 = vpop.f32.mrf.mxu0
        %1388 = vdwg.mxu0
        %v1389 = vadd.f32 %v1280, %v1384
        %s1390 = smul.addr %s603, 4
        %s1391 = scalar_lea.vmem %s567, %s1390
        %v1392 = vld [vmem:[%s1391] sm:$0xf]
        %s1393 = scalar_lea.vmem %s572, 448
        %v1394 = vld [vmem:[%s1393] sm:$0xf]
        %v1395 = vld [vmem:[%s1393 + $0x4] sm:$0xf]
        %v1396 = vld [vmem:[%s1393 + $0x8] sm:$0xf]
        %v1397 = vld [vmem:[%s1393 + $0xc] sm:$0xf]
        %v1398 = vld [vmem:[%s1393 + $0x10] sm:$0xf]
        %v1399 = vld [vmem:[%s1393 + $0x14] sm:$0xf]
        %v1400 = vld [vmem:[%s1393 + $0x18] sm:$0xf]
        %v1401 = vld [vmem:[%s1393 + $0x1c] sm:$0xf]
        %v1402 = vld [vmem:[%s1393 + $0x20] sm:$0xf]
        %v1403 = vld [vmem:[%s1393 + $0x24] sm:$0xf]
        %v1404 = vld [vmem:[%s1393 + $0x28] sm:$0xf]
        %v1405 = vld [vmem:[%s1393 + $0x2c] sm:$0xf]
        %v1406 = vld [vmem:[%s1393 + $0x30] sm:$0xf]
        %v1407 = vld [vmem:[%s1393 + $0x34] sm:$0xf]
        %v1408 = vld [vmem:[%s1393 + $0x38] sm:$0xf]
        %v1409 = vld [vmem:[%s1393 + $0x3c] sm:$0xf]
        %v1426 = vunpack.c.l.b16 %v1394
        %v1427 = vunpack.c.l.b16 %v1395
        %v1428 = vunpack.c.l.b16 %v1396
        %v1429 = vunpack.c.l.b16 %v1397
        %v1430 = vunpack.c.l.b16 %v1398
        %v1431 = vunpack.c.l.b16 %v1399
        %v1432 = vunpack.c.l.b16 %v1400
        %v1433 = vunpack.c.l.b16 %v1401
        %v1434 = vunpack.c.l.b16 %v1402
        %v1435 = vunpack.c.l.b16 %v1403
        %v1436 = vunpack.c.l.b16 %v1404
        %v1437 = vunpack.c.l.b16 %v1405
        %v1438 = vunpack.c.l.b16 %v1406
        %v1439 = vunpack.c.l.b16 %v1407
        %v1440 = vunpack.c.l.b16 %v1408
        %v1441 = vunpack.c.l.b16 %v1409
        %v1442 = vpack.c.b16 %v1427, %v1426
        %v1443 = vpack.c.b16 %v1429, %v1428
        %v1444 = vpack.c.b16 %v1431, %v1430
        %v1445 = vpack.c.b16 %v1433, %v1432
        %v1446 = vpack.c.b16 %v1435, %v1434
        %v1447 = vpack.c.b16 %v1437, %v1436
        %v1448 = vpack.c.b16 %v1439, %v1438
        %v1449 = vpack.c.b16 %v1441, %v1440
        %1458 = vmatprep.subr.bf16.mxu0 0
        %1459 = vmatpush1.bf16.msra.mxu0 %v1449
        %1460 = vmatprep.subr.bf16.mxu0 0
        %1461 = vmatpush1.bf16.msra.mxu0 %v1448
        %1462 = vmatprep.subr.bf16.mxu0 0
        %1463 = vmatpush1.bf16.msra.mxu0 %v1447
        %1464 = vmatprep.subr.bf16.mxu0 0
        %1465 = vmatpush1.bf16.msra.mxu0 %v1446
        %1466 = vmatprep.subr.bf16.mxu0 0
        %1467 = vmatpush1.bf16.msra.mxu0 %v1445
        %1468 = vmatprep.subr.bf16.mxu0 0
        %1469 = vmatpush1.bf16.msra.mxu0 %v1444
        %1470 = vmatprep.subr.bf16.mxu0 0
        %1471 = vmatpush1.bf16.msra.mxu0 %v1443
        %1472 = vmatprep.subr.bf16.mxu0 0
        %1473 = vmatpush1.bf16.msra.mxu0 %v1442
        %1474 = vmatprep.subr.bf16.mxu0 0
        %1475 = vmatpush2.bf16.msra.mxu0 0
        %1476 = vmatprep.subr.bf16.mxu0 0
        %1477 = vmatpush2.bf16.msra.mxu0 0
        %1478 = vmatprep.subr.bf16.mxu0 0
        %1479 = vmatpush2.bf16.msra.mxu0 0
        %1480 = vmatprep.subr.bf16.mxu0 0
        %1481 = vmatpush2.bf16.msra.mxu0 0
        %1482 = vmatprep.subr.bf16.mxu0 0
        %1483 = vmatpush2.bf16.msra.mxu0 0
        %1484 = vmatprep.subr.bf16.mxu0 0
        %1485 = vmatpush2.bf16.msra.mxu0 0
        %1486 = vmatprep.subr.bf16.mxu0 0
        %1487 = vmatpush2.bf16.msra.mxu0 0
        %1488 = vmatprep.subr.bf16.mxu0 0
        %1489 = vmatpush2.bf16.msra.mxu0 0
        %1490 = vmatprep.mubr.bf16.mxu0 0
        %1491 = vmatmul.mubr.bf16.gmra.mxu0 %v1392
        %v1492 = vpop.f32.mrf.mxu0
        %v1493 = vadd.f32 0.0, %v1492
        %v1494 = vpop.f32.mrf.mxu0
        %v1495 = vpop.f32.mrf.mxu0
        %v1496 = vpop.f32.mrf.mxu0
        %1497 = vdwg.mxu0
        %v1498 = vadd.f32 %v1389, %v1493
        %v1499 = vld [vmem:[%s1282] sm:$0xf]
        %v1500 = vld [vmem:[%s1282 + $0x4] sm:$0x1]
        %s1501 = scalar_lea.vmem %s572, 512
        %v1502 = vld [vmem:[%s1501] sm:$0xf]
        %v1503 = vld [vmem:[%s1501 + $0x4] sm:$0xf]
        %v1504 = vld [vmem:[%s1501 + $0x8] sm:$0xf]
        %v1505 = vld [vmem:[%s1501 + $0xc] sm:$0xf]
        %v1506 = vld [vmem:[%s1501 + $0x10] sm:$0xf]
        %v1507 = vld [vmem:[%s1501 + $0x14] sm:$0xf]
        %v1508 = vld [vmem:[%s1501 + $0x18] sm:$0xf]
        %v1509 = vld [vmem:[%s1501 + $0x1c] sm:$0xf]
        %v1510 = vld [vmem:[%s1501 + $0x20] sm:$0xf]
        %v1511 = vld [vmem:[%s1501 + $0x24] sm:$0xf]
        %v1512 = vld [vmem:[%s1501 + $0x28] sm:$0xf]
        %v1513 = vld [vmem:[%s1501 + $0x2c] sm:$0xf]
        %v1514 = vld [vmem:[%s1501 + $0x30] sm:$0xf]
        %v1515 = vld [vmem:[%s1501 + $0x34] sm:$0xf]
        %v1516 = vld [vmem:[%s1501 + $0x38] sm:$0xf]
        %v1517 = vld [vmem:[%s1501 + $0x3c] sm:$0xf]
        %v1520 = vunpack.c.l.b16 %v1499
        %v1521 = vunpack.c.l.b16 %v1500
        %v1522 = vpack.c.b16 %v1521, %v1520
        %v1524 = vshrl.u32 %v1522, 16
        %v1526 = vshll.u32 %v1522, 16
        %v1528 = vrot.slane %v1526, 1
        %v1529 = vor.u32 %v1524, %v1528
        %v1547 = vunpack.c.l.b16 %v1502
        %v1548 = vunpack.c.l.b16 %v1503
        %v1549 = vunpack.c.l.b16 %v1504
        %v1550 = vunpack.c.l.b16 %v1505
        %v1551 = vunpack.c.l.b16 %v1506
        %v1552 = vunpack.c.l.b16 %v1507
        %v1553 = vunpack.c.l.b16 %v1508
        %v1554 = vunpack.c.l.b16 %v1509
        %v1555 = vunpack.c.l.b16 %v1510
        %v1556 = vunpack.c.l.b16 %v1511
        %v1557 = vunpack.c.l.b16 %v1512
        %v1558 = vunpack.c.l.b16 %v1513
        %v1559 = vunpack.c.l.b16 %v1514
        %v1560 = vunpack.c.l.b16 %v1515
        %v1561 = vunpack.c.l.b16 %v1516
        %v1562 = vunpack.c.l.b16 %v1517
        %v1563 = vpack.c.b16 %v1548, %v1547
        %v1564 = vpack.c.b16 %v1550, %v1549
        %v1565 = vpack.c.b16 %v1552, %v1551
        %v1566 = vpack.c.b16 %v1554, %v1553
        %v1567 = vpack.c.b16 %v1556, %v1555
        %v1568 = vpack.c.b16 %v1558, %v1557
        %v1569 = vpack.c.b16 %v1560, %v1559
        %v1570 = vpack.c.b16 %v1562, %v1561
        %1579 = vmatprep.subr.bf16.mxu0 0
        %1580 = vmatpush1.bf16.msra.mxu0 %v1570
        %1581 = vmatprep.subr.bf16.mxu0 0
        %1582 = vmatpush1.bf16.msra.mxu0 %v1569
        %1583 = vmatprep.subr.bf16.mxu0 0
        %1584 = vmatpush1.bf16.msra.mxu0 %v1568
        %1585 = vmatprep.subr.bf16.mxu0 0
        %1586 = vmatpush1.bf16.msra.mxu0 %v1567
        %1587 = vmatprep.subr.bf16.mxu0 0
        %1588 = vmatpush1.bf16.msra.mxu0 %v1566
        %1589 = vmatprep.subr.bf16.mxu0 0
        %1590 = vmatpush1.bf16.msra.mxu0 %v1565
        %1591 = vmatprep.subr.bf16.mxu0 0
        %1592 = vmatpush1.bf16.msra.mxu0 %v1564
        %1593 = vmatprep.subr.bf16.mxu0 0
        %1594 = vmatpush1.bf16.msra.mxu0 %v1563
        %1595 = vmatprep.subr.bf16.mxu0 0
        %1596 = vmatpush2.bf16.msra.mxu0 0
        %1597 = vmatprep.subr.bf16.mxu0 0
        %1598 = vmatpush2.bf16.msra.mxu0 0
        %1599 = vmatprep.subr.bf16.mxu0 0
        %1600 = vmatpush2.bf16.msra.mxu0 0
        %1601 = vmatprep.subr.bf16.mxu0 0
        %1602 = vmatpush2.bf16.msra.mxu0 0
        %1603 = vmatprep.subr.bf16.mxu0 0
        %1604 = vmatpush2.bf16.msra.mxu0 0
        %1605 = vmatprep.subr.bf16.mxu0 0
        %1606 = vmatpush2.bf16.msra.mxu0 0
        %1607 = vmatprep.subr.bf16.mxu0 0
        %1608 = vmatpush2.bf16.msra.mxu0 0
        %1609 = vmatprep.subr.bf16.mxu0 0
        %1610 = vmatpush2.bf16.msra.mxu0 0
        %1611 = vmatprep.mubr.bf16.mxu0 0
        %1612 = vmatmul.mubr.bf16.gmra.mxu0 %v1529
        %v1613 = vpop.f32.mrf.mxu0
        %v1614 = vadd.f32 0.0, %v1613
        %v1615 = vpop.f32.mrf.mxu0
        %v1616 = vpop.f32.mrf.mxu0
        %v1617 = vpop.f32.mrf.mxu0
        %1618 = vdwg.mxu0
        %v1619 = vadd.f32 %v1498, %v1614
        %v1620 = vmul.f32 %v1619, 0.1
        %v1621 = vmax.f32 %v1619, %v1620
        %v1622 = vpack.c.bf16 %v1621, %v1621
        %s1623 = smul.addr %s598, 4
        %s1624 = scalar_lea.vmem %s587, %s1623
        %1625 = vst [vmem:[%s1624] sm:$0xf] %v1622
      $region57: #{downsample_forward.3} parent=51 // loop_footer
        %s602 = sadd.s32 1, %s598
      $region58: #{downsample_forward.3} parent=51 // loop_footer_branch
        %597 = sbr.rel target = $region54
      $region59: #{downsample_forward.3} parent=51 // loop_exit
        _
      %s1626 = smul.u32 8, %s26
      %p1627 = scmp.lt.s32.totalorder %s24, 1
      %s1628 = scalar_select %p1627, %s24, 1
      %p1629 = scmp.lt.s32.totalorder %s1626, 7
      %s1630 = scalar_select %p1629, %s1626, 7
      %p1631 = scmp.lt.s32.totalorder %s25, 0
      %s1632 = scalar_select %p1631, %s25, 0
      %s1633 = sadd.s32 %s1632, %s1630
      %s1634 = smul.addr %s1628, 8
      %s1635 = sadd.s32 %s1633, %s1634
      %s1636 = smul.addr %s1635, 4
      %s1637 = scalar_lea.vmem %s8, %s1636
      // Predicated region
      $region60: #{downsample_forward.3} parent=51 // pred_check
        %p1638 = pneg %p280
      $region61: #{downsample_forward.3} parent=51 // pred_check_branch
        %1640 = sbr.rel (%p1638) target = $region63
      $region62: #{downsample_forward.3} parent=51 // pred_region
        %s1641 = smul.u32 8, %s26
      $region63: #{downsample_forward.3} parent=51 // pred_fallthru
        _
    $region52: #{downsample_forward.3} parent=5 // pred_fallthru
      _
    %p1642 = scmp.le.s32.totalorder 2, %s14
    // Predicated region
    $region64: #{downsample_forward.3} parent=5 // pred_check
      %p1643 = pneg %p1642
    $region65: #{downsample_forward.3} parent=5 // pred_check_branch
      %1645 = sbr.rel (%p1643) target = $region67
    $region66: #{downsample_forward.3} parent=5 // pred_region
      %s1646 = ssub.s32 %s14, 2
      // Predicated region
      $region68: #{downsample_forward.3} parent=66 // pred_check
        %p1647 = pneg %p286
      $region69: #{downsample_forward.3} parent=66 // pred_check_branch
        %1649 = sbr.rel (%p1647) target = $region71
      $region70: #{downsample_forward.3} parent=66 // pred_region
        %s1650 = smul.u32 8, %s29
        %p1651 = scmp.lt.s32.totalorder %s27, 1
        %s1652 = scalar_select %p1651, %s27, 1
        %p1653 = scmp.lt.s32.totalorder %s1650, 7
        %s1654 = scalar_select %p1653, %s1650, 7
        %p1655 = scmp.lt.s32.totalorder %s28, 0
        %s1656 = scalar_select %p1655, %s28, 0
        %s1657 = sadd.s32 %s1656, %s1654
        %s1658 = smul.addr %s1652, 8
        %s1659 = sadd.s32 %s1657, %s1658
        %s1660 = smul.addr %s1659, 4
        %s1661 = scalar_lea.vmem %s8, %s1660
      $region71: #{downsample_forward.3} parent=66 // pred_fallthru
        _
    $region67: #{downsample_forward.3} parent=5 // pred_fallthru
      _
  $region6: #{downsample_forward.3} parent=0 // loop_footer
    %s18 = sadd.s32 1, %s14
  $region7: #{downsample_forward.3} parent=0 // loop_footer_branch
    %13 = sbr.rel target = $region3
  $region8: #{downsample_forward.3} parent=0 // loop_exit
    _

</llo_original>
